<compile_context>
chip_gen: v7x
topology: tpu7x:2x2x1
jax: 0.10.0
libtpu: 0.0.40
codegen_flags: <defaults>
</compile_context>

<pallas_src>
import jax
import jax.numpy as jnp
from jax.experimental import pallas as pl
from jax.experimental.pallas import tpu as pltpu

_LN_EPS = 1e-6


def _vmem_limit_bytes():
    """~3/4 of physical VMEM (96 MiB on v5e/v6e, 48 MiB on v7x); safe fallback."""
    cap = 128 * 1024 * 1024
    try:
        cap = int(pltpu.get_tpu_info().vmem_capacity_bytes)
    except Exception:
        pass
    return max(32 * 1024 * 1024, (cap * 3) // 4)


def _layer_norm_f32(x, gamma, beta):
    """LayerNorm with f32 statistics and affine (eps = 1e-6)."""
    mu = jnp.mean(x, axis=-1, keepdims=True)
    var = jnp.mean((x - mu) ** 2, axis=-1, keepdims=True)
    return (x - mu) * jax.lax.rsqrt(var + _LN_EPS) * gamma + beta


# ------------- kernel 1: LN1 + fused QKV projection, head-major output -------------
def qkv_proj_kernel(x_ref, g_ref, b_ref, wqkv_ref, bqkv_ref, qkv_ref):
    n3h = qkv_ref.shape[1]                                   # 3 * num_heads
    dk = qkv_ref.shape[3]
    x = x_ref[0].astype(jnp.float32)                         # [ts, D]
    xn = _layer_norm_f32(x, g_ref[...], b_ref[...])
    # single wide [ts, D] x [D, 3D] matmul (fused Q/K/V, 1/sqrt(dk) pre-folded into Q)
    qkv = jnp.dot(xn.astype(jnp.bfloat16), wqkv_ref[...],
                  preferred_element_type=jnp.float32) + bqkv_ref[...]
    qkv = qkv.astype(qkv_ref.dtype)                          # [ts, 3D] bf16
    # head-major write: columns [h*dk, (h+1)*dk) -> head row h
    # (lane-aligned slices when dk % 128 == 0; avoids any XLA transpose round trip)
    for h in range(n3h):
        qkv_ref[0, h] = qkv[:, h * dk:(h + 1) * dk]


# ------- kernel 2: flash attention + single full-K output projection + residual ----
def attention_kernel(x_ref, bias_ref, q_ref, k_ref, v_ref, wo_ref, bo_ref,
                     out_ref, m_scr, l_scr, acc_scr):
    ki = pl.program_id(2)

    @pl.when(ki == 0)
    def _init():
        m_scr[...] = jnp.full_like(m_scr, -jnp.inf)
        l_scr[...] = jnp.zeros_like(l_scr)
        acc_scr[...] = jnp.zeros_like(acc_scr)

    qh = q_ref[0]          # [H, tq, dk]  bf16 (scale already folded into Wq)
    kh = k_ref[0]          # [H, tk, dk]
    vh = v_ref[0]          # [H, tk, dk]

    # all heads in one batched contraction (K^T folded into dimension_numbers)
    s = jnp.einsum("hqd,hkd->hqk", qh, kh,
                   preferred_element_type=jnp.float32)       # [H, tq, tk] f32
    s = s + bias_ref[...]                                    # additive bias 0 / -1e9

    # online-softmax (flash) update, f32 statistics
    m_prev = m_scr[...]
    m_new = jnp.maximum(m_prev, jnp.max(s, axis=-1, keepdims=True))
    alpha = jnp.exp(m_prev - m_new)
    p = jnp.exp(s - m_new)
    l_scr[...] = alpha * l_scr[...] + jnp.sum(p, axis=-1, keepdims=True)
    acc_scr[...] = alpha * acc_scr[...] + jnp.einsum(
        "hqk,hkd->hqd", p.astype(jnp.bfloat16), vh,
        preferred_element_type=jnp.float32)
    m_scr[...] = m_new

    @pl.when(ki == pl.num_programs(2) - 1)
    def _finalize():
        num_heads = acc_scr.shape[0]
        inv_l = pl.reciprocal(l_scr[...], approx=True)       # EUP slot
        ctx = (acc_scr[...] * inv_l).astype(jnp.bfloat16)    # [H, tq, dk]
        # [H, tq, dk] -> [tq, H*dk] = [tq, D]: epilogue-only relayout, then ONE
        # full-width matmul with contraction K = D (fills the MXU K dim).
        ctx_flat = jnp.concatenate([ctx[h] for h in range(num_heads)], axis=-1)
        attn = jnp.dot(ctx_flat, wo_ref[...],
                       preferred_element_type=jnp.float32) + bo_ref[...]
        out_ref[0] = (x_ref[0].astype(jnp.float32) + attn).astype(out_ref.dtype)


# ----------------- kernel 3: LN2 + position-wise FFN + residual -----------------
def ffn_kernel(x_ref, g_ref, b_ref, w1_ref, b1_ref, w2_ref, b2_ref, out_ref):
    x = x_ref[0].astype(jnp.float32)                         # [ts, D]
    xn = _layer_norm_f32(x, g_ref[...], b_ref[...])
    h = jnp.dot(xn.astype(jnp.bfloat16), w1_ref[...],
                preferred_element_type=jnp.float32) + b1_ref[...]
    # bias + ReLU + bf16 cast in one pass -> halves the live [ts, DFF] intermediate
    h = jnp.maximum(h, 0.0).astype(jnp.bfloat16)
    ff = jnp.dot(h, w2_ref[...], preferred_element_type=jnp.float32) + b2_ref[...]
    out_ref[0] = (x + ff).astype(out_ref.dtype)


# --------------------------------- wrappers --------------------------------------
def _rep(shape):
    """BlockSpec for a grid-invariant (resident) parameter block."""
    return pl.BlockSpec(shape, lambda *_: (0,) * len(shape))


def encoder_layer(x, bias, params, num_heads, *, q_tile, kv_tile, seq_tile,
                  vmem_limit):
    B, S, D = x.shape
    D3 = 3 * D
    dk = D // num_heads
    DFF = params["w1"].shape[1]
    bf16 = jnp.bfloat16

    # ---- 1) LN1 + fused QKV projection, head-major (B, 3H, S, dk) output ----
    qkv_h = pl.pallas_call(
        qkv_proj_kernel,
        out_shape=jax.ShapeDtypeStruct((B, 3 * num_heads, S, dk), bf16),
        grid=(B, S // seq_tile),
        in_specs=[
            pl.BlockSpec((1, seq_tile, D), lambda b, s: (b, s, 0)),
            _rep((1, D)), _rep((1, D)),
            _rep((D, D3)), _rep((1, D3)),
        ],
        out_specs=pl.BlockSpec((1, 3 * num_heads, seq_tile, dk),
                               lambda b, s: (b, 0, s, 0)),
        compiler_params=pltpu.CompilerParams(
            dimension_semantics=("parallel", "parallel"),
            vmem_limit_bytes=vmem_limit),
    )(x, params["ln1_g"], params["ln1_b"], params["wqkv"], params["bqkv"])

    # ---- 2) flash attention + Wo + residual (KV tiles = reduction axis) ----
    x = pl.pallas_call(
        attention_kernel,
        out_shape=jax.ShapeDtypeStruct((B, S, D), bf16),
        grid=(B, S // q_tile, S // kv_tile),
        in_specs=[
            pl.BlockSpec((1, q_tile, D), lambda b, qi, ki: (b, qi, 0)),   # residual x
            pl.BlockSpec((1, kv_tile), lambda b, qi, ki: (b, ki)),        # additive key bias
            pl.BlockSpec((1, num_heads, q_tile, dk),
                         lambda b, qi, ki: (b, 0, qi, 0)),                # Q heads
            pl.BlockSpec((1, num_heads, kv_tile, dk),
                         lambda b, qi, ki: (b, 1, ki, 0)),                # K heads
            pl.BlockSpec((1, num_heads, kv_tile, dk),
                         lambda b, qi, ki: (b, 2, ki, 0)),                # V heads
            _rep((D, D)),                                                 # Wo (plain [D, D])
            _rep((1, D)),                                                 # bo
        ],
        out_specs=pl.BlockSpec((1, q_tile, D), lambda b, qi, ki: (b, qi, 0)),
        scratch_shapes=[
            pltpu.VMEM((num_heads, q_tile, 1), jnp.float32),   # running max
            pltpu.VMEM((num_heads, q_tile, 1), jnp.float32),   # running denominator
            pltpu.VMEM((num_heads, q_tile, dk), jnp.float32),  # running context
        ],
        compiler_params=pltpu.CompilerParams(
            dimension_semantics=("parallel", "parallel", "arbitrary"),
            vmem_limit_bytes=vmem_limit),
    )(x, bias, qkv_h, qkv_h, qkv_h, params["wo"], params["bo"])

    # ---- 3) LN2 + feed-forward + residual ----
    x = pl.pallas_call(
        ffn_kernel,
        out_shape=jax.ShapeDtypeStruct((B, S, D), bf16),
        grid=(B, S // seq_tile),
        in_specs=[
            pl.BlockSpec((1, seq_tile, D), lambda b, s: (b, s, 0)),
            _rep((1, D)), _rep((1, D)),
            _rep((D, DFF)), _rep((1, DFF)),
            _rep((DFF, D)), _rep((1, D)),
        ],
        out_specs=pl.BlockSpec((1, seq_tile, D), lambda b, s: (b, s, 0)),
        compiler_params=pltpu.CompilerParams(
            dimension_semantics=("parallel", "parallel"),
            vmem_limit_bytes=vmem_limit),
    )(x, params["ln2_g"], params["ln2_b"],
      params["w1"], params["b1"], params["w2"], params["b2"])
    return x


def _pick_tile(S, target, align):
    if S <= target:
        return S
    t = (target // align) * align
    while t >= align and S % t:
        t -= align
    return t if t >= align else S


def transformer_encoder(x, mask, layer_params, num_heads,
                        q_tile=None, kv_tile=None, seq_tile=None):
    B, S, D = x.shape
    assert D % num_heads == 0
    q_tile = q_tile or _pick_tile(S, 256, 8)
    kv_tile = kv_tile or _pick_tile(S, 512, 128)   # multiple of 128: lane-aligned bias
    seq_tile = seq_tile or _pick_tile(S, 512, 8)
    assert S % q_tile == 0 and S % kv_tile == 0 and S % seq_tile == 0
    vmem_limit = _vmem_limit_bytes()

    # additive key-padding bias: 0.0 where kept, -1e9 where masked
    bias = (mask.astype(jnp.float32) - 1.0) * 1e9
    # bf16 residual stream between kernels (f32 statistics / adds inside kernels)
    x = x.astype(jnp.bfloat16)
    for p in layer_params:
        x = encoder_layer(x, bias, p, num_heads,
                          q_tile=q_tile, kv_tile=kv_tile, seq_tile=seq_tile,
                          vmem_limit=vmem_limit)
    return x


def init_layer_params(key, d_model, num_heads, d_ff):
    ks = jax.random.split(key, 6)
    sd = d_model ** -0.5
    sff = d_ff ** -0.5
    f32, bf16 = jnp.float32, jnp.bfloat16
    dk = d_model // num_heads
    scale = dk ** -0.5
    wq = sd * jax.random.normal(ks[0], (d_model, d_model), f32)
    wk = sd * jax.random.normal(ks[1], (d_model, d_model), f32)
    wv = sd * jax.random.normal(ks[2], (d_model, d_model), f32)
    wo = sd * jax.random.normal(ks[3], (d_model, d_model), f32)
    bq = jnp.zeros((d_model,), f32)   # 1/sqrt(dk) is folded into Wq AND bq
    bk = jnp.zeros((d_model,), f32)
    bv = jnp.zeros((d_model,), f32)
    return {
        # fused QKV weight -> one wide matmul; attention scale pre-folded into Q part
        "wqkv": jnp.concatenate([wq * scale, wk, wv], axis=1).astype(bf16),
        "bqkv": jnp.concatenate([bq * scale, bk, bv])[None, :],
        # Wo stored plain [D, D] -> single full-K output-projection matmul
        "wo": wo.astype(bf16),
        "bo": jnp.zeros((1, d_model), f32),
        "ln1_g": jnp.ones((1, d_model), f32), "ln1_b": jnp.zeros((1, d_model), f32),
        "ln2_g": jnp.ones((1, d_model), f32), "ln2_b": jnp.zeros((1, d_model), f32),
        "w1": (sd * jax.random.normal(ks[4], (d_model, d_ff), f32)).astype(bf16),
        "b1": jnp.zeros((1, d_ff), f32),
        "w2": (sff * jax.random.normal(ks[5], (d_ff, d_model), f32)).astype(bf16),
        "b2": jnp.zeros((1, d_model), f32),
    }


if __name__ == "__main__":
    # Small shapes consistent with the module (downsized n / h / d_model).
    # dk = D / H = 128 so every Q/K/V/context block and the P@V matmul are
    # lane-dense (review item); D and DFF are multiples of 128 -> lane-dense stores.
    B, S, D, H, N = 2, 256, 256, 2, 2
    DFF = 4 * D  # assumption: PointWiseFeedForward hidden dim = 4 * d_model

    root = jax.random.PRNGKey(0)
    kx, kp = jax.random.split(root)
    x = jax.random.normal(kx, (B, S, D), dtype=jnp.float32)
    # key-padding mask: last 7 key positions of batch element 1 are padding
    mask = jnp.ones((B, S), dtype=jnp.float32).at[1, -7:].set(0.0)

    layer_params = [init_layer_params(jax.random.fold_in(kp, i), D, H, DFF)
                    for i in range(N)]

    out = transformer_encoder(x, mask, layer_params, num_heads=H)
    out = jax.block_until_ready(out)
    assert out.shape == (B, S, D)
    assert bool(jnp.isfinite(out.astype(jnp.float32)).all())
    print("KERNEL_OK")
</pallas_src>

<mosaic_0001>
module attributes {stable_mosaic.version = 11 : i64} {
  func.func @qkv_proj_kernel(%arg0: i32, %arg1: i32, %arg2: memref<1x256x256xbf16, #tpu.memory_space<vmem>>, %arg3: memref<1x256xf32, #tpu.memory_space<vmem>>, %arg4: memref<1x256xf32, #tpu.memory_space<vmem>>, %arg5: memref<256x768xbf16, #tpu.memory_space<vmem>>, %arg6: memref<1x768xf32, #tpu.memory_space<vmem>>, %arg7: memref<1x6x256x128xbf16, #tpu.memory_space<vmem>>) attributes {dimension_semantics = [#tpu.dimension_semantics<parallel>, #tpu.dimension_semantics<parallel>], iteration_bounds = array<i64: 2, 1>, scalar_prefetch = 0 : i64, scratch_operands = 0 : i64, tpu.core_type = #tpu.core_type<tc>, window_params = [{transform_indices = @transform_0, window_bounds = array<i64: 1, 256, 256>}, {pipeline_mode = #tpu.pipeline_mode<synchronous>, transform_indices = @transform_1, window_bounds = array<i64: 1, 256>}, {pipeline_mode = #tpu.pipeline_mode<synchronous>, transform_indices = @transform_2, window_bounds = array<i64: 1, 256>}, {pipeline_mode = #tpu.pipeline_mode<synchronous>, transform_indices = @transform_3, window_bounds = array<i64: 256, 768>}, {pipeline_mode = #tpu.pipeline_mode<synchronous>, transform_indices = @transform_4, window_bounds = array<i64: 1, 768>}, {transform_indices = @transform_5, window_bounds = array<i64: 1, 6, 256, 128>}]} {
    %c0 = arith.constant 0 : index
    %c0_0 = arith.constant 0 : index
    %c0_1 = arith.constant 0 : index
    %0 = vector.load %arg2[%c0, %c0_0, %c0_1] : memref<1x256x256xbf16, #tpu.memory_space<vmem>>, vector<1x256x256xbf16>
    %1 = vector.shape_cast %0 : vector<1x256x256xbf16> to vector<256x256xbf16>
    %2 = arith.extf %1 : vector<256x256xbf16> to vector<256x256xf32>
    %c0_2 = arith.constant 0 : index
    %c0_3 = arith.constant 0 : index
    %3 = vector.load %arg3[%c0_2, %c0_3] : memref<1x256xf32, #tpu.memory_space<vmem>>, vector<1x256xf32>
    %c0_4 = arith.constant 0 : index
    %c0_5 = arith.constant 0 : index
    %4 = vector.load %arg4[%c0_4, %c0_5] : memref<1x256xf32, #tpu.memory_space<vmem>>, vector<1x256xf32>
    %cst = arith.constant dense<0.000000e+00> : vector<256xf32>
    %5 = vector.multi_reduction <add>, %2, %cst [1] : vector<256x256xf32> to vector<256xf32>
    %6 = vector.shape_cast %5 : vector<256xf32> to vector<256x1xf32>
    %cst_6 = arith.constant 2.560000e+02 : f32
    %7 = vector.broadcast %cst_6 : f32 to vector<256x1xf32>
    %8 = arith.divf %6, %7 : vector<256x1xf32>
    %9 = vector.broadcast %8 : vector<256x1xf32> to vector<256x256xf32>
    %10 = arith.subf %2, %9 : vector<256x256xf32>
    %11 = arith.mulf %10, %10 : vector<256x256xf32>
    %cst_7 = arith.constant dense<0.000000e+00> : vector<256xf32>
    %12 = vector.multi_reduction <add>, %11, %cst_7 [1] : vector<256x256xf32> to vector<256xf32>
    %13 = vector.shape_cast %12 : vector<256xf32> to vector<256x1xf32>
    %cst_8 = arith.constant 2.560000e+02 : f32
    %14 = vector.broadcast %cst_8 : f32 to vector<256x1xf32>
    %15 = arith.divf %13, %14 : vector<256x1xf32>
    %16 = vector.broadcast %8 : vector<256x1xf32> to vector<256x256xf32>
    %17 = arith.subf %2, %16 : vector<256x256xf32>
    %cst_9 = arith.constant 9.99999997E-7 : f32
    %18 = vector.broadcast %cst_9 : f32 to vector<256x1xf32>
    %19 = arith.addf %15, %18 : vector<256x1xf32>
    %20 = math.rsqrt %19 : vector<256x1xf32>
    %21 = vector.broadcast %20 : vector<256x1xf32> to vector<256x256xf32>
    %22 = arith.mulf %17, %21 : vector<256x256xf32>
    %23 = vector.broadcast %3 : vector<1x256xf32> to vector<256x256xf32>
    %24 = arith.mulf %22, %23 : vector<256x256xf32>
    %25 = vector.broadcast %4 : vector<1x256xf32> to vector<256x256xf32>
    %26 = arith.addf %24, %25 : vector<256x256xf32>
    %27 = arith.truncf %26 : vector<256x256xf32> to vector<256x256xbf16>
    %c0_10 = arith.constant 0 : index
    %c0_11 = arith.constant 0 : index
    %28 = vector.load %arg5[%c0_10, %c0_11] : memref<256x768xbf16, #tpu.memory_space<vmem>>, vector<256x768xbf16>
    %cst_12 = arith.constant dense<0.000000e+00> : vector<256x768xf32>
    %29 = tpu.matmul %27, %28, %cst_12 {dimension_numbers = #tpu.dot_dimension_numbers<[1], [0], [0], [1], [0, 0, 1, 1], [], []>} : vector<256x256xbf16>, vector<256x768xbf16>, vector<256x768xf32> -> vector<256x768xf32>
    %c0_13 = arith.constant 0 : index
    %c0_14 = arith.constant 0 : index
    %30 = vector.load %arg6[%c0_13, %c0_14] : memref<1x768xf32, #tpu.memory_space<vmem>>, vector<1x768xf32>
    %31 = vector.broadcast %30 : vector<1x768xf32> to vector<256x768xf32>
    %32 = arith.addf %29, %31 : vector<256x768xf32>
    %33 = arith.truncf %32 : vector<256x768xf32> to vector<256x768xbf16>
    %34 = vector.extract_strided_slice %33 {offsets = [0, 0], sizes = [256, 128], strides = [1, 1]} : vector<256x768xbf16> to vector<256x128xbf16>
    %c0_15 = arith.constant 0 : index
    %c0_16 = arith.constant 0 : index
    %c0_17 = arith.constant 0 : index
    %c0_18 = arith.constant 0 : index
    %35 = vector.load %arg7[%c0_15, %c0_16, %c0_17, %c0_18] : memref<1x6x256x128xbf16, #tpu.memory_space<vmem>>, vector<1x1x256x128xbf16>
    %36 = vector.shape_cast %35 : vector<1x1x256x128xbf16> to vector<256x128xbf16>
    %37 = vector.shape_cast %34 : vector<256x128xbf16> to vector<1x1x256x128xbf16>
    tpu.vector_store %arg7[%c0_15, %c0_16, %c0_17, %c0_18], %37 {strides = array<i32>} : memref<1x6x256x128xbf16, #tpu.memory_space<vmem>>, vector<1x1x256x128xbf16>,
    %38 = vector.extract_strided_slice %33 {offsets = [0, 128], sizes = [256, 128], strides = [1, 1]} : vector<256x768xbf16> to vector<256x128xbf16>
    %c0_19 = arith.constant 0 : index
    %c1 = arith.constant 1 : index
    %c0_20 = arith.constant 0 : index
    %c0_21 = arith.constant 0 : index
    %39 = vector.load %arg7[%c0_19, %c1, %c0_20, %c0_21] : memref<1x6x256x128xbf16, #tpu.memory_space<vmem>>, vector<1x1x256x128xbf16>
    %40 = vector.shape_cast %39 : vector<1x1x256x128xbf16> to vector<256x128xbf16>
    %41 = vector.shape_cast %38 : vector<256x128xbf16> to vector<1x1x256x128xbf16>
    tpu.vector_store %arg7[%c0_19, %c1, %c0_20, %c0_21], %41 {strides = array<i32>} : memref<1x6x256x128xbf16, #tpu.memory_space<vmem>>, vector<1x1x256x128xbf16>,
    %42 = vector.extract_strided_slice %33 {offsets = [0, 256], sizes = [256, 128], strides = [1, 1]} : vector<256x768xbf16> to vector<256x128xbf16>
    %c0_22 = arith.constant 0 : index
    %c2 = arith.constant 2 : index
    %c0_23 = arith.constant 0 : index
    %c0_24 = arith.constant 0 : index
    %43 = vector.load %arg7[%c0_22, %c2, %c0_23, %c0_24] : memref<1x6x256x128xbf16, #tpu.memory_space<vmem>>, vector<1x1x256x128xbf16>
    %44 = vector.shape_cast %43 : vector<1x1x256x128xbf16> to vector<256x128xbf16>
    %45 = vector.shape_cast %42 : vector<256x128xbf16> to vector<1x1x256x128xbf16>
    tpu.vector_store %arg7[%c0_22, %c2, %c0_23, %c0_24], %45 {strides = array<i32>} : memref<1x6x256x128xbf16, #tpu.memory_space<vmem>>, vector<1x1x256x128xbf16>,
    %46 = vector.extract_strided_slice %33 {offsets = [0, 384], sizes = [256, 128], strides = [1, 1]} : vector<256x768xbf16> to vector<256x128xbf16>
    %c0_25 = arith.constant 0 : index
    %c3 = arith.constant 3 : index
    %c0_26 = arith.constant 0 : index
    %c0_27 = arith.constant 0 : index
    %47 = vector.load %arg7[%c0_25, %c3, %c0_26, %c0_27] : memref<1x6x256x128xbf16, #tpu.memory_space<vmem>>, vector<1x1x256x128xbf16>
    %48 = vector.shape_cast %47 : vector<1x1x256x128xbf16> to vector<256x128xbf16>
    %49 = vector.shape_cast %46 : vector<256x128xbf16> to vector<1x1x256x128xbf16>
    tpu.vector_store %arg7[%c0_25, %c3, %c0_26, %c0_27], %49 {strides = array<i32>} : memref<1x6x256x128xbf16, #tpu.memory_space<vmem>>, vector<1x1x256x128xbf16>,
    %50 = vector.extract_strided_slice %33 {offsets = [0, 512], sizes = [256, 128], strides = [1, 1]} : vector<256x768xbf16> to vector<256x128xbf16>
    %c0_28 = arith.constant 0 : index
    %c4 = arith.constant 4 : index
    %c0_29 = arith.constant 0 : index
    %c0_30 = arith.constant 0 : index
    %51 = vector.load %arg7[%c0_28, %c4, %c0_29, %c0_30] : memref<1x6x256x128xbf16, #tpu.memory_space<vmem>>, vector<1x1x256x128xbf16>
    %52 = vector.shape_cast %51 : vector<1x1x256x128xbf16> to vector<256x128xbf16>
    %53 = vector.shape_cast %50 : vector<256x128xbf16> to vector<1x1x256x128xbf16>
    tpu.vector_store %arg7[%c0_28, %c4, %c0_29, %c0_30], %53 {strides = array<i32>} : memref<1x6x256x128xbf16, #tpu.memory_space<vmem>>, vector<1x1x256x128xbf16>,
    %54 = vector.extract_strided_slice %33 {offsets = [0, 640], sizes = [256, 128], strides = [1, 1]} : vector<256x768xbf16> to vector<256x128xbf16>
    %c0_31 = arith.constant 0 : index
    %c5 = arith.constant 5 : index
    %c0_32 = arith.constant 0 : index
    %c0_33 = arith.constant 0 : index
    %55 = vector.load %arg7[%c0_31, %c5, %c0_32, %c0_33] : memref<1x6x256x128xbf16, #tpu.memory_space<vmem>>, vector<1x1x256x128xbf16>
    %56 = vector.shape_cast %55 : vector<1x1x256x128xbf16> to vector<256x128xbf16>
    %57 = vector.shape_cast %54 : vector<256x128xbf16> to vector<1x1x256x128xbf16>
    tpu.vector_store %arg7[%c0_31, %c5, %c0_32, %c0_33], %57 {strides = array<i32>} : memref<1x6x256x128xbf16, #tpu.memory_space<vmem>>, vector<1x1x256x128xbf16>,
    return
  }
  func.func @transform_0(%arg0: i32, %arg1: i32) -> (i32, i32, i32) {
    %c0_i32 = arith.constant 0 : i32
    %c0_i32_0 = arith.constant 0 : i32
    return %arg0, %arg1, %c0_i32 : i32, i32, i32
  }
  func.func @transform_1(%arg0: i32, %arg1: i32) -> (i32, i32) {
    %c0_i32 = arith.constant 0 : i32
    %c0_i32_0 = arith.constant 0 : i32
    %c0_i32_1 = arith.constant 0 : i32
    return %c0_i32, %c0_i32_0 : i32, i32
  }
  func.func @transform_2(%arg0: i32, %arg1: i32) -> (i32, i32) {
    %c0_i32 = arith.constant 0 : i32
    %c0_i32_0 = arith.constant 0 : i32
    %c0_i32_1 = arith.constant 0 : i32
    return %c0_i32, %c0_i32_0 : i32, i32
  }
  func.func @transform_3(%arg0: i32, %arg1: i32) -> (i32, i32) {
    %c0_i32 = arith.constant 0 : i32
    %c0_i32_0 = arith.constant 0 : i32
    %c0_i32_1 = arith.constant 0 : i32
    return %c0_i32, %c0_i32_0 : i32, i32
  }
  func.func @transform_4(%arg0: i32, %arg1: i32) -> (i32, i32) {
    %c0_i32 = arith.constant 0 : i32
    %c0_i32_0 = arith.constant 0 : i32
    %c0_i32_1 = arith.constant 0 : i32
    return %c0_i32, %c0_i32_0 : i32, i32
  }
  func.func @transform_5(%arg0: i32, %arg1: i32) -> (i32, i32, i32, i32) {
    %c0_i32 = arith.constant 0 : i32
    %c0_i32_0 = arith.constant 0 : i32
    %c0_i32_1 = arith.constant 0 : i32
    return %arg0, %c0_i32, %arg1, %c0_i32_0 : i32, i32, i32, i32
  }
}

</mosaic_0001>

<llo_original>
// kernel: tpu_custom_call.1
$region0: #{tpu_custom_call.1}
  #allocation0 [shape = 'u32[]', space=smem, size = 0x4, offset = 0x4, fixed_abs, tag = 'smem constant byte address 0x4 - core index']
  #allocation1 [shape = 'u32[144,128]{1,0:T(1,128)}', space=vmem, size = 0x12000, scoped, tag = 'internal scratch']
  %s0 = inlined_call_operand.hbm [shape: bf16[2,256,256], index: 0, kind: input, shape index: {}]
  %s1 = inlined_call_operand.hbm [shape: f32[1,256], index: 1, kind: input, shape index: {}]
  %s2 = inlined_call_operand.hbm [shape: f32[1,256], index: 2, kind: input, shape index: {}]
  %s3 = inlined_call_operand.hbm [shape: bf16[256,768], index: 3, kind: input, shape index: {}]
  %s4 = inlined_call_operand.hbm [shape: f32[1,768], index: 4, kind: input, shape index: {}]
  %s5 = inlined_call_operand.hbm [shape: bf16[2,6,256,128], index: 5, kind: output, shape index: {}]
  %s6 = sld [smem:[#allocation0]]
  $region73: #{tpu_custom_call.1} parent=0
    _
  %s8 = ssub.s32 1, %s6
  %s9 = scalar_select 0, %s8, %s6
  $region1: #{tpu_custom_call.1} parent=0
    #allocation2 [shape = 'u8[262144]{0}', space=vmem, size = 0x40000, scoped, tag = 'input window, operand 0']
    #allocation3 [shape = 's32[2]{0}', space=sflag, size = 0x8, scoped, tag = 'scoped memory for tpu_custom_call.1']
    #allocation4 [shape = 's32[2]{0}', space=sflag, size = 0x8, scoped, tag = 'scoped memory for tpu_custom_call.1']
    #allocation5 [shape = 'u8[1024]{0}', space=vmem, size = 0x400, scoped, tag = 'input window, operand 1, single buffered']
    #allocation6 [shape = 's32[1]{0}', space=sflag, size = 0x4, scoped, tag = 'scoped memory for tpu_custom_call.1']
    #allocation7 [shape = 'u8[1024]{0}', space=vmem, size = 0x400, scoped, tag = 'input window, operand 2, single buffered']
    #allocation8 [shape = 'u8[393216]{0}', space=vmem, size = 0x60000, scoped, tag = 'input window, operand 3, single buffered']
    #allocation9 [shape = 's32[1]{0}', space=sflag, size = 0x4, scoped, tag = 'scoped memory for tpu_custom_call.1']
    #allocation10 [shape = 'u8[3072]{0}', space=vmem, size = 0xc00, scoped, tag = 'input window, operand 4, single buffered']
    #allocation11 [shape = 'u8[786432]{0}', space=vmem, size = 0xc0000, scoped, tag = 'output window, operand 0']
    %10 = vsyncpa [#allocation3], 0
    %s11 = scalar_lea.sflag [#allocation3], 1
    %12 = vsyncpa %s11, 0
    %13 = vsyncpa [#allocation6], 0
    %14 = vsyncpa [#allocation9], 0
    %15 = vsyncpa [#allocation4], 0
    %s16 = scalar_lea.sflag [#allocation4], 1
    %17 = vsyncpa %s16, 0
    loop: start=0, step=1, limit=4
    $region2: #{tpu_custom_call.1} parent=1 // loop_pre_header
      _
    $region3: #{tpu_custom_call.1} parent=1 // loop_header
      %s19 = sphi 0, %s23
      %p20 = scmp.ge.s32.totalorder %s19, 4
      %s26 = sphi 0, %s38
      %s27 = sphi 0, %s34
      %s28 = sphi 0, %s26
      %s29 = sphi 0, %s27
      %s30 = sphi 0, %s28
      %s31 = sphi 0, %s29
      %s43 = sphi 0, %s45
      %s46 = sphi 0, %s43
      %s47 = sphi 0, %s46
      %s63 = sphi 0, %s47
      %s67 = sphi 0, %s67
      %s69 = sphi 0, %s67
      %s70 = sphi 0, %s69
      %s84 = sphi 0, %s70
      %s88 = sphi 0, %s88
      %s90 = sphi 0, %s88
      %s91 = sphi 0, %s90
      %s105 = sphi 0, %s91
      %s109 = sphi 0, %s109
      %s111 = sphi 0, %s109
      %s112 = sphi 0, %s111
      %s126 = sphi 0, %s112
      %s130 = sphi 0, %s130
      %s132 = sphi 0, %s130
      %s133 = sphi 0, %s132
      %s147 = sphi 0, %s133
      %s155 = sphi 0, %s157
      %s158 = sphi 0, %s155
      %s159 = sphi 0, %s158
      %s175 = sphi 0, %s159
    $region4: #{tpu_custom_call.1} parent=1 // loop_header_branch
      %22 = sbr.rel (%p20) target = $region8
    $region5: #{tpu_custom_call.1} parent=1 // loop_body
      %s24 = ssub.s32 %s19, 1
      %s25 = ssub.s32 %s19, 2
      %s32 = sadd.s32 1, %s27
      %p33 = scmp.ge.s32.totalorder %s32, 1
      %s34 = scalar_select %p33, 0, %s32
      %s35 = sadd.s32 1, %s26
      %s36 = scalar_select %p33, %s35, %s26
      %p37 = scmp.ge.s32.totalorder %s36, 2
      %s38 = scalar_select %p37, 0, %s36
      %s39 = ssub.s32 %s26, %s38
      %s40 = ssub.s32 %s27, %s34
      %s41 = sor.u32 %s39, %s40
      %p42 = scmp.eq.s32.totalorder %s41, 0
      %s44 = sadd.s32 %s43, 1
      %s45 = scalar_select %p42, %s43, %s44
      %p48 = pneg %p42
      %p49 = scmp.eq.s32.totalorder %s19, 1
      %p50 = por %p48, %p49
      %p51 = scmp.ne.s32.totalorder %s43, %s46
      %p52 = scmp.eq.s32.totalorder %s19, 0
      %p53 = por %p51, %p52
      %p54 = scmp.ne.s32.totalorder %s43, %s46
      %p55 = scmp.eq.s32.totalorder %s24, 1
      %p56 = por %p54, %p55
      %p57 = scmp.ne.s32.totalorder %s46, %s47
      %p58 = scmp.eq.s32.totalorder %s24, 0
      %p59 = por %p57, %p58
      %p60 = scmp.ne.s32.totalorder %s46, %s47
      %p61 = scmp.eq.s32.totalorder %s25, 1
      %p62 = por %p60, %p61
      %p64 = scmp.ne.s32.totalorder %s47, %s63
      %p65 = scmp.eq.s32.totalorder %s25, 0
      %p66 = por %p64, %p65
      %s68 = sadd.s32 %s67, 1
      %p71 = scmp.eq.s32.totalorder %s19, 1
      %p72 = scmp.ne.s32.totalorder %s67, %s69
      %p73 = scmp.eq.s32.totalorder %s19, 0
      %p74 = por %p72, %p73
      %p75 = scmp.ne.s32.totalorder %s67, %s69
      %p76 = scmp.eq.s32.totalorder %s24, 1
      %p77 = por %p75, %p76
      %p78 = scmp.ne.s32.totalorder %s69, %s70
      %p79 = scmp.eq.s32.totalorder %s24, 0
      %p80 = por %p78, %p79
      %p81 = scmp.ne.s32.totalorder %s69, %s70
      %p82 = scmp.eq.s32.totalorder %s25, 1
      %p83 = por %p81, %p82
      %p85 = scmp.ne.s32.totalorder %s70, %s84
      %p86 = scmp.eq.s32.totalorder %s25, 0
      %p87 = por %p85, %p86
      %s89 = sadd.s32 %s88, 1
      %p92 = scmp.eq.s32.totalorder %s19, 1
      %p93 = scmp.ne.s32.totalorder %s88, %s90
      %p94 = scmp.eq.s32.totalorder %s19, 0
      %p95 = por %p93, %p94
      %p96 = scmp.ne.s32.totalorder %s88, %s90
      %p97 = scmp.eq.s32.totalorder %s24, 1
      %p98 = por %p96, %p97
      %p99 = scmp.ne.s32.totalorder %s90, %s91
      %p100 = scmp.eq.s32.totalorder %s24, 0
      %p101 = por %p99, %p100
      %p102 = scmp.ne.s32.totalorder %s90, %s91
      %p103 = scmp.eq.s32.totalorder %s25, 1
      %p104 = por %p102, %p103
      %p106 = scmp.ne.s32.totalorder %s91, %s105
      %p107 = scmp.eq.s32.totalorder %s25, 0
      %p108 = por %p106, %p107
      %s110 = sadd.s32 %s109, 1
      %p113 = scmp.eq.s32.totalorder %s19, 1
      %p114 = scmp.ne.s32.totalorder %s109, %s111
      %p115 = scmp.eq.s32.totalorder %s19, 0
      %p116 = por %p114, %p115
      %p117 = scmp.ne.s32.totalorder %s109, %s111
      %p118 = scmp.eq.s32.totalorder %s24, 1
      %p119 = por %p117, %p118
      %p120 = scmp.ne.s32.totalorder %s111, %s112
      %p121 = scmp.eq.s32.totalorder %s24, 0
      %p122 = por %p120, %p121
      %p123 = scmp.ne.s32.totalorder %s111, %s112
      %p124 = scmp.eq.s32.totalorder %s25, 1
      %p125 = por %p123, %p124
      %p127 = scmp.ne.s32.totalorder %s112, %s126
      %p128 = scmp.eq.s32.totalorder %s25, 0
      %p129 = por %p127, %p128
      %s131 = sadd.s32 %s130, 1
      %p134 = scmp.eq.s32.totalorder %s19, 1
      %p135 = scmp.ne.s32.totalorder %s130, %s132
      %p136 = scmp.eq.s32.totalorder %s19, 0
      %p137 = por %p135, %p136
      %p138 = scmp.ne.s32.totalorder %s130, %s132
      %p139 = scmp.eq.s32.totalorder %s24, 1
      %p140 = por %p138, %p139
      %p141 = scmp.ne.s32.totalorder %s132, %s133
      %p142 = scmp.eq.s32.totalorder %s24, 0
      %p143 = por %p141, %p142
      %p144 = scmp.ne.s32.totalorder %s132, %s133
      %p145 = scmp.eq.s32.totalorder %s25, 1
      %p146 = por %p144, %p145
      %p148 = scmp.ne.s32.totalorder %s133, %s147
      %p149 = scmp.eq.s32.totalorder %s25, 0
      %p150 = por %p148, %p149
      %s151 = ssub.s32 %s26, %s38
      %s152 = ssub.s32 %s27, %s34
      %s153 = sor.u32 %s151, %s152
      %p154 = scmp.eq.s32.totalorder %s153, 0
      %s156 = sadd.s32 %s155, 1
      %s157 = scalar_select %p154, %s155, %s156
      %p160 = pneg %p154
      %p161 = scmp.eq.s32.totalorder %s19, 1
      %p162 = por %p160, %p161
      %p163 = scmp.ne.s32.totalorder %s155, %s158
      %p164 = scmp.eq.s32.totalorder %s19, 0
      %p165 = por %p163, %p164
      %p166 = scmp.ne.s32.totalorder %s155, %s158
      %p167 = scmp.eq.s32.totalorder %s24, 1
      %p168 = por %p166, %p167
      %p169 = scmp.ne.s32.totalorder %s158, %s159
      %p170 = scmp.eq.s32.totalorder %s24, 0
      %p171 = por %p169, %p170
      %p172 = scmp.ne.s32.totalorder %s158, %s159
      %p173 = scmp.eq.s32.totalorder %s25, 1
      %p174 = por %p172, %p173
      %p176 = scmp.ne.s32.totalorder %s159, %s175
      %p177 = scmp.eq.s32.totalorder %s25, 0
      %p178 = por %p176, %p177
      %p179 = scmp.le.s32.totalorder 1, %s19
      %p180 = scmp.lt.s32.totalorder %s19, 3
      %p181 = pnand %p179, %p180
      %p182 = pneg %p181
      // Predicated region
      $region9: #{tpu_custom_call.1} parent=5 // pred_check
        _
      $region10: #{tpu_custom_call.1} parent=5 // pred_check_branch
        %184 = sbr.rel (%p181) target = $region12
      $region11: #{tpu_custom_call.1} parent=5 // pred_region
        %s185 = ssub.s32 %s19, 1
        // Predicated region
        $region13: #{tpu_custom_call.1} parent=11 // pred_check
          %p186 = pneg %p80
        $region14: #{tpu_custom_call.1} parent=11 // pred_check_branch
          %188 = sbr.rel (%p186) target = $region16
        $region15: #{tpu_custom_call.1} parent=11 // pred_region
          %s190 = ssub.s32 32, 32
          %191 = vsyncadd [#allocation6], %s190
          %s193 = sshll.u32 [#allocation5], 4
          %s194 = int_to_ptr.vmem [resolvable:$true] %s193
          %196 = dma.hbm_to_vmem [thread:$0]  %s1, 32, %s194, [#allocation6]
        $region16: #{tpu_custom_call.1} parent=11 // pred_fallthru
          _
        // Predicated region
        $region17: #{tpu_custom_call.1} parent=11 // pred_check
          %p197 = pneg %p101
        $region18: #{tpu_custom_call.1} parent=11 // pred_check_branch
          %199 = sbr.rel (%p197) target = $region20
        $region19: #{tpu_custom_call.1} parent=11 // pred_region
          %s201 = ssub.s32 32, 32
          %202 = vsyncadd [#allocation6], %s201
          %s204 = sshll.u32 [#allocation7], 4
          %s205 = int_to_ptr.vmem [resolvable:$true] %s204
          %207 = dma.hbm_to_vmem [thread:$0]  %s2, 32, %s205, [#allocation6]
        $region20: #{tpu_custom_call.1} parent=11 // pred_fallthru
          _
        // Predicated region
        $region21: #{tpu_custom_call.1} parent=11 // pred_check
          %p208 = pneg %p122
        $region22: #{tpu_custom_call.1} parent=11 // pred_check_branch
          %210 = sbr.rel (%p208) target = $region24
        $region23: #{tpu_custom_call.1} parent=11 // pred_region
          %s212 = ssub.s32 12288, 12288
          %213 = vsyncadd [#allocation9], %s212
          %s214 = sshll.u32 [#allocation8], 4
          %s215 = int_to_ptr.vmem [resolvable:$true] %s214
          %220 = dma.hbm_to_vmem [thread:$0]  %s3, 12288, %s215, [#allocation9], 384, 384, 24
        $region24: #{tpu_custom_call.1} parent=11 // pred_fallthru
          _
        // Predicated region
        $region25: #{tpu_custom_call.1} parent=11 // pred_check
          %p221 = pneg %p143
        $region26: #{tpu_custom_call.1} parent=11 // pred_check_branch
          %223 = sbr.rel (%p221) target = $region28
        $region27: #{tpu_custom_call.1} parent=11 // pred_region
          %s225 = ssub.s32 96, 96
          %226 = vsyncadd [#allocation9], %s225
          %s228 = sshll.u32 [#allocation10], 4
          %s229 = int_to_ptr.vmem [resolvable:$true] %s228
          %231 = dma.hbm_to_vmem [thread:$0]  %s4, 96, %s229, [#allocation9]
        $region28: #{tpu_custom_call.1} parent=11 // pred_fallthru
          _
      $region12: #{tpu_custom_call.1} parent=5 // pred_fallthru
        _
      %p232 = scmp.lt.s32.totalorder %s19, 2
      // Predicated region
      $region29: #{tpu_custom_call.1} parent=5 // pred_check
        %p233 = pneg %p232
      $region30: #{tpu_custom_call.1} parent=5 // pred_check_branch
        %235 = sbr.rel (%p233) target = $region32
      $region31: #{tpu_custom_call.1} parent=5 // pred_region
        // Predicated region
        $region33: #{tpu_custom_call.1} parent=31 // pred_check
          %p236 = pneg %p53
        $region34: #{tpu_custom_call.1} parent=31 // pred_check_branch
          %238 = sbr.rel (%p236) target = $region36
        $region35: #{tpu_custom_call.1} parent=31 // pred_region
          %s239 = sand.u32 %s43, 1
          %s240 = scalar_lea.sflag [#allocation3], %s239
          %s241 = sand.u32 %s43, 1
          %s242 = smul.addr %s241, 256
          %s243 = scalar_lea.vmem [#allocation2], %s242
          %s244 = smul.u32 32, %s27
          %s246 = ssub.s32 4096, 4096
          %247 = vsyncadd %s240, %s246
          %s248 = smul.addr %s244, 2
          %s249 = smul.addr %s26, 64
          %s250 = sadd.s32 %s248, %s249
          %s251 = smul.addr %s250, 64
          %s252 = scalar_lea.hbm %s0, %s251
          %s253 = sshll.u32 %s243, 4
          %s254 = int_to_ptr.vmem [resolvable:$true] %s253
          %259 = dma.hbm_to_vmem [thread:$0]  %s252, 4096, %s254, %s240, 128, 128, 8
        $region36: #{tpu_custom_call.1} parent=31 // pred_fallthru
          _
      $region32: #{tpu_custom_call.1} parent=5 // pred_fallthru
        _
      %p260 = scmp.le.s32.totalorder 1, %s19
      %p261 = scmp.lt.s32.totalorder %s19, 3
      %p262 = pnand %p260, %p261
      %p263 = pneg %p262
      // Predicated region
      $region37: #{tpu_custom_call.1} parent=5 // pred_check
        _
      $region38: #{tpu_custom_call.1} parent=5 // pred_check_branch
        %265 = sbr.rel (%p262) target = $region40
      $region39: #{tpu_custom_call.1} parent=5 // pred_region
        %s266 = ssub.s32 %s19, 1
        %s267 = sand.u32 %s46, 1
        %s268 = scalar_lea.sflag [#allocation3], %s267
        %s269 = sand.u32 %s46, 1
        %s270 = smul.addr %s269, 256
        %s271 = scalar_lea.vmem [#allocation2], %s270
        // Predicated region
        $region41: #{tpu_custom_call.1} parent=39 // pred_check
          %p272 = pneg %p59
        $region42: #{tpu_custom_call.1} parent=39 // pred_check_branch
          %274 = sbr.rel (%p272) target = $region44
        $region43: #{tpu_custom_call.1} parent=39 // pred_region
          %275 = dma.done %s268, 4096
        $region44: #{tpu_custom_call.1} parent=39 // pred_fallthru
          _
        // Predicated region
        $region45: #{tpu_custom_call.1} parent=39 // pred_check
          %p276 = pneg %p80
        $region46: #{tpu_custom_call.1} parent=39 // pred_check_branch
          %278 = sbr.rel (%p276) target = $region48
        $region47: #{tpu_custom_call.1} parent=39 // pred_region
          %279 = dma.done [#allocation6], 32
        $region48: #{tpu_custom_call.1} parent=39 // pred_fallthru
          _
        // Predicated region
        $region49: #{tpu_custom_call.1} parent=39 // pred_check
          %p280 = pneg %p101
        $region50: #{tpu_custom_call.1} parent=39 // pred_check_branch
          %282 = sbr.rel (%p280) target = $region52
        $region51: #{tpu_custom_call.1} parent=39 // pred_region
          %283 = dma.done [#allocation6], 32
        $region52: #{tpu_custom_call.1} parent=39 // pred_fallthru
          _
        // Predicated region
        $region53: #{tpu_custom_call.1} parent=39 // pred_check
          %p284 = pneg %p122
        $region54: #{tpu_custom_call.1} parent=39 // pred_check_branch
          %286 = sbr.rel (%p284) target = $region56
        $region55: #{tpu_custom_call.1} parent=39 // pred_region
          %287 = dma.done [#allocation9], 12288
        $region56: #{tpu_custom_call.1} parent=39 // pred_fallthru
          _
        // Predicated region
        $region57: #{tpu_custom_call.1} parent=39 // pred_check
          %p288 = pneg %p143
        $region58: #{tpu_custom_call.1} parent=39 // pred_check_branch
          %290 = sbr.rel (%p288) target = $region60
        $region59: #{tpu_custom_call.1} parent=39 // pred_region
          %291 = dma.done [#allocation9], 96
        $region60: #{tpu_custom_call.1} parent=39 // pred_fallthru
          _
        %s292 = sand.u32 %s46, 1
        %s293 = scalar_lea.sflag [#allocation3], %s292
        %s294 = sand.u32 %s46, 1
        %s295 = smul.addr %s294, 256
        %s296 = scalar_lea.vmem [#allocation2], %s295
        %p297 = pneg %p59
        %p298 = pneg %p56
        %p299 = pneg %p80
        %p300 = pneg %p77
        %p301 = pneg %p101
        %p302 = pneg %p98
        %p303 = pneg %p122
        %p304 = pneg %p119
        %p305 = pneg %p143
        %p306 = pneg %p140
        %p307 = pneg %p171
        %p308 = pneg %p168
        %s309 = sand.u32 %s158, 1
        %s310 = scalar_lea.sflag [#allocation4], %s309
        %s311 = sand.u32 %s158, 1
        %s312 = smul.addr %s311, 768
        %s313 = scalar_lea.vmem [#allocation11], %s312
        %s314 = smul.u32 32, %s29
        %s315 = smul.u32 32, %s29
        %v316 = vld [vmem:[%s271] sm:$0xff]
        %v317 = vld [vmem:[%s271 + $0x8] sm:$0xff]
        %v318 = vld [vmem:[%s271 + $0x10] sm:$0xff]
        %v319 = vld [vmem:[%s271 + $0x18] sm:$0xff]
        %v320 = vld [vmem:[%s271 + $0x20] sm:$0xff]
        %v321 = vld [vmem:[%s271 + $0x28] sm:$0xff]
        %v322 = vld [vmem:[%s271 + $0x30] sm:$0xff]
        %v323 = vld [vmem:[%s271 + $0x38] sm:$0xff]
        %v324 = vld [vmem:[%s271 + $0x40] sm:$0xff]
        %v325 = vld [vmem:[%s271 + $0x48] sm:$0xff]
        %v326 = vld [vmem:[%s271 + $0x50] sm:$0xff]
        %v327 = vld [vmem:[%s271 + $0x58] sm:$0xff]
        %v328 = vld [vmem:[%s271 + $0x60] sm:$0xff]
        %v329 = vld [vmem:[%s271 + $0x68] sm:$0xff]
        %v330 = vld [vmem:[%s271 + $0x70] sm:$0xff]
        %v331 = vld [vmem:[%s271 + $0x78] sm:$0xff]
        %v332 = vld [vmem:[%s271 + $0x80] sm:$0xff]
        %v333 = vld [vmem:[%s271 + $0x88] sm:$0xff]
        %v334 = vld [vmem:[%s271 + $0x90] sm:$0xff]
        %v335 = vld [vmem:[%s271 + $0x98] sm:$0xff]
        %v336 = vld [vmem:[%s271 + $0xa0] sm:$0xff]
        %v337 = vld [vmem:[%s271 + $0xa8] sm:$0xff]
        %v338 = vld [vmem:[%s271 + $0xb0] sm:$0xff]
        %v339 = vld [vmem:[%s271 + $0xb8] sm:$0xff]
        %v340 = vld [vmem:[%s271 + $0xc0] sm:$0xff]
        %v341 = vld [vmem:[%s271 + $0xc8] sm:$0xff]
        %v342 = vld [vmem:[%s271 + $0xd0] sm:$0xff]
        %v343 = vld [vmem:[%s271 + $0xd8] sm:$0xff]
        %v344 = vld [vmem:[%s271 + $0xe0] sm:$0xff]
        %v345 = vld [vmem:[%s271 + $0xe8] sm:$0xff]
        %v346 = vld [vmem:[%s271 + $0xf0] sm:$0xff]
        %v347 = vld [vmem:[%s271 + $0xf8] sm:$0xff]
        %v348 = vunpack.c.l.bf16 %v316
        %v349 = vunpack.c.h.bf16 %v316
        %v350 = vunpack.c.l.bf16 %v317
        %v351 = vunpack.c.h.bf16 %v317
        %v352 = vunpack.c.l.bf16 %v318
        %v353 = vunpack.c.h.bf16 %v318
        %v354 = vunpack.c.l.bf16 %v319
        %v355 = vunpack.c.h.bf16 %v319
        %v356 = vunpack.c.l.bf16 %v320
        %v357 = vunpack.c.h.bf16 %v320
        %v358 = vunpack.c.l.bf16 %v321
        %v359 = vunpack.c.h.bf16 %v321
        %v360 = vunpack.c.l.bf16 %v322
        %v361 = vunpack.c.h.bf16 %v322
        %v362 = vunpack.c.l.bf16 %v323
        %v363 = vunpack.c.h.bf16 %v323
        %v364 = vunpack.c.l.bf16 %v324
        %v365 = vunpack.c.h.bf16 %v324
        %v366 = vunpack.c.l.bf16 %v325
        %v367 = vunpack.c.h.bf16 %v325
        %v368 = vunpack.c.l.bf16 %v326
        %v369 = vunpack.c.h.bf16 %v326
        %v370 = vunpack.c.l.bf16 %v327
        %v371 = vunpack.c.h.bf16 %v327
        %v372 = vunpack.c.l.bf16 %v328
        %v373 = vunpack.c.h.bf16 %v328
        %v374 = vunpack.c.l.bf16 %v329
        %v375 = vunpack.c.h.bf16 %v329
        %v376 = vunpack.c.l.bf16 %v330
        %v377 = vunpack.c.h.bf16 %v330
        %v378 = vunpack.c.l.bf16 %v331
        %v379 = vunpack.c.h.bf16 %v331
        %v380 = vunpack.c.l.bf16 %v332
        %v381 = vunpack.c.h.bf16 %v332
        %v382 = vunpack.c.l.bf16 %v333
        %v383 = vunpack.c.h.bf16 %v333
        %v384 = vunpack.c.l.bf16 %v334
        %v385 = vunpack.c.h.bf16 %v334
        %v386 = vunpack.c.l.bf16 %v335
        %v387 = vunpack.c.h.bf16 %v335
        %v388 = vunpack.c.l.bf16 %v336
        %v389 = vunpack.c.h.bf16 %v336
        %v390 = vunpack.c.l.bf16 %v337
        %v391 = vunpack.c.h.bf16 %v337
        %v392 = vunpack.c.l.bf16 %v338
        %v393 = vunpack.c.h.bf16 %v338
        %v394 = vunpack.c.l.bf16 %v339
        %v395 = vunpack.c.h.bf16 %v339
        %v396 = vunpack.c.l.bf16 %v340
        %v397 = vunpack.c.h.bf16 %v340
        %v398 = vunpack.c.l.bf16 %v341
        %v399 = vunpack.c.h.bf16 %v341
        %v400 = vunpack.c.l.bf16 %v342
        %v401 = vunpack.c.h.bf16 %v342
        %v402 = vunpack.c.l.bf16 %v343
        %v403 = vunpack.c.h.bf16 %v343
        %v404 = vunpack.c.l.bf16 %v344
        %v405 = vunpack.c.h.bf16 %v344
        %v406 = vunpack.c.l.bf16 %v345
        %v407 = vunpack.c.h.bf16 %v345
        %v408 = vunpack.c.l.bf16 %v346
        %v409 = vunpack.c.h.bf16 %v346
        %v410 = vunpack.c.l.bf16 %v347
        %v411 = vunpack.c.h.bf16 %v347
        %v412 = vld [vmem:[#allocation5] sm:$0x3]
        %v413 = vld [vmem:[#allocation7] sm:$0x3]
        %v414 = vadd.f32 %v348, %v349
        %415 = vadd.xlane.f32.xlu0 %v414
        %v416 = vpop.xlane.xlu0 %415
        %v417 = vadd.f32 %v350, %v351
        %418 = vadd.xlane.f32.xlu0 %v417
        %v419 = vpop.xlane.xlu0 %418
        %v420 = vadd.f32 %v352, %v353
        %421 = vadd.xlane.f32.xlu0 %v420
        %v422 = vpop.xlane.xlu0 %421
        %v423 = vadd.f32 %v354, %v355
        %424 = vadd.xlane.f32.xlu0 %v423
        %v425 = vpop.xlane.xlu0 %424
        %v426 = vadd.f32 %v356, %v357
        %427 = vadd.xlane.f32.xlu0 %v426
        %v428 = vpop.xlane.xlu0 %427
        %v429 = vadd.f32 %v358, %v359
        %430 = vadd.xlane.f32.xlu0 %v429
        %v431 = vpop.xlane.xlu0 %430
        %v432 = vadd.f32 %v360, %v361
        %433 = vadd.xlane.f32.xlu0 %v432
        %v434 = vpop.xlane.xlu0 %433
        %v435 = vadd.f32 %v362, %v363
        %436 = vadd.xlane.f32.xlu0 %v435
        %v437 = vpop.xlane.xlu0 %436
        %v438 = vadd.f32 %v364, %v365
        %439 = vadd.xlane.f32.xlu0 %v438
        %v440 = vpop.xlane.xlu0 %439
        %v441 = vadd.f32 %v366, %v367
        %442 = vadd.xlane.f32.xlu0 %v441
        %v443 = vpop.xlane.xlu0 %442
        %v444 = vadd.f32 %v368, %v369
        %445 = vadd.xlane.f32.xlu0 %v444
        %v446 = vpop.xlane.xlu0 %445
        %v447 = vadd.f32 %v370, %v371
        %448 = vadd.xlane.f32.xlu0 %v447
        %v449 = vpop.xlane.xlu0 %448
        %v450 = vadd.f32 %v372, %v373
        %451 = vadd.xlane.f32.xlu0 %v450
        %v452 = vpop.xlane.xlu0 %451
        %v453 = vadd.f32 %v374, %v375
        %454 = vadd.xlane.f32.xlu0 %v453
        %v455 = vpop.xlane.xlu0 %454
        %v456 = vadd.f32 %v376, %v377
        %457 = vadd.xlane.f32.xlu0 %v456
        %v458 = vpop.xlane.xlu0 %457
        %v459 = vadd.f32 %v378, %v379
        %460 = vadd.xlane.f32.xlu0 %v459
        %v461 = vpop.xlane.xlu0 %460
        %v462 = vadd.f32 %v380, %v381
        %463 = vadd.xlane.f32.xlu0 %v462
        %v464 = vpop.xlane.xlu0 %463
        %v465 = vadd.f32 %v382, %v383
        %466 = vadd.xlane.f32.xlu0 %v465
        %v467 = vpop.xlane.xlu0 %466
        %v468 = vadd.f32 %v384, %v385
        %469 = vadd.xlane.f32.xlu0 %v468
        %v470 = vpop.xlane.xlu0 %469
        %v471 = vadd.f32 %v386, %v387
        %472 = vadd.xlane.f32.xlu0 %v471
        %v473 = vpop.xlane.xlu0 %472
        %v474 = vadd.f32 %v388, %v389
        %475 = vadd.xlane.f32.xlu0 %v474
        %v476 = vpop.xlane.xlu0 %475
        %v477 = vadd.f32 %v390, %v391
        %478 = vadd.xlane.f32.xlu0 %v477
        %v479 = vpop.xlane.xlu0 %478
        %v480 = vadd.f32 %v392, %v393
        %481 = vadd.xlane.f32.xlu0 %v480
        %v482 = vpop.xlane.xlu0 %481
        %v483 = vadd.f32 %v394, %v395
        %484 = vadd.xlane.f32.xlu0 %v483
        %v485 = vpop.xlane.xlu0 %484
        %v486 = vadd.f32 %v396, %v397
        %487 = vadd.xlane.f32.xlu0 %v486
        %v488 = vpop.xlane.xlu0 %487
        %v489 = vadd.f32 %v398, %v399
        %490 = vadd.xlane.f32.xlu0 %v489
        %v491 = vpop.xlane.xlu0 %490
        %v492 = vadd.f32 %v400, %v401
        %493 = vadd.xlane.f32.xlu0 %v492
        %v494 = vpop.xlane.xlu0 %493
        %v495 = vadd.f32 %v402, %v403
        %496 = vadd.xlane.f32.xlu0 %v495
        %v497 = vpop.xlane.xlu0 %496
        %v498 = vadd.f32 %v404, %v405
        %499 = vadd.xlane.f32.xlu0 %v498
        %v500 = vpop.xlane.xlu0 %499
        %v501 = vadd.f32 %v406, %v407
        %502 = vadd.xlane.f32.xlu0 %v501
        %v503 = vpop.xlane.xlu0 %502
        %v504 = vadd.f32 %v408, %v409
        %505 = vadd.xlane.f32.xlu0 %v504
        %v506 = vpop.xlane.xlu0 %505
        %v507 = vadd.f32 %v410, %v411
        %508 = vadd.xlane.f32.xlu0 %v507
        %v509 = vpop.xlane.xlu0 %508
        %v510 = vrcp.pop 256.0
        %v511 = vmul.f32 %v416, %v510
        %v512 = vmul.f32 %v419, %v510
        %v513 = vmul.f32 %v422, %v510
        %v514 = vmul.f32 %v425, %v510
        %v515 = vmul.f32 %v428, %v510
        %v516 = vmul.f32 %v431, %v510
        %v517 = vmul.f32 %v434, %v510
        %v518 = vmul.f32 %v437, %v510
        %v519 = vmul.f32 %v440, %v510
        %v520 = vmul.f32 %v443, %v510
        %v521 = vmul.f32 %v446, %v510
        %v522 = vmul.f32 %v449, %v510
        %v523 = vmul.f32 %v452, %v510
        %v524 = vmul.f32 %v455, %v510
        %v525 = vmul.f32 %v458, %v510
        %v526 = vmul.f32 %v461, %v510
        %v527 = vmul.f32 %v464, %v510
        %v528 = vmul.f32 %v467, %v510
        %v529 = vmul.f32 %v470, %v510
        %v530 = vmul.f32 %v473, %v510
        %v531 = vmul.f32 %v476, %v510
        %v532 = vmul.f32 %v479, %v510
        %v533 = vmul.f32 %v482, %v510
        %v534 = vmul.f32 %v485, %v510
        %v535 = vmul.f32 %v488, %v510
        %v536 = vmul.f32 %v491, %v510
        %v537 = vmul.f32 %v494, %v510
        %v538 = vmul.f32 %v497, %v510
        %v539 = vmul.f32 %v500, %v510
        %v540 = vmul.f32 %v503, %v510
        %v541 = vmul.f32 %v506, %v510
        %v542 = vmul.f32 %v509, %v510
        %v543 = vsub.f32 %v348, %v511
        %v544 = vsub.f32 %v349, %v511
        %v545 = vsub.f32 %v350, %v512
        %v546 = vsub.f32 %v351, %v512
        %v547 = vsub.f32 %v352, %v513
        %v548 = vsub.f32 %v353, %v513
        %v549 = vsub.f32 %v354, %v514
        %v550 = vsub.f32 %v355, %v514
        %v551 = vsub.f32 %v356, %v515
        %v552 = vsub.f32 %v357, %v515
        %v553 = vsub.f32 %v358, %v516
        %v554 = vsub.f32 %v359, %v516
        %v555 = vsub.f32 %v360, %v517
        %v556 = vsub.f32 %v361, %v517
        %v557 = vsub.f32 %v362, %v518
        %v558 = vsub.f32 %v363, %v518
        %v559 = vsub.f32 %v364, %v519
        %v560 = vsub.f32 %v365, %v519
        %v561 = vsub.f32 %v366, %v520
        %v562 = vsub.f32 %v367, %v520
        %v563 = vsub.f32 %v368, %v521
        %v564 = vsub.f32 %v369, %v521
        %v565 = vsub.f32 %v370, %v522
        %v566 = vsub.f32 %v371, %v522
        %v567 = vsub.f32 %v372, %v523
        %v568 = vsub.f32 %v373, %v523
        %v569 = vsub.f32 %v374, %v524
        %v570 = vsub.f32 %v375, %v524
        %v571 = vsub.f32 %v376, %v525
        %v572 = vsub.f32 %v377, %v525
        %v573 = vsub.f32 %v378, %v526
        %v574 = vsub.f32 %v379, %v526
        %v575 = vsub.f32 %v380, %v527
        %v576 = vsub.f32 %v381, %v527
        %v577 = vsub.f32 %v382, %v528
        %v578 = vsub.f32 %v383, %v528
        %v579 = vsub.f32 %v384, %v529
        %v580 = vsub.f32 %v385, %v529
        %v581 = vsub.f32 %v386, %v530
        %v582 = vsub.f32 %v387, %v530
        %v583 = vsub.f32 %v388, %v531
        %v584 = vsub.f32 %v389, %v531
        %v585 = vsub.f32 %v390, %v532
        %v586 = vsub.f32 %v391, %v532
        %v587 = vsub.f32 %v392, %v533
        %v588 = vsub.f32 %v393, %v533
        %v589 = vsub.f32 %v394, %v534
        %v590 = vsub.f32 %v395, %v534
        %v591 = vsub.f32 %v396, %v535
        %v592 = vsub.f32 %v397, %v535
        %v593 = vsub.f32 %v398, %v536
        %v594 = vsub.f32 %v399, %v536
        %v595 = vsub.f32 %v400, %v537
        %v596 = vsub.f32 %v401, %v537
        %v597 = vsub.f32 %v402, %v538
        %v598 = vsub.f32 %v403, %v538
        %v599 = vsub.f32 %v404, %v539
        %v600 = vsub.f32 %v405, %v539
        %v601 = vsub.f32 %v406, %v540
        %v602 = vsub.f32 %v407, %v540
        %v603 = vsub.f32 %v408, %v541
        %v604 = vsub.f32 %v409, %v541
        %v605 = vsub.f32 %v410, %v542
        %v606 = vsub.f32 %v411, %v542
        %v607 = vmul.f32 %v543, %v543
        %v608 = vmul.f32 %v544, %v544
        %v609 = vmul.f32 %v545, %v545
        %v610 = vmul.f32 %v546, %v546
        %v611 = vmul.f32 %v547, %v547
        %v612 = vmul.f32 %v548, %v548
        %v613 = vmul.f32 %v549, %v549
        %v614 = vmul.f32 %v550, %v550
        %v615 = vmul.f32 %v551, %v551
        %v616 = vmul.f32 %v552, %v552
        %v617 = vmul.f32 %v553, %v553
        %v618 = vmul.f32 %v554, %v554
        %v619 = vmul.f32 %v555, %v555
        %v620 = vmul.f32 %v556, %v556
        %v621 = vmul.f32 %v557, %v557
        %v622 = vmul.f32 %v558, %v558
        %v623 = vmul.f32 %v559, %v559
        %v624 = vmul.f32 %v560, %v560
        %v625 = vmul.f32 %v561, %v561
        %v626 = vmul.f32 %v562, %v562
        %v627 = vmul.f32 %v563, %v563
        %v628 = vmul.f32 %v564, %v564
        %v629 = vmul.f32 %v565, %v565
        %v630 = vmul.f32 %v566, %v566
        %v631 = vmul.f32 %v567, %v567
        %v632 = vmul.f32 %v568, %v568
        %v633 = vmul.f32 %v569, %v569
        %v634 = vmul.f32 %v570, %v570
        %v635 = vmul.f32 %v571, %v571
        %v636 = vmul.f32 %v572, %v572
        %v637 = vmul.f32 %v573, %v573
        %v638 = vmul.f32 %v574, %v574
        %v639 = vmul.f32 %v575, %v575
        %v640 = vmul.f32 %v576, %v576
        %v641 = vmul.f32 %v577, %v577
        %v642 = vmul.f32 %v578, %v578
        %v643 = vmul.f32 %v579, %v579
        %v644 = vmul.f32 %v580, %v580
        %v645 = vmul.f32 %v581, %v581
        %v646 = vmul.f32 %v582, %v582
        %v647 = vmul.f32 %v583, %v583
        %v648 = vmul.f32 %v584, %v584
        %v649 = vmul.f32 %v585, %v585
        %v650 = vmul.f32 %v586, %v586
        %v651 = vmul.f32 %v587, %v587
        %v652 = vmul.f32 %v588, %v588
        %v653 = vmul.f32 %v589, %v589
        %v654 = vmul.f32 %v590, %v590
        %v655 = vmul.f32 %v591, %v591
        %v656 = vmul.f32 %v592, %v592
        %v657 = vmul.f32 %v593, %v593
        %v658 = vmul.f32 %v594, %v594
        %v659 = vmul.f32 %v595, %v595
        %v660 = vmul.f32 %v596, %v596
        %v661 = vmul.f32 %v597, %v597
        %v662 = vmul.f32 %v598, %v598
        %v663 = vmul.f32 %v599, %v599
        %v664 = vmul.f32 %v600, %v600
        %v665 = vmul.f32 %v601, %v601
        %v666 = vmul.f32 %v602, %v602
        %v667 = vmul.f32 %v603, %v603
        %v668 = vmul.f32 %v604, %v604
        %v669 = vmul.f32 %v605, %v605
        %v670 = vmul.f32 %v606, %v606
        %v671 = vadd.f32 %v607, %v608
        %672 = vadd.xlane.f32.xlu0 %v671
        %v673 = vpop.xlane.xlu0 %672
        %v674 = vadd.f32 %v609, %v610
        %675 = vadd.xlane.f32.xlu0 %v674
        %v676 = vpop.xlane.xlu0 %675
        %v677 = vadd.f32 %v611, %v612
        %678 = vadd.xlane.f32.xlu0 %v677
        %v679 = vpop.xlane.xlu0 %678
        %v680 = vadd.f32 %v613, %v614
        %681 = vadd.xlane.f32.xlu0 %v680
        %v682 = vpop.xlane.xlu0 %681
        %v683 = vadd.f32 %v615, %v616
        %684 = vadd.xlane.f32.xlu0 %v683
        %v685 = vpop.xlane.xlu0 %684
        %v686 = vadd.f32 %v617, %v618
        %687 = vadd.xlane.f32.xlu0 %v686
        %v688 = vpop.xlane.xlu0 %687
        %v689 = vadd.f32 %v619, %v620
        %690 = vadd.xlane.f32.xlu0 %v689
        %v691 = vpop.xlane.xlu0 %690
        %v692 = vadd.f32 %v621, %v622
        %693 = vadd.xlane.f32.xlu0 %v692
        %v694 = vpop.xlane.xlu0 %693
        %v695 = vadd.f32 %v623, %v624
        %696 = vadd.xlane.f32.xlu0 %v695
        %v697 = vpop.xlane.xlu0 %696
        %v698 = vadd.f32 %v625, %v626
        %699 = vadd.xlane.f32.xlu0 %v698
        %v700 = vpop.xlane.xlu0 %699
        %v701 = vadd.f32 %v627, %v628
        %702 = vadd.xlane.f32.xlu0 %v701
        %v703 = vpop.xlane.xlu0 %702
        %v704 = vadd.f32 %v629, %v630
        %705 = vadd.xlane.f32.xlu0 %v704
        %v706 = vpop.xlane.xlu0 %705
        %v707 = vadd.f32 %v631, %v632
        %708 = vadd.xlane.f32.xlu0 %v707
        %v709 = vpop.xlane.xlu0 %708
        %v710 = vadd.f32 %v633, %v634
        %711 = vadd.xlane.f32.xlu0 %v710
        %v712 = vpop.xlane.xlu0 %711
        %v713 = vadd.f32 %v635, %v636
        %714 = vadd.xlane.f32.xlu0 %v713
        %v715 = vpop.xlane.xlu0 %714
        %v716 = vadd.f32 %v637, %v638
        %717 = vadd.xlane.f32.xlu0 %v716
        %v718 = vpop.xlane.xlu0 %717
        %v719 = vadd.f32 %v639, %v640
        %720 = vadd.xlane.f32.xlu0 %v719
        %v721 = vpop.xlane.xlu0 %720
        %v722 = vadd.f32 %v641, %v642
        %723 = vadd.xlane.f32.xlu0 %v722
        %v724 = vpop.xlane.xlu0 %723
        %v725 = vadd.f32 %v643, %v644
        %726 = vadd.xlane.f32.xlu0 %v725
        %v727 = vpop.xlane.xlu0 %726
        %v728 = vadd.f32 %v645, %v646
        %729 = vadd.xlane.f32.xlu0 %v728
        %v730 = vpop.xlane.xlu0 %729
        %v731 = vadd.f32 %v647, %v648
        %732 = vadd.xlane.f32.xlu0 %v731
        %v733 = vpop.xlane.xlu0 %732
        %v734 = vadd.f32 %v649, %v650
        %735 = vadd.xlane.f32.xlu0 %v734
        %v736 = vpop.xlane.xlu0 %735
        %v737 = vadd.f32 %v651, %v652
        %738 = vadd.xlane.f32.xlu0 %v737
        %v739 = vpop.xlane.xlu0 %738
        %v740 = vadd.f32 %v653, %v654
        %741 = vadd.xlane.f32.xlu0 %v740
        %v742 = vpop.xlane.xlu0 %741
        %v743 = vadd.f32 %v655, %v656
        %744 = vadd.xlane.f32.xlu0 %v743
        %v745 = vpop.xlane.xlu0 %744
        %v746 = vadd.f32 %v657, %v658
        %747 = vadd.xlane.f32.xlu0 %v746
        %v748 = vpop.xlane.xlu0 %747
        %v749 = vadd.f32 %v659, %v660
        %750 = vadd.xlane.f32.xlu0 %v749
        %v751 = vpop.xlane.xlu0 %750
        %v752 = vadd.f32 %v661, %v662
        %753 = vadd.xlane.f32.xlu0 %v752
        %v754 = vpop.xlane.xlu0 %753
        %v755 = vadd.f32 %v663, %v664
        %756 = vadd.xlane.f32.xlu0 %v755
        %v757 = vpop.xlane.xlu0 %756
        %v758 = vadd.f32 %v665, %v666
        %759 = vadd.xlane.f32.xlu0 %v758
        %v760 = vpop.xlane.xlu0 %759
        %v761 = vadd.f32 %v667, %v668
        %762 = vadd.xlane.f32.xlu0 %v761
        %v763 = vpop.xlane.xlu0 %762
        %v764 = vadd.f32 %v669, %v670
        %765 = vadd.xlane.f32.xlu0 %v764
        %v766 = vpop.xlane.xlu0 %765
        %v767 = vmul.f32 %v673, %v510
        %v768 = vmul.f32 %v676, %v510
        %v769 = vmul.f32 %v679, %v510
        %v770 = vmul.f32 %v682, %v510
        %v771 = vmul.f32 %v685, %v510
        %v772 = vmul.f32 %v688, %v510
        %v773 = vmul.f32 %v691, %v510
        %v774 = vmul.f32 %v694, %v510
        %v775 = vmul.f32 %v697, %v510
        %v776 = vmul.f32 %v700, %v510
        %v777 = vmul.f32 %v703, %v510
        %v778 = vmul.f32 %v706, %v510
        %v779 = vmul.f32 %v709, %v510
        %v780 = vmul.f32 %v712, %v510
        %v781 = vmul.f32 %v715, %v510
        %v782 = vmul.f32 %v718, %v510
        %v783 = vmul.f32 %v721, %v510
        %v784 = vmul.f32 %v724, %v510
        %v785 = vmul.f32 %v727, %v510
        %v786 = vmul.f32 %v730, %v510
        %v787 = vmul.f32 %v733, %v510
        %v788 = vmul.f32 %v736, %v510
        %v789 = vmul.f32 %v739, %v510
        %v790 = vmul.f32 %v742, %v510
        %v791 = vmul.f32 %v745, %v510
        %v792 = vmul.f32 %v748, %v510
        %v793 = vmul.f32 %v751, %v510
        %v794 = vmul.f32 %v754, %v510
        %v795 = vmul.f32 %v757, %v510
        %v796 = vmul.f32 %v760, %v510
        %v797 = vmul.f32 %v763, %v510
        %v798 = vmul.f32 %v766, %v510
        %v799 = vadd.f32 %v767, 1e-06
        %v800 = vadd.f32 %v768, 1e-06
        %v801 = vadd.f32 %v769, 1e-06
        %v802 = vadd.f32 %v770, 1e-06
        %v803 = vadd.f32 %v771, 1e-06
        %v804 = vadd.f32 %v772, 1e-06
        %v805 = vadd.f32 %v773, 1e-06
        %v806 = vadd.f32 %v774, 1e-06
        %v807 = vadd.f32 %v775, 1e-06
        %v808 = vadd.f32 %v776, 1e-06
        %v809 = vadd.f32 %v777, 1e-06
        %v810 = vadd.f32 %v778, 1e-06
        %v811 = vadd.f32 %v779, 1e-06
        %v812 = vadd.f32 %v780, 1e-06
        %v813 = vadd.f32 %v781, 1e-06
        %v814 = vadd.f32 %v782, 1e-06
        %v815 = vadd.f32 %v783, 1e-06
        %v816 = vadd.f32 %v784, 1e-06
        %v817 = vadd.f32 %v785, 1e-06
        %v818 = vadd.f32 %v786, 1e-06
        %v819 = vadd.f32 %v787, 1e-06
        %v820 = vadd.f32 %v788, 1e-06
        %v821 = vadd.f32 %v789, 1e-06
        %v822 = vadd.f32 %v790, 1e-06
        %v823 = vadd.f32 %v791, 1e-06
        %v824 = vadd.f32 %v792, 1e-06
        %v825 = vadd.f32 %v793, 1e-06
        %v826 = vadd.f32 %v794, 1e-06
        %v827 = vadd.f32 %v795, 1e-06
        %v828 = vadd.f32 %v796, 1e-06
        %v829 = vadd.f32 %v797, 1e-06
        %v830 = vadd.f32 %v798, 1e-06
        %v831 = vrsqrt.pop %v799
        %v832 = vrsqrt.pop %v800
        %v833 = vrsqrt.pop %v801
        %v834 = vrsqrt.pop %v802
        %v835 = vrsqrt.pop %v803
        %v836 = vrsqrt.pop %v804
        %v837 = vrsqrt.pop %v805
        %v838 = vrsqrt.pop %v806
        %v839 = vrsqrt.pop %v807
        %v840 = vrsqrt.pop %v808
        %v841 = vrsqrt.pop %v809
        %v842 = vrsqrt.pop %v810
        %v843 = vrsqrt.pop %v811
        %v844 = vrsqrt.pop %v812
        %v845 = vrsqrt.pop %v813
        %v846 = vrsqrt.pop %v814
        %v847 = vrsqrt.pop %v815
        %v848 = vrsqrt.pop %v816
        %v849 = vrsqrt.pop %v817
        %v850 = vrsqrt.pop %v818
        %v851 = vrsqrt.pop %v819
        %v852 = vrsqrt.pop %v820
        %v853 = vrsqrt.pop %v821
        %v854 = vrsqrt.pop %v822
        %v855 = vrsqrt.pop %v823
        %v856 = vrsqrt.pop %v824
        %v857 = vrsqrt.pop %v825
        %v858 = vrsqrt.pop %v826
        %v859 = vrsqrt.pop %v827
        %v860 = vrsqrt.pop %v828
        %v861 = vrsqrt.pop %v829
        %v862 = vrsqrt.pop %v830
        %v863 = vmul.f32 %v543, %v831
        %v864 = vmul.f32 %v544, %v831
        %v865 = vmul.f32 %v545, %v832
        %v866 = vmul.f32 %v546, %v832
        %v867 = vmul.f32 %v547, %v833
        %v868 = vmul.f32 %v548, %v833
        %v869 = vmul.f32 %v549, %v834
        %v870 = vmul.f32 %v550, %v834
        %v871 = vmul.f32 %v551, %v835
        %v872 = vmul.f32 %v552, %v835
        %v873 = vmul.f32 %v553, %v836
        %v874 = vmul.f32 %v554, %v836
        %v875 = vmul.f32 %v555, %v837
        %v876 = vmul.f32 %v556, %v837
        %v877 = vmul.f32 %v557, %v838
        %v878 = vmul.f32 %v558, %v838
        %v879 = vmul.f32 %v559, %v839
        %v880 = vmul.f32 %v560, %v839
        %v881 = vmul.f32 %v561, %v840
        %v882 = vmul.f32 %v562, %v840
        %v883 = vmul.f32 %v563, %v841
        %v884 = vmul.f32 %v564, %v841
        %v885 = vmul.f32 %v565, %v842
        %v886 = vmul.f32 %v566, %v842
        %v887 = vmul.f32 %v567, %v843
        %v888 = vmul.f32 %v568, %v843
        %v889 = vmul.f32 %v569, %v844
        %v890 = vmul.f32 %v570, %v844
        %v891 = vmul.f32 %v571, %v845
        %v892 = vmul.f32 %v572, %v845
        %v893 = vmul.f32 %v573, %v846
        %v894 = vmul.f32 %v574, %v846
        %v895 = vmul.f32 %v575, %v847
        %v896 = vmul.f32 %v576, %v847
        %v897 = vmul.f32 %v577, %v848
        %v898 = vmul.f32 %v578, %v848
        %v899 = vmul.f32 %v579, %v849
        %v900 = vmul.f32 %v580, %v849
        %v901 = vmul.f32 %v581, %v850
        %v902 = vmul.f32 %v582, %v850
        %v903 = vmul.f32 %v583, %v851
        %v904 = vmul.f32 %v584, %v851
        %v905 = vmul.f32 %v585, %v852
        %v906 = vmul.f32 %v586, %v852
        %v907 = vmul.f32 %v587, %v853
        %v908 = vmul.f32 %v588, %v853
        %v909 = vmul.f32 %v589, %v854
        %v910 = vmul.f32 %v590, %v854
        %v911 = vmul.f32 %v591, %v855
        %v912 = vmul.f32 %v592, %v855
        %v913 = vmul.f32 %v593, %v856
        %v914 = vmul.f32 %v594, %v856
        %v915 = vmul.f32 %v595, %v857
        %v916 = vmul.f32 %v596, %v857
        %v917 = vmul.f32 %v597, %v858
        %v918 = vmul.f32 %v598, %v858
        %v919 = vmul.f32 %v599, %v859
        %v920 = vmul.f32 %v600, %v859
        %v921 = vmul.f32 %v601, %v860
        %v922 = vmul.f32 %v602, %v860
        %v923 = vmul.f32 %v603, %v861
        %v924 = vmul.f32 %v604, %v861
        %v925 = vmul.f32 %v605, %v862
        %v926 = vmul.f32 %v606, %v862
        %v928 = vlaneseq
        %v929 = vshrl.u32 %v928, 7
        %v930 = vsub.s32 0, %v929
        %v931 = vrot.slane %v412, %v930
        %v932 = vlaneseq
        %v933 = vshrl.u32 %v932, 7
        %v934 = vsub.s32 1, %v933
        %v935 = vrot.slane %v412, %v934
        %v938 = vmul.f32 %v863, %v931
        %v939 = vmul.f32 %v864, %v935
        %v940 = vmul.f32 %v865, %v931
        %v941 = vmul.f32 %v866, %v935
        %v942 = vmul.f32 %v867, %v931
        %v943 = vmul.f32 %v868, %v935
        %v944 = vmul.f32 %v869, %v931
        %v945 = vmul.f32 %v870, %v935
        %v946 = vmul.f32 %v871, %v931
        %v947 = vmul.f32 %v872, %v935
        %v948 = vmul.f32 %v873, %v931
        %v949 = vmul.f32 %v874, %v935
        %v950 = vmul.f32 %v875, %v931
        %v951 = vmul.f32 %v876, %v935
        %v952 = vmul.f32 %v877, %v931
        %v953 = vmul.f32 %v878, %v935
        %v954 = vmul.f32 %v879, %v931
        %v955 = vmul.f32 %v880, %v935
        %v956 = vmul.f32 %v881, %v931
        %v957 = vmul.f32 %v882, %v935
        %v958 = vmul.f32 %v883, %v931
        %v959 = vmul.f32 %v884, %v935
        %v960 = vmul.f32 %v885, %v931
        %v961 = vmul.f32 %v886, %v935
        %v962 = vmul.f32 %v887, %v931
        %v963 = vmul.f32 %v888, %v935
        %v964 = vmul.f32 %v889, %v931
        %v965 = vmul.f32 %v890, %v935
        %v966 = vmul.f32 %v891, %v931
        %v967 = vmul.f32 %v892, %v935
        %v968 = vmul.f32 %v893, %v931
        %v969 = vmul.f32 %v894, %v935
        %v970 = vmul.f32 %v895, %v931
        %v971 = vmul.f32 %v896, %v935
        %v972 = vmul.f32 %v897, %v931
        %v973 = vmul.f32 %v898, %v935
        %v974 = vmul.f32 %v899, %v931
        %v975 = vmul.f32 %v900, %v935
        %v976 = vmul.f32 %v901, %v931
        %v977 = vmul.f32 %v902, %v935
        %v978 = vmul.f32 %v903, %v931
        %v979 = vmul.f32 %v904, %v935
        %v980 = vmul.f32 %v905, %v931
        %v981 = vmul.f32 %v906, %v935
        %v982 = vmul.f32 %v907, %v931
        %v983 = vmul.f32 %v908, %v935
        %v984 = vmul.f32 %v909, %v931
        %v985 = vmul.f32 %v910, %v935
        %v986 = vmul.f32 %v911, %v931
        %v987 = vmul.f32 %v912, %v935
        %v988 = vmul.f32 %v913, %v931
        %v989 = vmul.f32 %v914, %v935
        %v990 = vmul.f32 %v915, %v931
        %v991 = vmul.f32 %v916, %v935
        %v992 = vmul.f32 %v917, %v931
        %v993 = vmul.f32 %v918, %v935
        %v994 = vmul.f32 %v919, %v931
        %v995 = vmul.f32 %v920, %v935
        %v996 = vmul.f32 %v921, %v931
        %v997 = vmul.f32 %v922, %v935
        %v998 = vmul.f32 %v923, %v931
        %v999 = vmul.f32 %v924, %v935
        %v1000 = vmul.f32 %v925, %v931
        %v1001 = vmul.f32 %v926, %v935
        %v1003 = vlaneseq
        %v1004 = vshrl.u32 %v1003, 7
        %v1005 = vsub.s32 0, %v1004
        %v1006 = vrot.slane %v413, %v1005
        %v1007 = vlaneseq
        %v1008 = vshrl.u32 %v1007, 7
        %v1009 = vsub.s32 1, %v1008
        %v1010 = vrot.slane %v413, %v1009
        %v1013 = vadd.f32 %v938, %v1006
        %v1014 = vadd.f32 %v939, %v1010
        %v1015 = vadd.f32 %v940, %v1006
        %v1016 = vadd.f32 %v941, %v1010
        %v1017 = vadd.f32 %v942, %v1006
        %v1018 = vadd.f32 %v943, %v1010
        %v1019 = vadd.f32 %v944, %v1006
        %v1020 = vadd.f32 %v945, %v1010
        %v1021 = vadd.f32 %v946, %v1006
        %v1022 = vadd.f32 %v947, %v1010
        %v1023 = vadd.f32 %v948, %v1006
        %v1024 = vadd.f32 %v949, %v1010
        %v1025 = vadd.f32 %v950, %v1006
        %v1026 = vadd.f32 %v951, %v1010
        %v1027 = vadd.f32 %v952, %v1006
        %v1028 = vadd.f32 %v953, %v1010
        %v1029 = vadd.f32 %v954, %v1006
        %v1030 = vadd.f32 %v955, %v1010
        %v1031 = vadd.f32 %v956, %v1006
        %v1032 = vadd.f32 %v957, %v1010
        %v1033 = vadd.f32 %v958, %v1006
        %v1034 = vadd.f32 %v959, %v1010
        %v1035 = vadd.f32 %v960, %v1006
        %v1036 = vadd.f32 %v961, %v1010
        %v1037 = vadd.f32 %v962, %v1006
        %v1038 = vadd.f32 %v963, %v1010
        %v1039 = vadd.f32 %v964, %v1006
        %v1040 = vadd.f32 %v965, %v1010
        %v1041 = vadd.f32 %v966, %v1006
        %v1042 = vadd.f32 %v967, %v1010
        %v1043 = vadd.f32 %v968, %v1006
        %v1044 = vadd.f32 %v969, %v1010
        %v1045 = vadd.f32 %v970, %v1006
        %v1046 = vadd.f32 %v971, %v1010
        %v1047 = vadd.f32 %v972, %v1006
        %v1048 = vadd.f32 %v973, %v1010
        %v1049 = vadd.f32 %v974, %v1006
        %v1050 = vadd.f32 %v975, %v1010
        %v1051 = vadd.f32 %v976, %v1006
        %v1052 = vadd.f32 %v977, %v1010
        %v1053 = vadd.f32 %v978, %v1006
        %v1054 = vadd.f32 %v979, %v1010
        %v1055 = vadd.f32 %v980, %v1006
        %v1056 = vadd.f32 %v981, %v1010
        %v1057 = vadd.f32 %v982, %v1006
        %v1058 = vadd.f32 %v983, %v1010
        %v1059 = vadd.f32 %v984, %v1006
        %v1060 = vadd.f32 %v985, %v1010
        %v1061 = vadd.f32 %v986, %v1006
        %v1062 = vadd.f32 %v987, %v1010
        %v1063 = vadd.f32 %v988, %v1006
        %v1064 = vadd.f32 %v989, %v1010
        %v1065 = vadd.f32 %v990, %v1006
        %v1066 = vadd.f32 %v991, %v1010
        %v1067 = vadd.f32 %v992, %v1006
        %v1068 = vadd.f32 %v993, %v1010
        %v1069 = vadd.f32 %v994, %v1006
        %v1070 = vadd.f32 %v995, %v1010
        %v1071 = vadd.f32 %v996, %v1006
        %v1072 = vadd.f32 %v997, %v1010
        %v1073 = vadd.f32 %v998, %v1006
        %v1074 = vadd.f32 %v999, %v1010
        %v1075 = vadd.f32 %v1000, %v1006
        %v1076 = vadd.f32 %v1001, %v1010
        %v1077 = vpack.c.bf16 %v1015, %v1013
        %v1078 = vpack.c.bf16 %v1016, %v1014
        %v1079 = vpack.c.bf16 %v1019, %v1017
        %v1080 = vpack.c.bf16 %v1020, %v1018
        %v1081 = vpack.c.bf16 %v1023, %v1021
        %v1082 = vpack.c.bf16 %v1024, %v1022
        %v1083 = vpack.c.bf16 %v1027, %v1025
        %v1084 = vpack.c.bf16 %v1028, %v1026
        %v1085 = vpack.c.bf16 %v1031, %v1029
        %v1086 = vpack.c.bf16 %v1032, %v1030
        %v1087 = vpack.c.bf16 %v1035, %v1033
        %v1088 = vpack.c.bf16 %v1036, %v1034
        %v1089 = vpack.c.bf16 %v1039, %v1037
        %v1090 = vpack.c.bf16 %v1040, %v1038
        %v1091 = vpack.c.bf16 %v1043, %v1041
        %v1092 = vpack.c.bf16 %v1044, %v1042
        %v1093 = vpack.c.bf16 %v1047, %v1045
        %v1094 = vpack.c.bf16 %v1048, %v1046
        %v1095 = vpack.c.bf16 %v1051, %v1049
        %v1096 = vpack.c.bf16 %v1052, %v1050
        %v1097 = vpack.c.bf16 %v1055, %v1053
        %v1098 = vpack.c.bf16 %v1056, %v1054
        %v1099 = vpack.c.bf16 %v1059, %v1057
        %v1100 = vpack.c.bf16 %v1060, %v1058
        %v1101 = vpack.c.bf16 %v1063, %v1061
        %v1102 = vpack.c.bf16 %v1064, %v1062
        %v1103 = vpack.c.bf16 %v1067, %v1065
        %v1104 = vpack.c.bf16 %v1068, %v1066
        %v1105 = vpack.c.bf16 %v1071, %v1069
        %v1106 = vpack.c.bf16 %v1072, %v1070
        %v1107 = vpack.c.bf16 %v1075, %v1073
        %v1108 = vpack.c.bf16 %v1076, %v1074
        %v1109 = vld [vmem:[#allocation8] sm:$0xff]
        %v1110 = vld [vmem:[#allocation8 + $0x8] sm:$0xff]
        %v1111 = vld [vmem:[#allocation8 + $0x10] sm:$0xff]
        %v1112 = vld [vmem:[#allocation8 + $0x18] sm:$0xff]
        %v1113 = vld [vmem:[#allocation8 + $0x20] sm:$0xff]
        %v1114 = vld [vmem:[#allocation8 + $0x28] sm:$0xff]
        %v1115 = vld [vmem:[#allocation8 + $0x30] sm:$0xff]
        %v1116 = vld [vmem:[#allocation8 + $0x38] sm:$0xff]
        %v1117 = vld [vmem:[#allocation8 + $0x40] sm:$0xff]
        %v1118 = vld [vmem:[#allocation8 + $0x48] sm:$0xff]
        %v1119 = vld [vmem:[#allocation8 + $0x50] sm:$0xff]
        %v1120 = vld [vmem:[#allocation8 + $0x58] sm:$0xff]
        %v1121 = vld [vmem:[#allocation8 + $0x60] sm:$0xff]
        %v1122 = vld [vmem:[#allocation8 + $0x68] sm:$0xff]
        %v1123 = vld [vmem:[#allocation8 + $0x70] sm:$0xff]
        %v1124 = vld [vmem:[#allocation8 + $0x78] sm:$0xff]
        %v1125 = vld [vmem:[#allocation8 + $0x80] sm:$0xff]
        %v1126 = vld [vmem:[#allocation8 + $0x88] sm:$0xff]
        %v1127 = vld [vmem:[#allocation8 + $0x90] sm:$0xff]
        %v1128 = vld [vmem:[#allocation8 + $0x98] sm:$0xff]
        %v1129 = vld [vmem:[#allocation8 + $0xa0] sm:$0xff]
        %v1130 = vld [vmem:[#allocation8 + $0xa8] sm:$0xff]
        %v1131 = vld [vmem:[#allocation8 + $0xb0] sm:$0xff]
        %v1132 = vld [vmem:[#allocation8 + $0xb8] sm:$0xff]
        %v1133 = vld [vmem:[#allocation8 + $0xc0] sm:$0xff]
        %v1134 = vld [vmem:[#allocation8 + $0xc8] sm:$0xff]
        %v1135 = vld [vmem:[#allocation8 + $0xd0] sm:$0xff]
        %v1136 = vld [vmem:[#allocation8 + $0xd8] sm:$0xff]
        %v1137 = vld [vmem:[#allocation8 + $0xe0] sm:$0xff]
        %v1138 = vld [vmem:[#allocation8 + $0xe8] sm:$0xff]
        %v1139 = vld [vmem:[#allocation8 + $0xf0] sm:$0xff]
        %v1140 = vld [vmem:[#allocation8 + $0xf8] sm:$0xff]
        %v1141 = vld [vmem:[#allocation8 + $0x100] sm:$0xff]
        %v1142 = vld [vmem:[#allocation8 + $0x108] sm:$0xff]
        %v1143 = vld [vmem:[#allocation8 + $0x110] sm:$0xff]
        %v1144 = vld [vmem:[#allocation8 + $0x118] sm:$0xff]
        %v1145 = vld [vmem:[#allocation8 + $0x120] sm:$0xff]
        %v1146 = vld [vmem:[#allocation8 + $0x128] sm:$0xff]
        %v1147 = vld [vmem:[#allocation8 + $0x130] sm:$0xff]
        %v1148 = vld [vmem:[#allocation8 + $0x138] sm:$0xff]
        %v1149 = vld [vmem:[#allocation8 + $0x140] sm:$0xff]
        %v1150 = vld [vmem:[#allocation8 + $0x148] sm:$0xff]
        %v1151 = vld [vmem:[#allocation8 + $0x150] sm:$0xff]
        %v1152 = vld [vmem:[#allocation8 + $0x158] sm:$0xff]
        %v1153 = vld [vmem:[#allocation8 + $0x160] sm:$0xff]
        %v1154 = vld [vmem:[#allocation8 + $0x168] sm:$0xff]
        %v1155 = vld [vmem:[#allocation8 + $0x170] sm:$0xff]
        %v1156 = vld [vmem:[#allocation8 + $0x178] sm:$0xff]
        %v1157 = vld [vmem:[#allocation8 + $0x180] sm:$0xff]
        %v1158 = vld [vmem:[#allocation8 + $0x188] sm:$0xff]
        %v1159 = vld [vmem:[#allocation8 + $0x190] sm:$0xff]
        %v1160 = vld [vmem:[#allocation8 + $0x198] sm:$0xff]
        %v1161 = vld [vmem:[#allocation8 + $0x1a0] sm:$0xff]
        %v1162 = vld [vmem:[#allocation8 + $0x1a8] sm:$0xff]
        %v1163 = vld [vmem:[#allocation8 + $0x1b0] sm:$0xff]
        %v1164 = vld [vmem:[#allocation8 + $0x1b8] sm:$0xff]
        %v1165 = vld [vmem:[#allocation8 + $0x1c0] sm:$0xff]
        %v1166 = vld [vmem:[#allocation8 + $0x1c8] sm:$0xff]
        %v1167 = vld [vmem:[#allocation8 + $0x1d0] sm:$0xff]
        %v1168 = vld [vmem:[#allocation8 + $0x1d8] sm:$0xff]
        %v1169 = vld [vmem:[#allocation8 + $0x1e0] sm:$0xff]
        %v1170 = vld [vmem:[#allocation8 + $0x1e8] sm:$0xff]
        %v1171 = vld [vmem:[#allocation8 + $0x1f0] sm:$0xff]
        %v1172 = vld [vmem:[#allocation8 + $0x1f8] sm:$0xff]
        %v1173 = vld [vmem:[#allocation8 + $0x200] sm:$0xff]
        %v1174 = vld [vmem:[#allocation8 + $0x208] sm:$0xff]
        %v1175 = vld [vmem:[#allocation8 + $0x210] sm:$0xff]
        %v1176 = vld [vmem:[#allocation8 + $0x218] sm:$0xff]
        %v1177 = vld [vmem:[#allocation8 + $0x220] sm:$0xff]
        %v1178 = vld [vmem:[#allocation8 + $0x228] sm:$0xff]
        %v1179 = vld [vmem:[#allocation8 + $0x230] sm:$0xff]
        %v1180 = vld [vmem:[#allocation8 + $0x238] sm:$0xff]
        %v1181 = vld [vmem:[#allocation8 + $0x240] sm:$0xff]
        %v1182 = vld [vmem:[#allocation8 + $0x248] sm:$0xff]
        %v1183 = vld [vmem:[#allocation8 + $0x250] sm:$0xff]
        %v1184 = vld [vmem:[#allocation8 + $0x258] sm:$0xff]
        %v1185 = vld [vmem:[#allocation8 + $0x260] sm:$0xff]
        %v1186 = vld [vmem:[#allocation8 + $0x268] sm:$0xff]
        %v1187 = vld [vmem:[#allocation8 + $0x270] sm:$0xff]
        %v1188 = vld [vmem:[#allocation8 + $0x278] sm:$0xff]
        %v1189 = vld [vmem:[#allocation8 + $0x280] sm:$0xff]
        %v1190 = vld [vmem:[#allocation8 + $0x288] sm:$0xff]
        %v1191 = vld [vmem:[#allocation8 + $0x290] sm:$0xff]
        %v1192 = vld [vmem:[#allocation8 + $0x298] sm:$0xff]
        %v1193 = vld [vmem:[#allocation8 + $0x2a0] sm:$0xff]
        %v1194 = vld [vmem:[#allocation8 + $0x2a8] sm:$0xff]
        %v1195 = vld [vmem:[#allocation8 + $0x2b0] sm:$0xff]
        %v1196 = vld [vmem:[#allocation8 + $0x2b8] sm:$0xff]
        %v1197 = vld [vmem:[#allocation8 + $0x2c0] sm:$0xff]
        %v1198 = vld [vmem:[#allocation8 + $0x2c8] sm:$0xff]
        %v1199 = vld [vmem:[#allocation8 + $0x2d0] sm:$0xff]
        %v1200 = vld [vmem:[#allocation8 + $0x2d8] sm:$0xff]
        %v1201 = vld [vmem:[#allocation8 + $0x2e0] sm:$0xff]
        %v1202 = vld [vmem:[#allocation8 + $0x2e8] sm:$0xff]
        %v1203 = vld [vmem:[#allocation8 + $0x2f0] sm:$0xff]
        %v1204 = vld [vmem:[#allocation8 + $0x2f8] sm:$0xff]
        %v1205 = vld [vmem:[#allocation10] sm:$0x3f]
        %v1207 = vlaneseq
        %v1208 = vshrl.u32 %v1207, 7
        %v1209 = vsub.s32 0, %v1208
        %v1210 = vrot.slane %v1205, %v1209
        %v1211 = vlaneseq
        %v1212 = vshrl.u32 %v1211, 7
        %v1213 = vsub.s32 1, %v1212
        %v1214 = vrot.slane %v1205, %v1213
        %v1215 = vlaneseq
        %v1216 = vshrl.u32 %v1215, 7
        %v1217 = vsub.s32 2, %v1216
        %v1218 = vrot.slane %v1205, %v1217
        %v1219 = vlaneseq
        %v1220 = vshrl.u32 %v1219, 7
        %v1221 = vsub.s32 3, %v1220
        %v1222 = vrot.slane %v1205, %v1221
        %v1223 = vlaneseq
        %v1224 = vshrl.u32 %v1223, 7
        %v1225 = vsub.s32 4, %v1224
        %v1226 = vrot.slane %v1205, %v1225
        %v1227 = vlaneseq
        %v1228 = vshrl.u32 %v1227, 7
        %v1229 = vsub.s32 5, %v1228
        %v1230 = vrot.slane %v1205, %v1229
        %v1333 = vunpack.c.l.b16 %v1109
        %v1334 = vunpack.c.h.b16 %v1109
        %v1335 = vunpack.c.l.b16 %v1110
        %v1336 = vunpack.c.h.b16 %v1110
        %v1337 = vunpack.c.l.b16 %v1111
        %v1338 = vunpack.c.h.b16 %v1111
        %v1339 = vunpack.c.l.b16 %v1112
        %v1340 = vunpack.c.h.b16 %v1112
        %v1341 = vunpack.c.l.b16 %v1113
        %v1342 = vunpack.c.h.b16 %v1113
        %v1343 = vunpack.c.l.b16 %v1114
        %v1344 = vunpack.c.h.b16 %v1114
        %v1345 = vunpack.c.l.b16 %v1115
        %v1346 = vunpack.c.h.b16 %v1115
        %v1347 = vunpack.c.l.b16 %v1116
        %v1348 = vunpack.c.h.b16 %v1116
        %v1349 = vunpack.c.l.b16 %v1117
        %v1350 = vunpack.c.h.b16 %v1117
        %v1351 = vunpack.c.l.b16 %v1118
        %v1352 = vunpack.c.h.b16 %v1118
        %v1353 = vunpack.c.l.b16 %v1119
        %v1354 = vunpack.c.h.b16 %v1119
        %v1355 = vunpack.c.l.b16 %v1120
        %v1356 = vunpack.c.h.b16 %v1120
        %v1357 = vunpack.c.l.b16 %v1121
        %v1358 = vunpack.c.h.b16 %v1121
        %v1359 = vunpack.c.l.b16 %v1122
        %v1360 = vunpack.c.h.b16 %v1122
        %v1361 = vunpack.c.l.b16 %v1123
        %v1362 = vunpack.c.h.b16 %v1123
        %v1363 = vunpack.c.l.b16 %v1124
        %v1364 = vunpack.c.h.b16 %v1124
        %v1365 = vunpack.c.l.b16 %v1125
        %v1366 = vunpack.c.h.b16 %v1125
        %v1367 = vunpack.c.l.b16 %v1126
        %v1368 = vunpack.c.h.b16 %v1126
        %v1369 = vunpack.c.l.b16 %v1127
        %v1370 = vunpack.c.h.b16 %v1127
        %v1371 = vunpack.c.l.b16 %v1128
        %v1372 = vunpack.c.h.b16 %v1128
        %v1373 = vunpack.c.l.b16 %v1129
        %v1374 = vunpack.c.h.b16 %v1129
        %v1375 = vunpack.c.l.b16 %v1130
        %v1376 = vunpack.c.h.b16 %v1130
        %v1377 = vunpack.c.l.b16 %v1131
        %v1378 = vunpack.c.h.b16 %v1131
        %v1379 = vunpack.c.l.b16 %v1132
        %v1380 = vunpack.c.h.b16 %v1132
        %v1381 = vunpack.c.l.b16 %v1133
        %v1382 = vunpack.c.h.b16 %v1133
        %v1383 = vunpack.c.l.b16 %v1134
        %v1384 = vunpack.c.h.b16 %v1134
        %v1385 = vunpack.c.l.b16 %v1135
        %v1386 = vunpack.c.h.b16 %v1135
        %v1387 = vunpack.c.l.b16 %v1136
        %v1388 = vunpack.c.h.b16 %v1136
        %v1389 = vunpack.c.l.b16 %v1137
        %v1390 = vunpack.c.h.b16 %v1137
        %v1391 = vunpack.c.l.b16 %v1138
        %v1392 = vunpack.c.h.b16 %v1138
        %v1393 = vunpack.c.l.b16 %v1139
        %v1394 = vunpack.c.h.b16 %v1139
        %v1395 = vunpack.c.l.b16 %v1140
        %v1396 = vunpack.c.h.b16 %v1140
        %v1397 = vunpack.c.l.b16 %v1141
        %v1398 = vunpack.c.h.b16 %v1141
        %v1399 = vunpack.c.l.b16 %v1142
        %v1400 = vunpack.c.h.b16 %v1142
        %v1401 = vunpack.c.l.b16 %v1143
        %v1402 = vunpack.c.h.b16 %v1143
        %v1403 = vunpack.c.l.b16 %v1144
        %v1404 = vunpack.c.h.b16 %v1144
        %v1405 = vunpack.c.l.b16 %v1145
        %v1406 = vunpack.c.h.b16 %v1145
        %v1407 = vunpack.c.l.b16 %v1146
        %v1408 = vunpack.c.h.b16 %v1146
        %v1409 = vunpack.c.l.b16 %v1147
        %v1410 = vunpack.c.h.b16 %v1147
        %v1411 = vunpack.c.l.b16 %v1148
        %v1412 = vunpack.c.h.b16 %v1148
        %v1413 = vunpack.c.l.b16 %v1149
        %v1414 = vunpack.c.h.b16 %v1149
        %v1415 = vunpack.c.l.b16 %v1150
        %v1416 = vunpack.c.h.b16 %v1150
        %v1417 = vunpack.c.l.b16 %v1151
        %v1418 = vunpack.c.h.b16 %v1151
        %v1419 = vunpack.c.l.b16 %v1152
        %v1420 = vunpack.c.h.b16 %v1152
        %v1421 = vunpack.c.l.b16 %v1153
        %v1422 = vunpack.c.h.b16 %v1153
        %v1423 = vunpack.c.l.b16 %v1154
        %v1424 = vunpack.c.h.b16 %v1154
        %v1425 = vunpack.c.l.b16 %v1155
        %v1426 = vunpack.c.h.b16 %v1155
        %v1427 = vunpack.c.l.b16 %v1156
        %v1428 = vunpack.c.h.b16 %v1156
        %v1429 = vunpack.c.l.b16 %v1157
        %v1430 = vunpack.c.h.b16 %v1157
        %v1431 = vunpack.c.l.b16 %v1158
        %v1432 = vunpack.c.h.b16 %v1158
        %v1433 = vunpack.c.l.b16 %v1159
        %v1434 = vunpack.c.h.b16 %v1159
        %v1435 = vunpack.c.l.b16 %v1160
        %v1436 = vunpack.c.h.b16 %v1160
        %v1437 = vunpack.c.l.b16 %v1161
        %v1438 = vunpack.c.h.b16 %v1161
        %v1439 = vunpack.c.l.b16 %v1162
        %v1440 = vunpack.c.h.b16 %v1162
        %v1441 = vunpack.c.l.b16 %v1163
        %v1442 = vunpack.c.h.b16 %v1163
        %v1443 = vunpack.c.l.b16 %v1164
        %v1444 = vunpack.c.h.b16 %v1164
        %v1445 = vunpack.c.l.b16 %v1165
        %v1446 = vunpack.c.h.b16 %v1165
        %v1447 = vunpack.c.l.b16 %v1166
        %v1448 = vunpack.c.h.b16 %v1166
        %v1449 = vunpack.c.l.b16 %v1167
        %v1450 = vunpack.c.h.b16 %v1167
        %v1451 = vunpack.c.l.b16 %v1168
        %v1452 = vunpack.c.h.b16 %v1168
        %v1453 = vunpack.c.l.b16 %v1169
        %v1454 = vunpack.c.h.b16 %v1169
        %v1455 = vunpack.c.l.b16 %v1170
        %v1456 = vunpack.c.h.b16 %v1170
        %v1457 = vunpack.c.l.b16 %v1171
        %v1458 = vunpack.c.h.b16 %v1171
        %v1459 = vunpack.c.l.b16 %v1172
        %v1460 = vunpack.c.h.b16 %v1172
        %v1461 = vunpack.c.l.b16 %v1173
        %v1462 = vunpack.c.h.b16 %v1173
        %v1463 = vunpack.c.l.b16 %v1174
        %v1464 = vunpack.c.h.b16 %v1174
        %v1465 = vunpack.c.l.b16 %v1175
        %v1466 = vunpack.c.h.b16 %v1175
        %v1467 = vunpack.c.l.b16 %v1176
        %v1468 = vunpack.c.h.b16 %v1176
        %v1469 = vunpack.c.l.b16 %v1177
        %v1470 = vunpack.c.h.b16 %v1177
        %v1471 = vunpack.c.l.b16 %v1178
        %v1472 = vunpack.c.h.b16 %v1178
        %v1473 = vunpack.c.l.b16 %v1179
        %v1474 = vunpack.c.h.b16 %v1179
        %v1475 = vunpack.c.l.b16 %v1180
        %v1476 = vunpack.c.h.b16 %v1180
        %v1477 = vunpack.c.l.b16 %v1181
        %v1478 = vunpack.c.h.b16 %v1181
        %v1479 = vunpack.c.l.b16 %v1182
        %v1480 = vunpack.c.h.b16 %v1182
        %v1481 = vunpack.c.l.b16 %v1183
        %v1482 = vunpack.c.h.b16 %v1183
        %v1483 = vunpack.c.l.b16 %v1184
        %v1484 = vunpack.c.h.b16 %v1184
        %v1485 = vunpack.c.l.b16 %v1185
        %v1486 = vunpack.c.h.b16 %v1185
        %v1487 = vunpack.c.l.b16 %v1186
        %v1488 = vunpack.c.h.b16 %v1186
        %v1489 = vunpack.c.l.b16 %v1187
        %v1490 = vunpack.c.h.b16 %v1187
        %v1491 = vunpack.c.l.b16 %v1188
        %v1492 = vunpack.c.h.b16 %v1188
        %v1493 = vunpack.c.l.b16 %v1189
        %v1494 = vunpack.c.h.b16 %v1189
        %v1495 = vunpack.c.l.b16 %v1190
        %v1496 = vunpack.c.h.b16 %v1190
        %v1497 = vunpack.c.l.b16 %v1191
        %v1498 = vunpack.c.h.b16 %v1191
        %v1499 = vunpack.c.l.b16 %v1192
        %v1500 = vunpack.c.h.b16 %v1192
        %v1501 = vunpack.c.l.b16 %v1193
        %v1502 = vunpack.c.h.b16 %v1193
        %v1503 = vunpack.c.l.b16 %v1194
        %v1504 = vunpack.c.h.b16 %v1194
        %v1505 = vunpack.c.l.b16 %v1195
        %v1506 = vunpack.c.h.b16 %v1195
        %v1507 = vunpack.c.l.b16 %v1196
        %v1508 = vunpack.c.h.b16 %v1196
        %v1509 = vunpack.c.l.b16 %v1197
        %v1510 = vunpack.c.h.b16 %v1197
        %v1511 = vunpack.c.l.b16 %v1198
        %v1512 = vunpack.c.h.b16 %v1198
        %v1513 = vunpack.c.l.b16 %v1199
        %v1514 = vunpack.c.h.b16 %v1199
        %v1515 = vunpack.c.l.b16 %v1200
        %v1516 = vunpack.c.h.b16 %v1200
        %v1517 = vunpack.c.l.b16 %v1201
        %v1518 = vunpack.c.h.b16 %v1201
        %v1519 = vunpack.c.l.b16 %v1202
        %v1520 = vunpack.c.h.b16 %v1202
        %v1521 = vunpack.c.l.b16 %v1203
        %v1522 = vunpack.c.h.b16 %v1203
        %v1523 = vunpack.c.l.b16 %v1204
        %v1524 = vunpack.c.h.b16 %v1204
        %v1525 = vpack.c.b16 %v1339, %v1333
        %v1526 = vpack.c.b16 %v1340, %v1334
        %v1527 = vpack.c.b16 %v1341, %v1335
        %v1528 = vpack.c.b16 %v1342, %v1336
        %v1529 = vpack.c.b16 %v1343, %v1337
        %v1530 = vpack.c.b16 %v1344, %v1338
        %v1531 = vpack.c.b16 %v1351, %v1345
        %v1532 = vpack.c.b16 %v1352, %v1346
        %v1533 = vpack.c.b16 %v1353, %v1347
        %v1534 = vpack.c.b16 %v1354, %v1348
        %v1535 = vpack.c.b16 %v1355, %v1349
        %v1536 = vpack.c.b16 %v1356, %v1350
        %v1537 = vpack.c.b16 %v1363, %v1357
        %v1538 = vpack.c.b16 %v1364, %v1358
        %v1539 = vpack.c.b16 %v1365, %v1359
        %v1540 = vpack.c.b16 %v1366, %v1360
        %v1541 = vpack.c.b16 %v1367, %v1361
        %v1542 = vpack.c.b16 %v1368, %v1362
        %v1543 = vpack.c.b16 %v1375, %v1369
        %v1544 = vpack.c.b16 %v1376, %v1370
        %v1545 = vpack.c.b16 %v1377, %v1371
        %v1546 = vpack.c.b16 %v1378, %v1372
        %v1547 = vpack.c.b16 %v1379, %v1373
        %v1548 = vpack.c.b16 %v1380, %v1374
        %v1549 = vpack.c.b16 %v1387, %v1381
        %v1550 = vpack.c.b16 %v1388, %v1382
        %v1551 = vpack.c.b16 %v1389, %v1383
        %v1552 = vpack.c.b16 %v1390, %v1384
        %v1553 = vpack.c.b16 %v1391, %v1385
        %v1554 = vpack.c.b16 %v1392, %v1386
        %v1555 = vpack.c.b16 %v1399, %v1393
        %v1556 = vpack.c.b16 %v1400, %v1394
        %v1557 = vpack.c.b16 %v1401, %v1395
        %v1558 = vpack.c.b16 %v1402, %v1396
        %v1559 = vpack.c.b16 %v1403, %v1397
        %v1560 = vpack.c.b16 %v1404, %v1398
        %v1561 = vpack.c.b16 %v1411, %v1405
        %v1562 = vpack.c.b16 %v1412, %v1406
        %v1563 = vpack.c.b16 %v1413, %v1407
        %v1564 = vpack.c.b16 %v1414, %v1408
        %v1565 = vpack.c.b16 %v1415, %v1409
        %v1566 = vpack.c.b16 %v1416, %v1410
        %v1567 = vpack.c.b16 %v1423, %v1417
        %v1568 = vpack.c.b16 %v1424, %v1418
        %v1569 = vpack.c.b16 %v1425, %v1419
        %v1570 = vpack.c.b16 %v1426, %v1420
        %v1571 = vpack.c.b16 %v1427, %v1421
        %v1572 = vpack.c.b16 %v1428, %v1422
        %v1573 = vpack.c.b16 %v1435, %v1429
        %v1574 = vpack.c.b16 %v1436, %v1430
        %v1575 = vpack.c.b16 %v1437, %v1431
        %v1576 = vpack.c.b16 %v1438, %v1432
        %v1577 = vpack.c.b16 %v1439, %v1433
        %v1578 = vpack.c.b16 %v1440, %v1434
        %v1579 = vpack.c.b16 %v1447, %v1441
        %v1580 = vpack.c.b16 %v1448, %v1442
        %v1581 = vpack.c.b16 %v1449, %v1443
        %v1582 = vpack.c.b16 %v1450, %v1444
        %v1583 = vpack.c.b16 %v1451, %v1445
        %v1584 = vpack.c.b16 %v1452, %v1446
        %v1585 = vpack.c.b16 %v1459, %v1453
        %v1586 = vpack.c.b16 %v1460, %v1454
        %v1587 = vpack.c.b16 %v1461, %v1455
        %v1588 = vpack.c.b16 %v1462, %v1456
        %v1589 = vpack.c.b16 %v1463, %v1457
        %v1590 = vpack.c.b16 %v1464, %v1458
        %v1591 = vpack.c.b16 %v1471, %v1465
        %v1592 = vpack.c.b16 %v1472, %v1466
        %v1593 = vpack.c.b16 %v1473, %v1467
        %v1594 = vpack.c.b16 %v1474, %v1468
        %v1595 = vpack.c.b16 %v1475, %v1469
        %v1596 = vpack.c.b16 %v1476, %v1470
        %v1597 = vpack.c.b16 %v1483, %v1477
        %v1598 = vpack.c.b16 %v1484, %v1478
        %v1599 = vpack.c.b16 %v1485, %v1479
        %v1600 = vpack.c.b16 %v1486, %v1480
        %v1601 = vpack.c.b16 %v1487, %v1481
        %v1602 = vpack.c.b16 %v1488, %v1482
        %v1603 = vpack.c.b16 %v1495, %v1489
        %v1604 = vpack.c.b16 %v1496, %v1490
        %v1605 = vpack.c.b16 %v1497, %v1491
        %v1606 = vpack.c.b16 %v1498, %v1492
        %v1607 = vpack.c.b16 %v1499, %v1493
        %v1608 = vpack.c.b16 %v1500, %v1494
        %v1609 = vpack.c.b16 %v1507, %v1501
        %v1610 = vpack.c.b16 %v1508, %v1502
        %v1611 = vpack.c.b16 %v1509, %v1503
        %v1612 = vpack.c.b16 %v1510, %v1504
        %v1613 = vpack.c.b16 %v1511, %v1505
        %v1614 = vpack.c.b16 %v1512, %v1506
        %v1615 = vpack.c.b16 %v1519, %v1513
        %v1616 = vpack.c.b16 %v1520, %v1514
        %v1617 = vpack.c.b16 %v1521, %v1515
        %v1618 = vpack.c.b16 %v1522, %v1516
        %v1619 = vpack.c.b16 %v1523, %v1517
        %v1620 = vpack.c.b16 %v1524, %v1518
        %1717 = vmatprep.subr.bf16.mxu0 %v1526
        %1718 = vmatpush1.bf16.msra.mxu0 %v1525
        %1719 = vmatprep.subr.bf16.mxu0 %v1532
        %1720 = vmatpush1.bf16.msra.mxu0 %v1531
        %1721 = vmatprep.subr.bf16.mxu0 %v1538
        %1722 = vmatpush1.bf16.msra.mxu0 %v1537
        %1723 = vmatprep.subr.bf16.mxu0 %v1544
        %1724 = vmatpush1.bf16.msra.mxu0 %v1543
        %1725 = vmatprep.subr.bf16.mxu0 %v1550
        %1726 = vmatpush1.bf16.msra.mxu0 %v1549
        %1727 = vmatprep.subr.bf16.mxu0 %v1556
        %1728 = vmatpush1.bf16.msra.mxu0 %v1555
        %1729 = vmatprep.subr.bf16.mxu0 %v1562
        %1730 = vmatpush1.bf16.msra.mxu0 %v1561
        %1731 = vmatprep.subr.bf16.mxu0 %v1568
        %1732 = vmatpush1.bf16.msra.mxu0 %v1567
        %1733 = vmatprep.subr.bf16.mxu0 %v1574
        %1734 = vmatpush1.bf16.msra.mxu0 %v1573
        %1735 = vmatprep.subr.bf16.mxu0 %v1580
        %1736 = vmatpush1.bf16.msra.mxu0 %v1579
        %1737 = vmatprep.subr.bf16.mxu0 %v1586
        %1738 = vmatpush1.bf16.msra.mxu0 %v1585
        %1739 = vmatprep.subr.bf16.mxu0 %v1592
        %1740 = vmatpush1.bf16.msra.mxu0 %v1591
        %1741 = vmatprep.subr.bf16.mxu0 %v1598
        %1742 = vmatpush1.bf16.msra.mxu0 %v1597
        %1743 = vmatprep.subr.bf16.mxu0 %v1604
        %1744 = vmatpush1.bf16.msra.mxu0 %v1603
        %1745 = vmatprep.subr.bf16.mxu0 %v1610
        %1746 = vmatpush1.bf16.msra.mxu0 %v1609
        %1747 = vmatprep.subr.bf16.mxu0 %v1616
        %1748 = vmatpush1.bf16.msra.mxu0 %v1615
        %1749 = vmatprep.mubr.bf16.mxu0 %v1078
        %1750 = vmatmul.mubr.bf16.gmra.mrb[0].mxu0 %v1077
        %v1751 = vpop.f32.mrb[0].mxu0
        %v1752 = vadd.f32 %v1210, %v1751
        %v1753 = vpop.f32.mrb[0].mxu0
        %v1754 = vadd.f32 %v1214, %v1753
        %v1755 = vpop.f32.mrb[0].mxu0
        %v1756 = vadd.f32 %v1210, %v1755
        %v1757 = vpop.f32.mrb[0].mxu0
        %v1758 = vadd.f32 %v1214, %v1757
        %1759 = vmatprep.mubr.bf16.mxu0 %v1080
        %1760 = vmatmul.mubr.bf16.gmra.mrb[0].mxu0 %v1079
        %v1761 = vpop.f32.mrb[0].mxu0
        %v1762 = vadd.f32 %v1210, %v1761
        %v1763 = vpop.f32.mrb[0].mxu0
        %v1764 = vadd.f32 %v1214, %v1763
        %v1765 = vpop.f32.mrb[0].mxu0
        %v1766 = vadd.f32 %v1210, %v1765
        %v1767 = vpop.f32.mrb[0].mxu0
        %v1768 = vadd.f32 %v1214, %v1767
        %1769 = vmatprep.mubr.bf16.mxu0 %v1082
        %1770 = vmatmul.mubr.bf16.gmra.mrb[0].mxu0 %v1081
        %v1771 = vpop.f32.mrb[0].mxu0
        %v1772 = vadd.f32 %v1210, %v1771
        %v1773 = vpop.f32.mrb[0].mxu0
        %v1774 = vadd.f32 %v1214, %v1773
        %v1775 = vpop.f32.mrb[0].mxu0
        %v1776 = vadd.f32 %v1210, %v1775
        %v1777 = vpop.f32.mrb[0].mxu0
        %v1778 = vadd.f32 %v1214, %v1777
        %1779 = vmatprep.mubr.bf16.mxu0 %v1084
        %1780 = vmatmul.mubr.bf16.gmra.mrb[0].mxu0 %v1083
        %v1781 = vpop.f32.mrb[0].mxu0
        %v1782 = vadd.f32 %v1210, %v1781
        %v1783 = vpop.f32.mrb[0].mxu0
        %v1784 = vadd.f32 %v1214, %v1783
        %v1785 = vpop.f32.mrb[0].mxu0
        %v1786 = vadd.f32 %v1210, %v1785
        %v1787 = vpop.f32.mrb[0].mxu0
        %v1788 = vadd.f32 %v1214, %v1787
        %1789 = vmatprep.mubr.bf16.mxu0 %v1086
        %1790 = vmatmul.mubr.bf16.gmra.mrb[0].mxu0 %v1085
        %v1791 = vpop.f32.mrb[0].mxu0
        %v1792 = vadd.f32 %v1210, %v1791
        %v1793 = vpop.f32.mrb[0].mxu0
        %v1794 = vadd.f32 %v1214, %v1793
        %v1795 = vpop.f32.mrb[0].mxu0
        %v1796 = vadd.f32 %v1210, %v1795
        %v1797 = vpop.f32.mrb[0].mxu0
        %v1798 = vadd.f32 %v1214, %v1797
        %1799 = vmatprep.mubr.bf16.mxu0 %v1088
        %1800 = vmatmul.mubr.bf16.gmra.mrb[0].mxu0 %v1087
        %v1801 = vpop.f32.mrb[0].mxu0
        %v1802 = vadd.f32 %v1210, %v1801
        %v1803 = vpop.f32.mrb[0].mxu0
        %v1804 = vadd.f32 %v1214, %v1803
        %v1805 = vpop.f32.mrb[0].mxu0
        %v1806 = vadd.f32 %v1210, %v1805
        %v1807 = vpop.f32.mrb[0].mxu0
        %v1808 = vadd.f32 %v1214, %v1807
        %1809 = vmatprep.mubr.bf16.mxu0 %v1090
        %1810 = vmatmul.mubr.bf16.gmra.mrb[0].mxu0 %v1089
        %v1811 = vpop.f32.mrb[0].mxu0
        %v1812 = vadd.f32 %v1210, %v1811
        %v1813 = vpop.f32.mrb[0].mxu0
        %v1814 = vadd.f32 %v1214, %v1813
        %v1815 = vpop.f32.mrb[0].mxu0
        %v1816 = vadd.f32 %v1210, %v1815
        %v1817 = vpop.f32.mrb[0].mxu0
        %v1818 = vadd.f32 %v1214, %v1817
        %1819 = vmatprep.mubr.bf16.mxu0 %v1092
        %1820 = vmatmul.mubr.bf16.gmra.mrb[0].mxu0 %v1091
        %v1821 = vpop.f32.mrb[0].mxu0
        %v1822 = vadd.f32 %v1210, %v1821
        %v1823 = vpop.f32.mrb[0].mxu0
        %v1824 = vadd.f32 %v1214, %v1823
        %v1825 = vpop.f32.mrb[0].mxu0
        %v1826 = vadd.f32 %v1210, %v1825
        %v1827 = vpop.f32.mrb[0].mxu0
        %v1828 = vadd.f32 %v1214, %v1827
        %1829 = vmatprep.mubr.bf16.mxu0 %v1094
        %1830 = vmatmul.mubr.bf16.gmra.mrb[0].mxu0 %v1093
        %v1831 = vpop.f32.mrb[0].mxu0
        %v1832 = vadd.f32 %v1210, %v1831
        %v1833 = vpop.f32.mrb[0].mxu0
        %v1834 = vadd.f32 %v1214, %v1833
        %v1835 = vpop.f32.mrb[0].mxu0
        %v1836 = vadd.f32 %v1210, %v1835
        %v1837 = vpop.f32.mrb[0].mxu0
        %v1838 = vadd.f32 %v1214, %v1837
        %1839 = vmatprep.mubr.bf16.mxu0 %v1096
        %1840 = vmatmul.mubr.bf16.gmra.mrb[0].mxu0 %v1095
        %v1841 = vpop.f32.mrb[0].mxu0
        %v1842 = vadd.f32 %v1210, %v1841
        %v1843 = vpop.f32.mrb[0].mxu0
        %v1844 = vadd.f32 %v1214, %v1843
        %v1845 = vpop.f32.mrb[0].mxu0
        %v1846 = vadd.f32 %v1210, %v1845
        %v1847 = vpop.f32.mrb[0].mxu0
        %v1848 = vadd.f32 %v1214, %v1847
        %1849 = vmatprep.mubr.bf16.mxu0 %v1098
        %1850 = vmatmul.mubr.bf16.gmra.mrb[0].mxu0 %v1097
        %v1851 = vpop.f32.mrb[0].mxu0
        %v1852 = vadd.f32 %v1210, %v1851
        %v1853 = vpop.f32.mrb[0].mxu0
        %v1854 = vadd.f32 %v1214, %v1853
        %v1855 = vpop.f32.mrb[0].mxu0
        %v1856 = vadd.f32 %v1210, %v1855
        %v1857 = vpop.f32.mrb[0].mxu0
        %v1858 = vadd.f32 %v1214, %v1857
        %1859 = vmatprep.mubr.bf16.mxu0 %v1100
        %1860 = vmatmul.mubr.bf16.gmra.mrb[0].mxu0 %v1099
        %v1861 = vpop.f32.mrb[0].mxu0
        %v1862 = vadd.f32 %v1210, %v1861
        %v1863 = vpop.f32.mrb[0].mxu0
        %v1864 = vadd.f32 %v1214, %v1863
        %v1865 = vpop.f32.mrb[0].mxu0
        %v1866 = vadd.f32 %v1210, %v1865
        %v1867 = vpop.f32.mrb[0].mxu0
        %v1868 = vadd.f32 %v1214, %v1867
        %1869 = vmatprep.mubr.bf16.mxu0 %v1102
        %1870 = vmatmul.mubr.bf16.gmra.mrb[0].mxu0 %v1101
        %v1871 = vpop.f32.mrb[0].mxu0
        %v1872 = vadd.f32 %v1210, %v1871
        %v1873 = vpop.f32.mrb[0].mxu0
        %v1874 = vadd.f32 %v1214, %v1873
        %v1875 = vpop.f32.mrb[0].mxu0
        %v1876 = vadd.f32 %v1210, %v1875
        %v1877 = vpop.f32.mrb[0].mxu0
        %v1878 = vadd.f32 %v1214, %v1877
        %1879 = vmatprep.mubr.bf16.mxu0 %v1104
        %1880 = vmatmul.mubr.bf16.gmra.mrb[0].mxu0 %v1103
        %v1881 = vpop.f32.mrb[0].mxu0
        %v1882 = vadd.f32 %v1210, %v1881
        %v1883 = vpop.f32.mrb[0].mxu0
        %v1884 = vadd.f32 %v1214, %v1883
        %v1885 = vpop.f32.mrb[0].mxu0
        %v1886 = vadd.f32 %v1210, %v1885
        %v1887 = vpop.f32.mrb[0].mxu0
        %v1888 = vadd.f32 %v1214, %v1887
        %1889 = vmatprep.mubr.bf16.mxu0 %v1106
        %1890 = vmatmul.mubr.bf16.gmra.mrb[0].mxu0 %v1105
        %v1891 = vpop.f32.mrb[0].mxu0
        %v1892 = vadd.f32 %v1210, %v1891
        %v1893 = vpop.f32.mrb[0].mxu0
        %v1894 = vadd.f32 %v1214, %v1893
        %v1895 = vpop.f32.mrb[0].mxu0
        %v1896 = vadd.f32 %v1210, %v1895
        %v1897 = vpop.f32.mrb[0].mxu0
        %v1898 = vadd.f32 %v1214, %v1897
        %1899 = vmatprep.mubr.bf16.mxu0 %v1108
        %1900 = vmatmul.mubr.bf16.gmra.mrb[0].mxu0 %v1107
        %v1901 = vpop.f32.mrb[0].mxu0
        %v1902 = vadd.f32 %v1210, %v1901
        %v1903 = vpop.f32.mrb[0].mxu0
        %v1904 = vadd.f32 %v1214, %v1903
        %v1905 = vpop.f32.mrb[0].mxu0
        %v1906 = vadd.f32 %v1210, %v1905
        %v1907 = vpop.f32.mrb[0].mxu0
        %v1908 = vadd.f32 %v1214, %v1907
        %1909 = vdwg.mxu0
        %1910 = vmatprep.subr.bf16.mxu0 %v1528
        %1911 = vmatpush1.bf16.msra.mxu0 %v1527
        %1912 = vmatprep.subr.bf16.mxu0 %v1534
        %1913 = vmatpush1.bf16.msra.mxu0 %v1533
        %1914 = vmatprep.subr.bf16.mxu0 %v1540
        %1915 = vmatpush1.bf16.msra.mxu0 %v1539
        %1916 = vmatprep.subr.bf16.mxu0 %v1546
        %1917 = vmatpush1.bf16.msra.mxu0 %v1545
        %1918 = vmatprep.subr.bf16.mxu0 %v1552
        %1919 = vmatpush1.bf16.msra.mxu0 %v1551
        %1920 = vmatprep.subr.bf16.mxu0 %v1558
        %1921 = vmatpush1.bf16.msra.mxu0 %v1557
        %1922 = vmatprep.subr.bf16.mxu0 %v1564
        %1923 = vmatpush1.bf16.msra.mxu0 %v1563
        %1924 = vmatprep.subr.bf16.mxu0 %v1570
        %1925 = vmatpush1.bf16.msra.mxu0 %v1569
        %1926 = vmatprep.subr.bf16.mxu0 %v1576
        %1927 = vmatpush1.bf16.msra.mxu0 %v1575
        %1928 = vmatprep.subr.bf16.mxu0 %v1582
        %1929 = vmatpush1.bf16.msra.mxu0 %v1581
        %1930 = vmatprep.subr.bf16.mxu0 %v1588
        %1931 = vmatpush1.bf16.msra.mxu0 %v1587
        %1932 = vmatprep.subr.bf16.mxu0 %v1594
        %1933 = vmatpush1.bf16.msra.mxu0 %v1593
        %1934 = vmatprep.subr.bf16.mxu0 %v1600
        %1935 = vmatpush1.bf16.msra.mxu0 %v1599
        %1936 = vmatprep.subr.bf16.mxu0 %v1606
        %1937 = vmatpush1.bf16.msra.mxu0 %v1605
        %1938 = vmatprep.subr.bf16.mxu0 %v1612
        %1939 = vmatpush1.bf16.msra.mxu0 %v1611
        %1940 = vmatprep.subr.bf16.mxu0 %v1618
        %1941 = vmatpush1.bf16.msra.mxu0 %v1617
        %1942 = vmatprep.mubr.bf16.mxu0 %v1078
        %1943 = vmatmul.mubr.bf16.gmra.mrb[0].mxu0 %v1077
        %v1944 = vpop.f32.mrb[0].mxu0
        %v1945 = vadd.f32 %v1218, %v1944
        %v1946 = vpop.f32.mrb[0].mxu0
        %v1947 = vadd.f32 %v1222, %v1946
        %v1948 = vpop.f32.mrb[0].mxu0
        %v1949 = vadd.f32 %v1218, %v1948
        %v1950 = vpop.f32.mrb[0].mxu0
        %v1951 = vadd.f32 %v1222, %v1950
        %1952 = vmatprep.mubr.bf16.mxu0 %v1080
        %1953 = vmatmul.mubr.bf16.gmra.mrb[0].mxu0 %v1079
        %v1954 = vpop.f32.mrb[0].mxu0
        %v1955 = vadd.f32 %v1218, %v1954
        %v1956 = vpop.f32.mrb[0].mxu0
        %v1957 = vadd.f32 %v1222, %v1956
        %v1958 = vpop.f32.mrb[0].mxu0
        %v1959 = vadd.f32 %v1218, %v1958
        %v1960 = vpop.f32.mrb[0].mxu0
        %v1961 = vadd.f32 %v1222, %v1960
        %1962 = vmatprep.mubr.bf16.mxu0 %v1082
        %1963 = vmatmul.mubr.bf16.gmra.mrb[0].mxu0 %v1081
        %v1964 = vpop.f32.mrb[0].mxu0
        %v1965 = vadd.f32 %v1218, %v1964
        %v1966 = vpop.f32.mrb[0].mxu0
        %v1967 = vadd.f32 %v1222, %v1966
        %v1968 = vpop.f32.mrb[0].mxu0
        %v1969 = vadd.f32 %v1218, %v1968
        %v1970 = vpop.f32.mrb[0].mxu0
        %v1971 = vadd.f32 %v1222, %v1970
        %1972 = vmatprep.mubr.bf16.mxu0 %v1084
        %1973 = vmatmul.mubr.bf16.gmra.mrb[0].mxu0 %v1083
        %v1974 = vpop.f32.mrb[0].mxu0
        %v1975 = vadd.f32 %v1218, %v1974
        %v1976 = vpop.f32.mrb[0].mxu0
        %v1977 = vadd.f32 %v1222, %v1976
        %v1978 = vpop.f32.mrb[0].mxu0
        %v1979 = vadd.f32 %v1218, %v1978
        %v1980 = vpop.f32.mrb[0].mxu0
        %v1981 = vadd.f32 %v1222, %v1980
        %1982 = vmatprep.mubr.bf16.mxu0 %v1086
        %1983 = vmatmul.mubr.bf16.gmra.mrb[0].mxu0 %v1085
        %v1984 = vpop.f32.mrb[0].mxu0
        %v1985 = vadd.f32 %v1218, %v1984
        %v1986 = vpop.f32.mrb[0].mxu0
        %v1987 = vadd.f32 %v1222, %v1986
        %v1988 = vpop.f32.mrb[0].mxu0
        %v1989 = vadd.f32 %v1218, %v1988
        %v1990 = vpop.f32.mrb[0].mxu0
        %v1991 = vadd.f32 %v1222, %v1990
        %1992 = vmatprep.mubr.bf16.mxu0 %v1088
        %1993 = vmatmul.mubr.bf16.gmra.mrb[0].mxu0 %v1087
        %v1994 = vpop.f32.mrb[0].mxu0
        %v1995 = vadd.f32 %v1218, %v1994
        %v1996 = vpop.f32.mrb[0].mxu0
        %v1997 = vadd.f32 %v1222, %v1996
        %v1998 = vpop.f32.mrb[0].mxu0
        %v1999 = vadd.f32 %v1218, %v1998
        %v2000 = vpop.f32.mrb[0].mxu0
        %v2001 = vadd.f32 %v1222, %v2000
        %2002 = vmatprep.mubr.bf16.mxu0 %v1090
        %2003 = vmatmul.mubr.bf16.gmra.mrb[0].mxu0 %v1089
        %v2004 = vpop.f32.mrb[0].mxu0
        %v2005 = vadd.f32 %v1218, %v2004
        %v2006 = vpop.f32.mrb[0].mxu0
        %v2007 = vadd.f32 %v1222, %v2006
        %v2008 = vpop.f32.mrb[0].mxu0
        %v2009 = vadd.f32 %v1218, %v2008
        %v2010 = vpop.f32.mrb[0].mxu0
        %v2011 = vadd.f32 %v1222, %v2010
        %2012 = vmatprep.mubr.bf16.mxu0 %v1092
        %2013 = vmatmul.mubr.bf16.gmra.mrb[0].mxu0 %v1091
        %v2014 = vpop.f32.mrb[0].mxu0
        %v2015 = vadd.f32 %v1218, %v2014
        %v2016 = vpop.f32.mrb[0].mxu0
        %v2017 = vadd.f32 %v1222, %v2016
        %v2018 = vpop.f32.mrb[0].mxu0
        %v2019 = vadd.f32 %v1218, %v2018
        %v2020 = vpop.f32.mrb[0].mxu0
        %v2021 = vadd.f32 %v1222, %v2020
        %2022 = vmatprep.mubr.bf16.mxu0 %v1094
        %2023 = vmatmul.mubr.bf16.gmra.mrb[0].mxu0 %v1093
        %v2024 = vpop.f32.mrb[0].mxu0
        %v2025 = vadd.f32 %v1218, %v2024
        %v2026 = vpop.f32.mrb[0].mxu0
        %v2027 = vadd.f32 %v1222, %v2026
        %v2028 = vpop.f32.mrb[0].mxu0
        %v2029 = vadd.f32 %v1218, %v2028
        %v2030 = vpop.f32.mrb[0].mxu0
        %v2031 = vadd.f32 %v1222, %v2030
        %2032 = vmatprep.mubr.bf16.mxu0 %v1096
        %2033 = vmatmul.mubr.bf16.gmra.mrb[0].mxu0 %v1095
        %v2034 = vpop.f32.mrb[0].mxu0
        %v2035 = vadd.f32 %v1218, %v2034
        %v2036 = vpop.f32.mrb[0].mxu0
        %v2037 = vadd.f32 %v1222, %v2036
        %v2038 = vpop.f32.mrb[0].mxu0
        %v2039 = vadd.f32 %v1218, %v2038
        %v2040 = vpop.f32.mrb[0].mxu0
        %v2041 = vadd.f32 %v1222, %v2040
        %2042 = vmatprep.mubr.bf16.mxu0 %v1098
        %2043 = vmatmul.mubr.bf16.gmra.mrb[0].mxu0 %v1097
        %v2044 = vpop.f32.mrb[0].mxu0
        %v2045 = vadd.f32 %v1218, %v2044
        %v2046 = vpop.f32.mrb[0].mxu0
        %v2047 = vadd.f32 %v1222, %v2046
        %v2048 = vpop.f32.mrb[0].mxu0
        %v2049 = vadd.f32 %v1218, %v2048
        %v2050 = vpop.f32.mrb[0].mxu0
        %v2051 = vadd.f32 %v1222, %v2050
        %2052 = vmatprep.mubr.bf16.mxu0 %v1100
        %2053 = vmatmul.mubr.bf16.gmra.mrb[0].mxu0 %v1099
        %v2054 = vpop.f32.mrb[0].mxu0
        %v2055 = vadd.f32 %v1218, %v2054
        %v2056 = vpop.f32.mrb[0].mxu0
        %v2057 = vadd.f32 %v1222, %v2056
        %v2058 = vpop.f32.mrb[0].mxu0
        %v2059 = vadd.f32 %v1218, %v2058
        %v2060 = vpop.f32.mrb[0].mxu0
        %v2061 = vadd.f32 %v1222, %v2060
        %2062 = vmatprep.mubr.bf16.mxu0 %v1102
        %2063 = vmatmul.mubr.bf16.gmra.mrb[0].mxu0 %v1101
        %v2064 = vpop.f32.mrb[0].mxu0
        %v2065 = vadd.f32 %v1218, %v2064
        %v2066 = vpop.f32.mrb[0].mxu0
        %v2067 = vadd.f32 %v1222, %v2066
        %v2068 = vpop.f32.mrb[0].mxu0
        %v2069 = vadd.f32 %v1218, %v2068
        %v2070 = vpop.f32.mrb[0].mxu0
        %v2071 = vadd.f32 %v1222, %v2070
        %2072 = vmatprep.mubr.bf16.mxu0 %v1104
        %2073 = vmatmul.mubr.bf16.gmra.mrb[0].mxu0 %v1103
        %v2074 = vpop.f32.mrb[0].mxu0
        %v2075 = vadd.f32 %v1218, %v2074
        %v2076 = vpop.f32.mrb[0].mxu0
        %v2077 = vadd.f32 %v1222, %v2076
        %v2078 = vpop.f32.mrb[0].mxu0
        %v2079 = vadd.f32 %v1218, %v2078
        %v2080 = vpop.f32.mrb[0].mxu0
        %v2081 = vadd.f32 %v1222, %v2080
        %2082 = vmatprep.mubr.bf16.mxu0 %v1106
        %2083 = vmatmul.mubr.bf16.gmra.mrb[0].mxu0 %v1105
        %v2084 = vpop.f32.mrb[0].mxu0
        %v2085 = vadd.f32 %v1218, %v2084
        %v2086 = vpop.f32.mrb[0].mxu0
        %v2087 = vadd.f32 %v1222, %v2086
        %v2088 = vpop.f32.mrb[0].mxu0
        %v2089 = vadd.f32 %v1218, %v2088
        %v2090 = vpop.f32.mrb[0].mxu0
        %v2091 = vadd.f32 %v1222, %v2090
        %2092 = vmatprep.mubr.bf16.mxu0 %v1108
        %2093 = vmatmul.mubr.bf16.gmra.mrb[0].mxu0 %v1107
        %v2094 = vpop.f32.mrb[0].mxu0
        %v2095 = vadd.f32 %v1218, %v2094
        %v2096 = vpop.f32.mrb[0].mxu0
        %v2097 = vadd.f32 %v1222, %v2096
        %v2098 = vpop.f32.mrb[0].mxu0
        %v2099 = vadd.f32 %v1218, %v2098
        %v2100 = vpop.f32.mrb[0].mxu0
        %v2101 = vadd.f32 %v1222, %v2100
        %2102 = vdwg.mxu0
        %2103 = vmatprep.subr.bf16.mxu0 %v1530
        %2104 = vmatpush1.bf16.msra.mxu0 %v1529
        %2105 = vmatprep.subr.bf16.mxu0 %v1536
        %2106 = vmatpush1.bf16.msra.mxu0 %v1535
        %2107 = vmatprep.subr.bf16.mxu0 %v1542
        %2108 = vmatpush1.bf16.msra.mxu0 %v1541
        %2109 = vmatprep.subr.bf16.mxu0 %v1548
        %2110 = vmatpush1.bf16.msra.mxu0 %v1547
        %2111 = vmatprep.subr.bf16.mxu0 %v1554
        %2112 = vmatpush1.bf16.msra.mxu0 %v1553
        %2113 = vmatprep.subr.bf16.mxu0 %v1560
        %2114 = vmatpush1.bf16.msra.mxu0 %v1559
        %2115 = vmatprep.subr.bf16.mxu0 %v1566
        %2116 = vmatpush1.bf16.msra.mxu0 %v1565
        %2117 = vmatprep.subr.bf16.mxu0 %v1572
        %2118 = vmatpush1.bf16.msra.mxu0 %v1571
        %2119 = vmatprep.subr.bf16.mxu0 %v1578
        %2120 = vmatpush1.bf16.msra.mxu0 %v1577
        %2121 = vmatprep.subr.bf16.mxu0 %v1584
        %2122 = vmatpush1.bf16.msra.mxu0 %v1583
        %2123 = vmatprep.subr.bf16.mxu0 %v1590
        %2124 = vmatpush1.bf16.msra.mxu0 %v1589
        %2125 = vmatprep.subr.bf16.mxu0 %v1596
        %2126 = vmatpush1.bf16.msra.mxu0 %v1595
        %2127 = vmatprep.subr.bf16.mxu0 %v1602
        %2128 = vmatpush1.bf16.msra.mxu0 %v1601
        %2129 = vmatprep.subr.bf16.mxu0 %v1608
        %2130 = vmatpush1.bf16.msra.mxu0 %v1607
        %2131 = vmatprep.subr.bf16.mxu0 %v1614
        %2132 = vmatpush1.bf16.msra.mxu0 %v1613
        %2133 = vmatprep.subr.bf16.mxu0 %v1620
        %2134 = vmatpush1.bf16.msra.mxu0 %v1619
        %2135 = vmatprep.mubr.bf16.mxu0 %v1078
        %2136 = vmatmul.mubr.bf16.gmra.mrb[0].mxu0 %v1077
        %v2137 = vpop.f32.mrb[0].mxu0
        %v2138 = vadd.f32 %v1226, %v2137
        %v2139 = vpop.f32.mrb[0].mxu0
        %v2140 = vadd.f32 %v1230, %v2139
        %v2141 = vpop.f32.mrb[0].mxu0
        %v2142 = vadd.f32 %v1226, %v2141
        %v2143 = vpop.f32.mrb[0].mxu0
        %v2144 = vadd.f32 %v1230, %v2143
        %2145 = vmatprep.mubr.bf16.mxu0 %v1080
        %2146 = vmatmul.mubr.bf16.gmra.mrb[0].mxu0 %v1079
        %v2147 = vpop.f32.mrb[0].mxu0
        %v2148 = vadd.f32 %v1226, %v2147
        %v2149 = vpop.f32.mrb[0].mxu0
        %v2150 = vadd.f32 %v1230, %v2149
        %v2151 = vpop.f32.mrb[0].mxu0
        %v2152 = vadd.f32 %v1226, %v2151
        %v2153 = vpop.f32.mrb[0].mxu0
        %v2154 = vadd.f32 %v1230, %v2153
        %2155 = vmatprep.mubr.bf16.mxu0 %v1082
        %2156 = vmatmul.mubr.bf16.gmra.mrb[0].mxu0 %v1081
        %v2157 = vpop.f32.mrb[0].mxu0
        %v2158 = vadd.f32 %v1226, %v2157
        %v2159 = vpop.f32.mrb[0].mxu0
        %v2160 = vadd.f32 %v1230, %v2159
        %v2161 = vpop.f32.mrb[0].mxu0
        %v2162 = vadd.f32 %v1226, %v2161
        %v2163 = vpop.f32.mrb[0].mxu0
        %v2164 = vadd.f32 %v1230, %v2163
        %2165 = vmatprep.mubr.bf16.mxu0 %v1084
        %2166 = vmatmul.mubr.bf16.gmra.mrb[0].mxu0 %v1083
        %v2167 = vpop.f32.mrb[0].mxu0
        %v2168 = vadd.f32 %v1226, %v2167
        %v2169 = vpop.f32.mrb[0].mxu0
        %v2170 = vadd.f32 %v1230, %v2169
        %v2171 = vpop.f32.mrb[0].mxu0
        %v2172 = vadd.f32 %v1226, %v2171
        %v2173 = vpop.f32.mrb[0].mxu0
        %v2174 = vadd.f32 %v1230, %v2173
        %2175 = vmatprep.mubr.bf16.mxu0 %v1086
        %2176 = vmatmul.mubr.bf16.gmra.mrb[0].mxu0 %v1085
        %v2177 = vpop.f32.mrb[0].mxu0
        %v2178 = vadd.f32 %v1226, %v2177
        %v2179 = vpop.f32.mrb[0].mxu0
        %v2180 = vadd.f32 %v1230, %v2179
        %v2181 = vpop.f32.mrb[0].mxu0
        %v2182 = vadd.f32 %v1226, %v2181
        %v2183 = vpop.f32.mrb[0].mxu0
        %v2184 = vadd.f32 %v1230, %v2183
        %2185 = vmatprep.mubr.bf16.mxu0 %v1088
        %2186 = vmatmul.mubr.bf16.gmra.mrb[0].mxu0 %v1087
        %v2187 = vpop.f32.mrb[0].mxu0
        %v2188 = vadd.f32 %v1226, %v2187
        %v2189 = vpop.f32.mrb[0].mxu0
        %v2190 = vadd.f32 %v1230, %v2189
        %v2191 = vpop.f32.mrb[0].mxu0
        %v2192 = vadd.f32 %v1226, %v2191
        %v2193 = vpop.f32.mrb[0].mxu0
        %v2194 = vadd.f32 %v1230, %v2193
        %2195 = vmatprep.mubr.bf16.mxu0 %v1090
        %2196 = vmatmul.mubr.bf16.gmra.mrb[0].mxu0 %v1089
        %v2197 = vpop.f32.mrb[0].mxu0
        %v2198 = vadd.f32 %v1226, %v2197
        %v2199 = vpop.f32.mrb[0].mxu0
        %v2200 = vadd.f32 %v1230, %v2199
        %v2201 = vpop.f32.mrb[0].mxu0
        %v2202 = vadd.f32 %v1226, %v2201
        %v2203 = vpop.f32.mrb[0].mxu0
        %v2204 = vadd.f32 %v1230, %v2203
        %2205 = vmatprep.mubr.bf16.mxu0 %v1092
        %2206 = vmatmul.mubr.bf16.gmra.mrb[0].mxu0 %v1091
        %v2207 = vpop.f32.mrb[0].mxu0
        %v2208 = vadd.f32 %v1226, %v2207
        %v2209 = vpop.f32.mrb[0].mxu0
        %v2210 = vadd.f32 %v1230, %v2209
        %v2211 = vpop.f32.mrb[0].mxu0
        %v2212 = vadd.f32 %v1226, %v2211
        %v2213 = vpop.f32.mrb[0].mxu0
        %v2214 = vadd.f32 %v1230, %v2213
        %2215 = vmatprep.mubr.bf16.mxu0 %v1094
        %2216 = vmatmul.mubr.bf16.gmra.mrb[0].mxu0 %v1093
        %v2217 = vpop.f32.mrb[0].mxu0
        %v2218 = vadd.f32 %v1226, %v2217
        %v2219 = vpop.f32.mrb[0].mxu0
        %v2220 = vadd.f32 %v1230, %v2219
        %v2221 = vpop.f32.mrb[0].mxu0
        %v2222 = vadd.f32 %v1226, %v2221
        %v2223 = vpop.f32.mrb[0].mxu0
        %v2224 = vadd.f32 %v1230, %v2223
        %2225 = vmatprep.mubr.bf16.mxu0 %v1096
        %2226 = vmatmul.mubr.bf16.gmra.mrb[0].mxu0 %v1095
        %v2227 = vpop.f32.mrb[0].mxu0
        %v2228 = vadd.f32 %v1226, %v2227
        %v2229 = vpop.f32.mrb[0].mxu0
        %v2230 = vadd.f32 %v1230, %v2229
        %v2231 = vpop.f32.mrb[0].mxu0
        %v2232 = vadd.f32 %v1226, %v2231
        %v2233 = vpop.f32.mrb[0].mxu0
        %v2234 = vadd.f32 %v1230, %v2233
        %2235 = vmatprep.mubr.bf16.mxu0 %v1098
        %2236 = vmatmul.mubr.bf16.gmra.mrb[0].mxu0 %v1097
        %v2237 = vpop.f32.mrb[0].mxu0
        %v2238 = vadd.f32 %v1226, %v2237
        %v2239 = vpop.f32.mrb[0].mxu0
        %v2240 = vadd.f32 %v1230, %v2239
        %v2241 = vpop.f32.mrb[0].mxu0
        %v2242 = vadd.f32 %v1226, %v2241
        %v2243 = vpop.f32.mrb[0].mxu0
        %v2244 = vadd.f32 %v1230, %v2243
        %2245 = vmatprep.mubr.bf16.mxu0 %v1100
        %2246 = vmatmul.mubr.bf16.gmra.mrb[0].mxu0 %v1099
        %v2247 = vpop.f32.mrb[0].mxu0
        %v2248 = vadd.f32 %v1226, %v2247
        %v2249 = vpop.f32.mrb[0].mxu0
        %v2250 = vadd.f32 %v1230, %v2249
        %v2251 = vpop.f32.mrb[0].mxu0
        %v2252 = vadd.f32 %v1226, %v2251
        %v2253 = vpop.f32.mrb[0].mxu0
        %v2254 = vadd.f32 %v1230, %v2253
        %2255 = vmatprep.mubr.bf16.mxu0 %v1102
        %2256 = vmatmul.mubr.bf16.gmra.mrb[0].mxu0 %v1101
        %v2257 = vpop.f32.mrb[0].mxu0
        %v2258 = vadd.f32 %v1226, %v2257
        %v2259 = vpop.f32.mrb[0].mxu0
        %v2260 = vadd.f32 %v1230, %v2259
        %v2261 = vpop.f32.mrb[0].mxu0
        %v2262 = vadd.f32 %v1226, %v2261
        %v2263 = vpop.f32.mrb[0].mxu0
        %v2264 = vadd.f32 %v1230, %v2263
        %2265 = vmatprep.mubr.bf16.mxu0 %v1104
        %2266 = vmatmul.mubr.bf16.gmra.mrb[0].mxu0 %v1103
        %v2267 = vpop.f32.mrb[0].mxu0
        %v2268 = vadd.f32 %v1226, %v2267
        %v2269 = vpop.f32.mrb[0].mxu0
        %v2270 = vadd.f32 %v1230, %v2269
        %v2271 = vpop.f32.mrb[0].mxu0
        %v2272 = vadd.f32 %v1226, %v2271
        %v2273 = vpop.f32.mrb[0].mxu0
        %v2274 = vadd.f32 %v1230, %v2273
        %2275 = vmatprep.mubr.bf16.mxu0 %v1106
        %2276 = vmatmul.mubr.bf16.gmra.mrb[0].mxu0 %v1105
        %v2277 = vpop.f32.mrb[0].mxu0
        %v2278 = vadd.f32 %v1226, %v2277
        %v2279 = vpop.f32.mrb[0].mxu0
        %v2280 = vadd.f32 %v1230, %v2279
        %v2281 = vpop.f32.mrb[0].mxu0
        %v2282 = vadd.f32 %v1226, %v2281
        %v2283 = vpop.f32.mrb[0].mxu0
        %v2284 = vadd.f32 %v1230, %v2283
        %2285 = vmatprep.mubr.bf16.mxu0 %v1108
        %2286 = vmatmul.mubr.bf16.gmra.mrb[0].mxu0 %v1107
        %v2287 = vpop.f32.mrb[0].mxu0
        %v2288 = vadd.f32 %v1226, %v2287
        %v2289 = vpop.f32.mrb[0].mxu0
        %v2290 = vadd.f32 %v1230, %v2289
        %v2291 = vpop.f32.mrb[0].mxu0
        %v2292 = vadd.f32 %v1226, %v2291
        %v2293 = vpop.f32.mrb[0].mxu0
        %v2294 = vadd.f32 %v1230, %v2293
        %2295 = vdwg.mxu0
        %v2296 = vpack.c.bf16 %v1756, %v1752
        %v2297 = vpack.c.bf16 %v1758, %v1754
        %v2298 = vpack.c.bf16 %v1949, %v1945
        %v2299 = vpack.c.bf16 %v1951, %v1947
        %v2300 = vpack.c.bf16 %v2142, %v2138
        %v2301 = vpack.c.bf16 %v2144, %v2140
        %v2302 = vpack.c.bf16 %v1766, %v1762
        %v2303 = vpack.c.bf16 %v1768, %v1764
        %v2304 = vpack.c.bf16 %v1959, %v1955
        %v2305 = vpack.c.bf16 %v1961, %v1957
        %v2306 = vpack.c.bf16 %v2152, %v2148
        %v2307 = vpack.c.bf16 %v2154, %v2150
        %v2308 = vpack.c.bf16 %v1776, %v1772
        %v2309 = vpack.c.bf16 %v1778, %v1774
        %v2310 = vpack.c.bf16 %v1969, %v1965
        %v2311 = vpack.c.bf16 %v1971, %v1967
        %v2312 = vpack.c.bf16 %v2162, %v2158
        %v2313 = vpack.c.bf16 %v2164, %v2160
        %v2314 = vpack.c.bf16 %v1786, %v1782
        %v2315 = vpack.c.bf16 %v1788, %v1784
        %v2316 = vpack.c.bf16 %v1979, %v1975
        %v2317 = vpack.c.bf16 %v1981, %v1977
        %v2318 = vpack.c.bf16 %v2172, %v2168
        %v2319 = vpack.c.bf16 %v2174, %v2170
        %v2320 = vpack.c.bf16 %v1796, %v1792
        %v2321 = vpack.c.bf16 %v1798, %v1794
        %v2322 = vpack.c.bf16 %v1989, %v1985
        %v2323 = vpack.c.bf16 %v1991, %v1987
        %v2324 = vpack.c.bf16 %v2182, %v2178
        %v2325 = vpack.c.bf16 %v2184, %v2180
        %v2326 = vpack.c.bf16 %v1806, %v1802
        %v2327 = vpack.c.bf16 %v1808, %v1804
        %v2328 = vpack.c.bf16 %v1999, %v1995
        %v2329 = vpack.c.bf16 %v2001, %v1997
        %v2330 = vpack.c.bf16 %v2192, %v2188
        %v2331 = vpack.c.bf16 %v2194, %v2190
        %v2332 = vpack.c.bf16 %v1816, %v1812
        %v2333 = vpack.c.bf16 %v1818, %v1814
        %v2334 = vpack.c.bf16 %v2009, %v2005
        %v2335 = vpack.c.bf16 %v2011, %v2007
        %v2336 = vpack.c.bf16 %v2202, %v2198
        %v2337 = vpack.c.bf16 %v2204, %v2200
        %v2338 = vpack.c.bf16 %v1826, %v1822
        %v2339 = vpack.c.bf16 %v1828, %v1824
        %v2340 = vpack.c.bf16 %v2019, %v2015
        %v2341 = vpack.c.bf16 %v2021, %v2017
        %v2342 = vpack.c.bf16 %v2212, %v2208
        %v2343 = vpack.c.bf16 %v2214, %v2210
        %v2344 = vpack.c.bf16 %v1836, %v1832
        %v2345 = vpack.c.bf16 %v1838, %v1834
        %v2346 = vpack.c.bf16 %v2029, %v2025
        %v2347 = vpack.c.bf16 %v2031, %v2027
        %v2348 = vpack.c.bf16 %v2222, %v2218
        %v2349 = vpack.c.bf16 %v2224, %v2220
        %v2350 = vpack.c.bf16 %v1846, %v1842
        %v2351 = vpack.c.bf16 %v1848, %v1844
        %v2352 = vpack.c.bf16 %v2039, %v2035
        %v2353 = vpack.c.bf16 %v2041, %v2037
        %v2354 = vpack.c.bf16 %v2232, %v2228
        %v2355 = vpack.c.bf16 %v2234, %v2230
        %v2356 = vpack.c.bf16 %v1856, %v1852
        %v2357 = vpack.c.bf16 %v1858, %v1854
        %v2358 = vpack.c.bf16 %v2049, %v2045
        %v2359 = vpack.c.bf16 %v2051, %v2047
        %v2360 = vpack.c.bf16 %v2242, %v2238
        %v2361 = vpack.c.bf16 %v2244, %v2240
        %v2362 = vpack.c.bf16 %v1866, %v1862
        %v2363 = vpack.c.bf16 %v1868, %v1864
        %v2364 = vpack.c.bf16 %v2059, %v2055
        %v2365 = vpack.c.bf16 %v2061, %v2057
        %v2366 = vpack.c.bf16 %v2252, %v2248
        %v2367 = vpack.c.bf16 %v2254, %v2250
        %v2368 = vpack.c.bf16 %v1876, %v1872
        %v2369 = vpack.c.bf16 %v1878, %v1874
        %v2370 = vpack.c.bf16 %v2069, %v2065
        %v2371 = vpack.c.bf16 %v2071, %v2067
        %v2372 = vpack.c.bf16 %v2262, %v2258
        %v2373 = vpack.c.bf16 %v2264, %v2260
        %v2374 = vpack.c.bf16 %v1886, %v1882
        %v2375 = vpack.c.bf16 %v1888, %v1884
        %v2376 = vpack.c.bf16 %v2079, %v2075
        %v2377 = vpack.c.bf16 %v2081, %v2077
        %v2378 = vpack.c.bf16 %v2272, %v2268
        %v2379 = vpack.c.bf16 %v2274, %v2270
        %v2380 = vpack.c.bf16 %v1896, %v1892
        %v2381 = vpack.c.bf16 %v1898, %v1894
        %v2382 = vpack.c.bf16 %v2089, %v2085
        %v2383 = vpack.c.bf16 %v2091, %v2087
        %v2384 = vpack.c.bf16 %v2282, %v2278
        %v2385 = vpack.c.bf16 %v2284, %v2280
        %v2386 = vpack.c.bf16 %v1906, %v1902
        %v2387 = vpack.c.bf16 %v1908, %v1904
        %v2388 = vpack.c.bf16 %v2099, %v2095
        %v2389 = vpack.c.bf16 %v2101, %v2097
        %v2390 = vpack.c.bf16 %v2292, %v2288
        %v2391 = vpack.c.bf16 %v2294, %v2290
        %v2408 = vunpack.c.l.b16 %v2296
        %v2409 = vunpack.c.h.b16 %v2296
        %v2410 = vunpack.c.l.b16 %v2302
        %v2411 = vunpack.c.h.b16 %v2302
        %v2412 = vunpack.c.l.b16 %v2308
        %v2413 = vunpack.c.h.b16 %v2308
        %v2414 = vunpack.c.l.b16 %v2314
        %v2415 = vunpack.c.h.b16 %v2314
        %v2416 = vunpack.c.l.b16 %v2320
        %v2417 = vunpack.c.h.b16 %v2320
        %v2418 = vunpack.c.l.b16 %v2326
        %v2419 = vunpack.c.h.b16 %v2326
        %v2420 = vunpack.c.l.b16 %v2332
        %v2421 = vunpack.c.h.b16 %v2332
        %v2422 = vunpack.c.l.b16 %v2338
        %v2423 = vunpack.c.h.b16 %v2338
        %v2424 = vunpack.c.l.b16 %v2344
        %v2425 = vunpack.c.h.b16 %v2344
        %v2426 = vunpack.c.l.b16 %v2350
        %v2427 = vunpack.c.h.b16 %v2350
        %v2428 = vunpack.c.l.b16 %v2356
        %v2429 = vunpack.c.h.b16 %v2356
        %v2430 = vunpack.c.l.b16 %v2362
        %v2431 = vunpack.c.h.b16 %v2362
        %v2432 = vunpack.c.l.b16 %v2368
        %v2433 = vunpack.c.h.b16 %v2368
        %v2434 = vunpack.c.l.b16 %v2374
        %v2435 = vunpack.c.h.b16 %v2374
        %v2436 = vunpack.c.l.b16 %v2380
        %v2437 = vunpack.c.h.b16 %v2380
        %v2438 = vunpack.c.l.b16 %v2386
        %v2439 = vunpack.c.h.b16 %v2386
        %v2440 = vpack.c.b16 %v2408, %v2408
        %v2441 = vpack.c.b16 %v2409, %v2409
        %v2442 = vpack.c.b16 %v2410, %v2410
        %v2443 = vpack.c.b16 %v2411, %v2411
        %v2444 = vpack.c.b16 %v2412, %v2412
        %v2445 = vpack.c.b16 %v2413, %v2413
        %v2446 = vpack.c.b16 %v2414, %v2414
        %v2447 = vpack.c.b16 %v2415, %v2415
        %v2448 = vpack.c.b16 %v2416, %v2416
        %v2449 = vpack.c.b16 %v2417, %v2417
        %v2450 = vpack.c.b16 %v2418, %v2418
        %v2451 = vpack.c.b16 %v2419, %v2419
        %v2452 = vpack.c.b16 %v2420, %v2420
        %v2453 = vpack.c.b16 %v2421, %v2421
        %v2454 = vpack.c.b16 %v2422, %v2422
        %v2455 = vpack.c.b16 %v2423, %v2423
        %v2456 = vpack.c.b16 %v2424, %v2424
        %v2457 = vpack.c.b16 %v2425, %v2425
        %v2458 = vpack.c.b16 %v2426, %v2426
        %v2459 = vpack.c.b16 %v2427, %v2427
        %v2460 = vpack.c.b16 %v2428, %v2428
        %v2461 = vpack.c.b16 %v2429, %v2429
        %v2462 = vpack.c.b16 %v2430, %v2430
        %v2463 = vpack.c.b16 %v2431, %v2431
        %v2464 = vpack.c.b16 %v2432, %v2432
        %v2465 = vpack.c.b16 %v2433, %v2433
        %v2466 = vpack.c.b16 %v2434, %v2434
        %v2467 = vpack.c.b16 %v2435, %v2435
        %v2468 = vpack.c.b16 %v2436, %v2436
        %v2469 = vpack.c.b16 %v2437, %v2437
        %v2470 = vpack.c.b16 %v2438, %v2438
        %v2471 = vpack.c.b16 %v2439, %v2439
        %2504 = vst [vmem:[%s313] sm:$0xf] %v2440
        %2505 = vst [vmem:[%s313 + $0x4] sm:$0xf] %v2441
        %2506 = vst [vmem:[%s313 + $0x8] sm:$0xf] %v2442
        %2507 = vst [vmem:[%s313 + $0xc] sm:$0xf] %v2443
        %2508 = vst [vmem:[%s313 + $0x10] sm:$0xf] %v2444
        %2509 = vst [vmem:[%s313 + $0x14] sm:$0xf] %v2445
        %2510 = vst [vmem:[%s313 + $0x18] sm:$0xf] %v2446
        %2511 = vst [vmem:[%s313 + $0x1c] sm:$0xf] %v2447
        %2512 = vst [vmem:[%s313 + $0x20] sm:$0xf] %v2448
        %2513 = vst [vmem:[%s313 + $0x24] sm:$0xf] %v2449
        %2514 = vst [vmem:[%s313 + $0x28] sm:$0xf] %v2450
        %2515 = vst [vmem:[%s313 + $0x2c] sm:$0xf] %v2451
        %2516 = vst [vmem:[%s313 + $0x30] sm:$0xf] %v2452
        %2517 = vst [vmem:[%s313 + $0x34] sm:$0xf] %v2453
        %2518 = vst [vmem:[%s313 + $0x38] sm:$0xf] %v2454
        %2519 = vst [vmem:[%s313 + $0x3c] sm:$0xf] %v2455
        %2520 = vst [vmem:[%s313 + $0x40] sm:$0xf] %v2456
        %2521 = vst [vmem:[%s313 + $0x44] sm:$0xf] %v2457
        %2522 = vst [vmem:[%s313 + $0x48] sm:$0xf] %v2458
        %2523 = vst [vmem:[%s313 + $0x4c] sm:$0xf] %v2459
        %2524 = vst [vmem:[%s313 + $0x50] sm:$0xf] %v2460
        %2525 = vst [vmem:[%s313 + $0x54] sm:$0xf] %v2461
        %2526 = vst [vmem:[%s313 + $0x58] sm:$0xf] %v2462
        %2527 = vst [vmem:[%s313 + $0x5c] sm:$0xf] %v2463
        %2528 = vst [vmem:[%s313 + $0x60] sm:$0xf] %v2464
        %2529 = vst [vmem:[%s313 + $0x64] sm:$0xf] %v2465
        %2530 = vst [vmem:[%s313 + $0x68] sm:$0xf] %v2466
        %2531 = vst [vmem:[%s313 + $0x6c] sm:$0xf] %v2467
        %2532 = vst [vmem:[%s313 + $0x70] sm:$0xf] %v2468
        %2533 = vst [vmem:[%s313 + $0x74] sm:$0xf] %v2469
        %2534 = vst [vmem:[%s313 + $0x78] sm:$0xf] %v2470
        %2535 = vst [vmem:[%s313 + $0x7c] sm:$0xf] %v2471
        %v2552 = vunpack.c.l.b16 %v2297
        %v2553 = vunpack.c.h.b16 %v2297
        %v2554 = vunpack.c.l.b16 %v2303
        %v2555 = vunpack.c.h.b16 %v2303
        %v2556 = vunpack.c.l.b16 %v2309
        %v2557 = vunpack.c.h.b16 %v2309
        %v2558 = vunpack.c.l.b16 %v2315
        %v2559 = vunpack.c.h.b16 %v2315
        %v2560 = vunpack.c.l.b16 %v2321
        %v2561 = vunpack.c.h.b16 %v2321
        %v2562 = vunpack.c.l.b16 %v2327
        %v2563 = vunpack.c.h.b16 %v2327
        %v2564 = vunpack.c.l.b16 %v2333
        %v2565 = vunpack.c.h.b16 %v2333
        %v2566 = vunpack.c.l.b16 %v2339
        %v2567 = vunpack.c.h.b16 %v2339
        %v2568 = vunpack.c.l.b16 %v2345
        %v2569 = vunpack.c.h.b16 %v2345
        %v2570 = vunpack.c.l.b16 %v2351
        %v2571 = vunpack.c.h.b16 %v2351
        %v2572 = vunpack.c.l.b16 %v2357
        %v2573 = vunpack.c.h.b16 %v2357
        %v2574 = vunpack.c.l.b16 %v2363
        %v2575 = vunpack.c.h.b16 %v2363
        %v2576 = vunpack.c.l.b16 %v2369
        %v2577 = vunpack.c.h.b16 %v2369
        %v2578 = vunpack.c.l.b16 %v2375
        %v2579 = vunpack.c.h.b16 %v2375
        %v2580 = vunpack.c.l.b16 %v2381
        %v2581 = vunpack.c.h.b16 %v2381
        %v2582 = vunpack.c.l.b16 %v2387
        %v2583 = vunpack.c.h.b16 %v2387
        %v2584 = vpack.c.b16 %v2552, %v2552
        %v2585 = vpack.c.b16 %v2553, %v2553
        %v2586 = vpack.c.b16 %v2554, %v2554
        %v2587 = vpack.c.b16 %v2555, %v2555
        %v2588 = vpack.c.b16 %v2556, %v2556
        %v2589 = vpack.c.b16 %v2557, %v2557
        %v2590 = vpack.c.b16 %v2558, %v2558
        %v2591 = vpack.c.b16 %v2559, %v2559
        %v2592 = vpack.c.b16 %v2560, %v2560
        %v2593 = vpack.c.b16 %v2561, %v2561
        %v2594 = vpack.c.b16 %v2562, %v2562
        %v2595 = vpack.c.b16 %v2563, %v2563
        %v2596 = vpack.c.b16 %v2564, %v2564
        %v2597 = vpack.c.b16 %v2565, %v2565
        %v2598 = vpack.c.b16 %v2566, %v2566
        %v2599 = vpack.c.b16 %v2567, %v2567
        %v2600 = vpack.c.b16 %v2568, %v2568
        %v2601 = vpack.c.b16 %v2569, %v2569
        %v2602 = vpack.c.b16 %v2570, %v2570
        %v2603 = vpack.c.b16 %v2571, %v2571
        %v2604 = vpack.c.b16 %v2572, %v2572
        %v2605 = vpack.c.b16 %v2573, %v2573
        %v2606 = vpack.c.b16 %v2574, %v2574
        %v2607 = vpack.c.b16 %v2575, %v2575
        %v2608 = vpack.c.b16 %v2576, %v2576
        %v2609 = vpack.c.b16 %v2577, %v2577
        %v2610 = vpack.c.b16 %v2578, %v2578
        %v2611 = vpack.c.b16 %v2579, %v2579
        %v2612 = vpack.c.b16 %v2580, %v2580
        %v2613 = vpack.c.b16 %v2581, %v2581
        %v2614 = vpack.c.b16 %v2582, %v2582
        %v2615 = vpack.c.b16 %v2583, %v2583
        %s2648 = scalar_lea.vmem %s313, 128 [#allocation11]
        %2649 = vst [vmem:[%s2648] sm:$0xf] %v2584
        %2650 = vst [vmem:[%s2648 + $0x4] sm:$0xf] %v2585
        %2651 = vst [vmem:[%s2648 + $0x8] sm:$0xf] %v2586
        %2652 = vst [vmem:[%s2648 + $0xc] sm:$0xf] %v2587
        %2653 = vst [vmem:[%s2648 + $0x10] sm:$0xf] %v2588
        %2654 = vst [vmem:[%s2648 + $0x14] sm:$0xf] %v2589
        %2655 = vst [vmem:[%s2648 + $0x18] sm:$0xf] %v2590
        %2656 = vst [vmem:[%s2648 + $0x1c] sm:$0xf] %v2591
        %2657 = vst [vmem:[%s2648 + $0x20] sm:$0xf] %v2592
        %2658 = vst [vmem:[%s2648 + $0x24] sm:$0xf] %v2593
        %2659 = vst [vmem:[%s2648 + $0x28] sm:$0xf] %v2594
        %2660 = vst [vmem:[%s2648 + $0x2c] sm:$0xf] %v2595
        %2661 = vst [vmem:[%s2648 + $0x30] sm:$0xf] %v2596
        %2662 = vst [vmem:[%s2648 + $0x34] sm:$0xf] %v2597
        %2663 = vst [vmem:[%s2648 + $0x38] sm:$0xf] %v2598
        %2664 = vst [vmem:[%s2648 + $0x3c] sm:$0xf] %v2599
        %2665 = vst [vmem:[%s2648 + $0x40] sm:$0xf] %v2600
        %2666 = vst [vmem:[%s2648 + $0x44] sm:$0xf] %v2601
        %2667 = vst [vmem:[%s2648 + $0x48] sm:$0xf] %v2602
        %2668 = vst [vmem:[%s2648 + $0x4c] sm:$0xf] %v2603
        %2669 = vst [vmem:[%s2648 + $0x50] sm:$0xf] %v2604
        %2670 = vst [vmem:[%s2648 + $0x54] sm:$0xf] %v2605
        %2671 = vst [vmem:[%s2648 + $0x58] sm:$0xf] %v2606
        %2672 = vst [vmem:[%s2648 + $0x5c] sm:$0xf] %v2607
        %2673 = vst [vmem:[%s2648 + $0x60] sm:$0xf] %v2608
        %2674 = vst [vmem:[%s2648 + $0x64] sm:$0xf] %v2609
        %2675 = vst [vmem:[%s2648 + $0x68] sm:$0xf] %v2610
        %2676 = vst [vmem:[%s2648 + $0x6c] sm:$0xf] %v2611
        %2677 = vst [vmem:[%s2648 + $0x70] sm:$0xf] %v2612
        %2678 = vst [vmem:[%s2648 + $0x74] sm:$0xf] %v2613
        %2679 = vst [vmem:[%s2648 + $0x78] sm:$0xf] %v2614
        %2680 = vst [vmem:[%s2648 + $0x7c] sm:$0xf] %v2615
        %v2697 = vunpack.c.l.b16 %v2298
        %v2698 = vunpack.c.h.b16 %v2298
        %v2699 = vunpack.c.l.b16 %v2304
        %v2700 = vunpack.c.h.b16 %v2304
        %v2701 = vunpack.c.l.b16 %v2310
        %v2702 = vunpack.c.h.b16 %v2310
        %v2703 = vunpack.c.l.b16 %v2316
        %v2704 = vunpack.c.h.b16 %v2316
        %v2705 = vunpack.c.l.b16 %v2322
        %v2706 = vunpack.c.h.b16 %v2322
        %v2707 = vunpack.c.l.b16 %v2328
        %v2708 = vunpack.c.h.b16 %v2328
        %v2709 = vunpack.c.l.b16 %v2334
        %v2710 = vunpack.c.h.b16 %v2334
        %v2711 = vunpack.c.l.b16 %v2340
        %v2712 = vunpack.c.h.b16 %v2340
        %v2713 = vunpack.c.l.b16 %v2346
        %v2714 = vunpack.c.h.b16 %v2346
        %v2715 = vunpack.c.l.b16 %v2352
        %v2716 = vunpack.c.h.b16 %v2352
        %v2717 = vunpack.c.l.b16 %v2358
        %v2718 = vunpack.c.h.b16 %v2358
        %v2719 = vunpack.c.l.b16 %v2364
        %v2720 = vunpack.c.h.b16 %v2364
        %v2721 = vunpack.c.l.b16 %v2370
        %v2722 = vunpack.c.h.b16 %v2370
        %v2723 = vunpack.c.l.b16 %v2376
        %v2724 = vunpack.c.h.b16 %v2376
        %v2725 = vunpack.c.l.b16 %v2382
        %v2726 = vunpack.c.h.b16 %v2382
        %v2727 = vunpack.c.l.b16 %v2388
        %v2728 = vunpack.c.h.b16 %v2388
        %v2729 = vpack.c.b16 %v2697, %v2697
        %v2730 = vpack.c.b16 %v2698, %v2698
        %v2731 = vpack.c.b16 %v2699, %v2699
        %v2732 = vpack.c.b16 %v2700, %v2700
        %v2733 = vpack.c.b16 %v2701, %v2701
        %v2734 = vpack.c.b16 %v2702, %v2702
        %v2735 = vpack.c.b16 %v2703, %v2703
        %v2736 = vpack.c.b16 %v2704, %v2704
        %v2737 = vpack.c.b16 %v2705, %v2705
        %v2738 = vpack.c.b16 %v2706, %v2706
        %v2739 = vpack.c.b16 %v2707, %v2707
        %v2740 = vpack.c.b16 %v2708, %v2708
        %v2741 = vpack.c.b16 %v2709, %v2709
        %v2742 = vpack.c.b16 %v2710, %v2710
        %v2743 = vpack.c.b16 %v2711, %v2711
        %v2744 = vpack.c.b16 %v2712, %v2712
        %v2745 = vpack.c.b16 %v2713, %v2713
        %v2746 = vpack.c.b16 %v2714, %v2714
        %v2747 = vpack.c.b16 %v2715, %v2715
        %v2748 = vpack.c.b16 %v2716, %v2716
        %v2749 = vpack.c.b16 %v2717, %v2717
        %v2750 = vpack.c.b16 %v2718, %v2718
        %v2751 = vpack.c.b16 %v2719, %v2719
        %v2752 = vpack.c.b16 %v2720, %v2720
        %v2753 = vpack.c.b16 %v2721, %v2721
        %v2754 = vpack.c.b16 %v2722, %v2722
        %v2755 = vpack.c.b16 %v2723, %v2723
        %v2756 = vpack.c.b16 %v2724, %v2724
        %v2757 = vpack.c.b16 %v2725, %v2725
        %v2758 = vpack.c.b16 %v2726, %v2726
        %v2759 = vpack.c.b16 %v2727, %v2727
        %v2760 = vpack.c.b16 %v2728, %v2728
        %s2793 = scalar_lea.vmem %s313, 256 [#allocation11]
        %2794 = vst [vmem:[%s2793] sm:$0xf] %v2729
        %2795 = vst [vmem:[%s2793 + $0x4] sm:$0xf] %v2730
        %2796 = vst [vmem:[%s2793 + $0x8] sm:$0xf] %v2731
        %2797 = vst [vmem:[%s2793 + $0xc] sm:$0xf] %v2732
        %2798 = vst [vmem:[%s2793 + $0x10] sm:$0xf] %v2733
        %2799 = vst [vmem:[%s2793 + $0x14] sm:$0xf] %v2734
        %2800 = vst [vmem:[%s2793 + $0x18] sm:$0xf] %v2735
        %2801 = vst [vmem:[%s2793 + $0x1c] sm:$0xf] %v2736
        %2802 = vst [vmem:[%s2793 + $0x20] sm:$0xf] %v2737
        %2803 = vst [vmem:[%s2793 + $0x24] sm:$0xf] %v2738
        %2804 = vst [vmem:[%s2793 + $0x28] sm:$0xf] %v2739
        %2805 = vst [vmem:[%s2793 + $0x2c] sm:$0xf] %v2740
        %2806 = vst [vmem:[%s2793 + $0x30] sm:$0xf] %v2741
        %2807 = vst [vmem:[%s2793 + $0x34] sm:$0xf] %v2742
        %2808 = vst [vmem:[%s2793 + $0x38] sm:$0xf] %v2743
        %2809 = vst [vmem:[%s2793 + $0x3c] sm:$0xf] %v2744
        %2810 = vst [vmem:[%s2793 + $0x40] sm:$0xf] %v2745
        %2811 = vst [vmem:[%s2793 + $0x44] sm:$0xf] %v2746
        %2812 = vst [vmem:[%s2793 + $0x48] sm:$0xf] %v2747
        %2813 = vst [vmem:[%s2793 + $0x4c] sm:$0xf] %v2748
        %2814 = vst [vmem:[%s2793 + $0x50] sm:$0xf] %v2749
        %2815 = vst [vmem:[%s2793 + $0x54] sm:$0xf] %v2750
        %2816 = vst [vmem:[%s2793 + $0x58] sm:$0xf] %v2751
        %2817 = vst [vmem:[%s2793 + $0x5c] sm:$0xf] %v2752
        %2818 = vst [vmem:[%s2793 + $0x60] sm:$0xf] %v2753
        %2819 = vst [vmem:[%s2793 + $0x64] sm:$0xf] %v2754
        %2820 = vst [vmem:[%s2793 + $0x68] sm:$0xf] %v2755
        %2821 = vst [vmem:[%s2793 + $0x6c] sm:$0xf] %v2756
        %2822 = vst [vmem:[%s2793 + $0x70] sm:$0xf] %v2757
        %2823 = vst [vmem:[%s2793 + $0x74] sm:$0xf] %v2758
        %2824 = vst [vmem:[%s2793 + $0x78] sm:$0xf] %v2759
        %2825 = vst [vmem:[%s2793 + $0x7c] sm:$0xf] %v2760
        %v2842 = vunpack.c.l.b16 %v2299
        %v2843 = vunpack.c.h.b16 %v2299
        %v2844 = vunpack.c.l.b16 %v2305
        %v2845 = vunpack.c.h.b16 %v2305
        %v2846 = vunpack.c.l.b16 %v2311
        %v2847 = vunpack.c.h.b16 %v2311
        %v2848 = vunpack.c.l.b16 %v2317
        %v2849 = vunpack.c.h.b16 %v2317
        %v2850 = vunpack.c.l.b16 %v2323
        %v2851 = vunpack.c.h.b16 %v2323
        %v2852 = vunpack.c.l.b16 %v2329
        %v2853 = vunpack.c.h.b16 %v2329
        %v2854 = vunpack.c.l.b16 %v2335
        %v2855 = vunpack.c.h.b16 %v2335
        %v2856 = vunpack.c.l.b16 %v2341
        %v2857 = vunpack.c.h.b16 %v2341
        %v2858 = vunpack.c.l.b16 %v2347
        %v2859 = vunpack.c.h.b16 %v2347
        %v2860 = vunpack.c.l.b16 %v2353
        %v2861 = vunpack.c.h.b16 %v2353
        %v2862 = vunpack.c.l.b16 %v2359
        %v2863 = vunpack.c.h.b16 %v2359
        %v2864 = vunpack.c.l.b16 %v2365
        %v2865 = vunpack.c.h.b16 %v2365
        %v2866 = vunpack.c.l.b16 %v2371
        %v2867 = vunpack.c.h.b16 %v2371
        %v2868 = vunpack.c.l.b16 %v2377
        %v2869 = vunpack.c.h.b16 %v2377
        %v2870 = vunpack.c.l.b16 %v2383
        %v2871 = vunpack.c.h.b16 %v2383
        %v2872 = vunpack.c.l.b16 %v2389
        %v2873 = vunpack.c.h.b16 %v2389
        %v2874 = vpack.c.b16 %v2842, %v2842
        %v2875 = vpack.c.b16 %v2843, %v2843
        %v2876 = vpack.c.b16 %v2844, %v2844
        %v2877 = vpack.c.b16 %v2845, %v2845
        %v2878 = vpack.c.b16 %v2846, %v2846
        %v2879 = vpack.c.b16 %v2847, %v2847
        %v2880 = vpack.c.b16 %v2848, %v2848
        %v2881 = vpack.c.b16 %v2849, %v2849
        %v2882 = vpack.c.b16 %v2850, %v2850
        %v2883 = vpack.c.b16 %v2851, %v2851
        %v2884 = vpack.c.b16 %v2852, %v2852
        %v2885 = vpack.c.b16 %v2853, %v2853
        %v2886 = vpack.c.b16 %v2854, %v2854
        %v2887 = vpack.c.b16 %v2855, %v2855
        %v2888 = vpack.c.b16 %v2856, %v2856
        %v2889 = vpack.c.b16 %v2857, %v2857
        %v2890 = vpack.c.b16 %v2858, %v2858
        %v2891 = vpack.c.b16 %v2859, %v2859
        %v2892 = vpack.c.b16 %v2860, %v2860
        %v2893 = vpack.c.b16 %v2861, %v2861
        %v2894 = vpack.c.b16 %v2862, %v2862
        %v2895 = vpack.c.b16 %v2863, %v2863
        %v2896 = vpack.c.b16 %v2864, %v2864
        %v2897 = vpack.c.b16 %v2865, %v2865
        %v2898 = vpack.c.b16 %v2866, %v2866
        %v2899 = vpack.c.b16 %v2867, %v2867
        %v2900 = vpack.c.b16 %v2868, %v2868
        %v2901 = vpack.c.b16 %v2869, %v2869
        %v2902 = vpack.c.b16 %v2870, %v2870
        %v2903 = vpack.c.b16 %v2871, %v2871
        %v2904 = vpack.c.b16 %v2872, %v2872
        %v2905 = vpack.c.b16 %v2873, %v2873
        %s2938 = scalar_lea.vmem %s313, 384 [#allocation11]
        %2939 = vst [vmem:[%s2938] sm:$0xf] %v2874
        %2940 = vst [vmem:[%s2938 + $0x4] sm:$0xf] %v2875
        %2941 = vst [vmem:[%s2938 + $0x8] sm:$0xf] %v2876
        %2942 = vst [vmem:[%s2938 + $0xc] sm:$0xf] %v2877
        %2943 = vst [vmem:[%s2938 + $0x10] sm:$0xf] %v2878
        %2944 = vst [vmem:[%s2938 + $0x14] sm:$0xf] %v2879
        %2945 = vst [vmem:[%s2938 + $0x18] sm:$0xf] %v2880
        %2946 = vst [vmem:[%s2938 + $0x1c] sm:$0xf] %v2881
        %2947 = vst [vmem:[%s2938 + $0x20] sm:$0xf] %v2882
        %2948 = vst [vmem:[%s2938 + $0x24] sm:$0xf] %v2883
        %2949 = vst [vmem:[%s2938 + $0x28] sm:$0xf] %v2884
        %2950 = vst [vmem:[%s2938 + $0x2c] sm:$0xf] %v2885
        %2951 = vst [vmem:[%s2938 + $0x30] sm:$0xf] %v2886
        %2952 = vst [vmem:[%s2938 + $0x34] sm:$0xf] %v2887
        %2953 = vst [vmem:[%s2938 + $0x38] sm:$0xf] %v2888
        %2954 = vst [vmem:[%s2938 + $0x3c] sm:$0xf] %v2889
        %2955 = vst [vmem:[%s2938 + $0x40] sm:$0xf] %v2890
        %2956 = vst [vmem:[%s2938 + $0x44] sm:$0xf] %v2891
        %2957 = vst [vmem:[%s2938 + $0x48] sm:$0xf] %v2892
        %2958 = vst [vmem:[%s2938 + $0x4c] sm:$0xf] %v2893
        %2959 = vst [vmem:[%s2938 + $0x50] sm:$0xf] %v2894
        %2960 = vst [vmem:[%s2938 + $0x54] sm:$0xf] %v2895
        %2961 = vst [vmem:[%s2938 + $0x58] sm:$0xf] %v2896
        %2962 = vst [vmem:[%s2938 + $0x5c] sm:$0xf] %v2897
        %2963 = vst [vmem:[%s2938 + $0x60] sm:$0xf] %v2898
        %2964 = vst [vmem:[%s2938 + $0x64] sm:$0xf] %v2899
        %2965 = vst [vmem:[%s2938 + $0x68] sm:$0xf] %v2900
        %2966 = vst [vmem:[%s2938 + $0x6c] sm:$0xf] %v2901
        %2967 = vst [vmem:[%s2938 + $0x70] sm:$0xf] %v2902
        %2968 = vst [vmem:[%s2938 + $0x74] sm:$0xf] %v2903
        %2969 = vst [vmem:[%s2938 + $0x78] sm:$0xf] %v2904
        %2970 = vst [vmem:[%s2938 + $0x7c] sm:$0xf] %v2905
        %v2987 = vunpack.c.l.b16 %v2300
        %v2988 = vunpack.c.h.b16 %v2300
        %v2989 = vunpack.c.l.b16 %v2306
        %v2990 = vunpack.c.h.b16 %v2306
        %v2991 = vunpack.c.l.b16 %v2312
        %v2992 = vunpack.c.h.b16 %v2312
        %v2993 = vunpack.c.l.b16 %v2318
        %v2994 = vunpack.c.h.b16 %v2318
        %v2995 = vunpack.c.l.b16 %v2324
        %v2996 = vunpack.c.h.b16 %v2324
        %v2997 = vunpack.c.l.b16 %v2330
        %v2998 = vunpack.c.h.b16 %v2330
        %v2999 = vunpack.c.l.b16 %v2336
        %v3000 = vunpack.c.h.b16 %v2336
        %v3001 = vunpack.c.l.b16 %v2342
        %v3002 = vunpack.c.h.b16 %v2342
        %v3003 = vunpack.c.l.b16 %v2348
        %v3004 = vunpack.c.h.b16 %v2348
        %v3005 = vunpack.c.l.b16 %v2354
        %v3006 = vunpack.c.h.b16 %v2354
        %v3007 = vunpack.c.l.b16 %v2360
        %v3008 = vunpack.c.h.b16 %v2360
        %v3009 = vunpack.c.l.b16 %v2366
        %v3010 = vunpack.c.h.b16 %v2366
        %v3011 = vunpack.c.l.b16 %v2372
        %v3012 = vunpack.c.h.b16 %v2372
        %v3013 = vunpack.c.l.b16 %v2378
        %v3014 = vunpack.c.h.b16 %v2378
        %v3015 = vunpack.c.l.b16 %v2384
        %v3016 = vunpack.c.h.b16 %v2384
        %v3017 = vunpack.c.l.b16 %v2390
        %v3018 = vunpack.c.h.b16 %v2390
        %v3019 = vpack.c.b16 %v2987, %v2987
        %v3020 = vpack.c.b16 %v2988, %v2988
        %v3021 = vpack.c.b16 %v2989, %v2989
        %v3022 = vpack.c.b16 %v2990, %v2990
        %v3023 = vpack.c.b16 %v2991, %v2991
        %v3024 = vpack.c.b16 %v2992, %v2992
        %v3025 = vpack.c.b16 %v2993, %v2993
        %v3026 = vpack.c.b16 %v2994, %v2994
        %v3027 = vpack.c.b16 %v2995, %v2995
        %v3028 = vpack.c.b16 %v2996, %v2996
        %v3029 = vpack.c.b16 %v2997, %v2997
        %v3030 = vpack.c.b16 %v2998, %v2998
        %v3031 = vpack.c.b16 %v2999, %v2999
        %v3032 = vpack.c.b16 %v3000, %v3000
        %v3033 = vpack.c.b16 %v3001, %v3001
        %v3034 = vpack.c.b16 %v3002, %v3002
        %v3035 = vpack.c.b16 %v3003, %v3003
        %v3036 = vpack.c.b16 %v3004, %v3004
        %v3037 = vpack.c.b16 %v3005, %v3005
        %v3038 = vpack.c.b16 %v3006, %v3006
        %v3039 = vpack.c.b16 %v3007, %v3007
        %v3040 = vpack.c.b16 %v3008, %v3008
        %v3041 = vpack.c.b16 %v3009, %v3009
        %v3042 = vpack.c.b16 %v3010, %v3010
        %v3043 = vpack.c.b16 %v3011, %v3011
        %v3044 = vpack.c.b16 %v3012, %v3012
        %v3045 = vpack.c.b16 %v3013, %v3013
        %v3046 = vpack.c.b16 %v3014, %v3014
        %v3047 = vpack.c.b16 %v3015, %v3015
        %v3048 = vpack.c.b16 %v3016, %v3016
        %v3049 = vpack.c.b16 %v3017, %v3017
        %v3050 = vpack.c.b16 %v3018, %v3018
        %s3083 = scalar_lea.vmem %s313, 512 [#allocation11]
        %3084 = vst [vmem:[%s3083] sm:$0xf] %v3019
        %3085 = vst [vmem:[%s3083 + $0x4] sm:$0xf] %v3020
        %3086 = vst [vmem:[%s3083 + $0x8] sm:$0xf] %v3021
        %3087 = vst [vmem:[%s3083 + $0xc] sm:$0xf] %v3022
        %3088 = vst [vmem:[%s3083 + $0x10] sm:$0xf] %v3023
        %3089 = vst [vmem:[%s3083 + $0x14] sm:$0xf] %v3024
        %3090 = vst [vmem:[%s3083 + $0x18] sm:$0xf] %v3025
        %3091 = vst [vmem:[%s3083 + $0x1c] sm:$0xf] %v3026
        %3092 = vst [vmem:[%s3083 + $0x20] sm:$0xf] %v3027
        %3093 = vst [vmem:[%s3083 + $0x24] sm:$0xf] %v3028
        %3094 = vst [vmem:[%s3083 + $0x28] sm:$0xf] %v3029
        %3095 = vst [vmem:[%s3083 + $0x2c] sm:$0xf] %v3030
        %3096 = vst [vmem:[%s3083 + $0x30] sm:$0xf] %v3031
        %3097 = vst [vmem:[%s3083 + $0x34] sm:$0xf] %v3032
        %3098 = vst [vmem:[%s3083 + $0x38] sm:$0xf] %v3033
        %3099 = vst [vmem:[%s3083 + $0x3c] sm:$0xf] %v3034
        %3100 = vst [vmem:[%s3083 + $0x40] sm:$0xf] %v3035
        %3101 = vst [vmem:[%s3083 + $0x44] sm:$0xf] %v3036
        %3102 = vst [vmem:[%s3083 + $0x48] sm:$0xf] %v3037
        %3103 = vst [vmem:[%s3083 + $0x4c] sm:$0xf] %v3038
        %3104 = vst [vmem:[%s3083 + $0x50] sm:$0xf] %v3039
        %3105 = vst [vmem:[%s3083 + $0x54] sm:$0xf] %v3040
        %3106 = vst [vmem:[%s3083 + $0x58] sm:$0xf] %v3041
        %3107 = vst [vmem:[%s3083 + $0x5c] sm:$0xf] %v3042
        %3108 = vst [vmem:[%s3083 + $0x60] sm:$0xf] %v3043
        %3109 = vst [vmem:[%s3083 + $0x64] sm:$0xf] %v3044
        %3110 = vst [vmem:[%s3083 + $0x68] sm:$0xf] %v3045
        %3111 = vst [vmem:[%s3083 + $0x6c] sm:$0xf] %v3046
        %3112 = vst [vmem:[%s3083 + $0x70] sm:$0xf] %v3047
        %3113 = vst [vmem:[%s3083 + $0x74] sm:$0xf] %v3048
        %3114 = vst [vmem:[%s3083 + $0x78] sm:$0xf] %v3049
        %3115 = vst [vmem:[%s3083 + $0x7c] sm:$0xf] %v3050
        %v3132 = vunpack.c.l.b16 %v2301
        %v3133 = vunpack.c.h.b16 %v2301
        %v3134 = vunpack.c.l.b16 %v2307
        %v3135 = vunpack.c.h.b16 %v2307
        %v3136 = vunpack.c.l.b16 %v2313
        %v3137 = vunpack.c.h.b16 %v2313
        %v3138 = vunpack.c.l.b16 %v2319
        %v3139 = vunpack.c.h.b16 %v2319
        %v3140 = vunpack.c.l.b16 %v2325
        %v3141 = vunpack.c.h.b16 %v2325
        %v3142 = vunpack.c.l.b16 %v2331
        %v3143 = vunpack.c.h.b16 %v2331
        %v3144 = vunpack.c.l.b16 %v2337
        %v3145 = vunpack.c.h.b16 %v2337
        %v3146 = vunpack.c.l.b16 %v2343
        %v3147 = vunpack.c.h.b16 %v2343
        %v3148 = vunpack.c.l.b16 %v2349
        %v3149 = vunpack.c.h.b16 %v2349
        %v3150 = vunpack.c.l.b16 %v2355
        %v3151 = vunpack.c.h.b16 %v2355
        %v3152 = vunpack.c.l.b16 %v2361
        %v3153 = vunpack.c.h.b16 %v2361
        %v3154 = vunpack.c.l.b16 %v2367
        %v3155 = vunpack.c.h.b16 %v2367
        %v3156 = vunpack.c.l.b16 %v2373
        %v3157 = vunpack.c.h.b16 %v2373
        %v3158 = vunpack.c.l.b16 %v2379
        %v3159 = vunpack.c.h.b16 %v2379
        %v3160 = vunpack.c.l.b16 %v2385
        %v3161 = vunpack.c.h.b16 %v2385
        %v3162 = vunpack.c.l.b16 %v2391
        %v3163 = vunpack.c.h.b16 %v2391
        %v3164 = vpack.c.b16 %v3132, %v3132
        %v3165 = vpack.c.b16 %v3133, %v3133
        %v3166 = vpack.c.b16 %v3134, %v3134
        %v3167 = vpack.c.b16 %v3135, %v3135
        %v3168 = vpack.c.b16 %v3136, %v3136
        %v3169 = vpack.c.b16 %v3137, %v3137
        %v3170 = vpack.c.b16 %v3138, %v3138
        %v3171 = vpack.c.b16 %v3139, %v3139
        %v3172 = vpack.c.b16 %v3140, %v3140
        %v3173 = vpack.c.b16 %v3141, %v3141
        %v3174 = vpack.c.b16 %v3142, %v3142
        %v3175 = vpack.c.b16 %v3143, %v3143
        %v3176 = vpack.c.b16 %v3144, %v3144
        %v3177 = vpack.c.b16 %v3145, %v3145
        %v3178 = vpack.c.b16 %v3146, %v3146
        %v3179 = vpack.c.b16 %v3147, %v3147
        %v3180 = vpack.c.b16 %v3148, %v3148
        %v3181 = vpack.c.b16 %v3149, %v3149
        %v3182 = vpack.c.b16 %v3150, %v3150
        %v3183 = vpack.c.b16 %v3151, %v3151
        %v3184 = vpack.c.b16 %v3152, %v3152
        %v3185 = vpack.c.b16 %v3153, %v3153
        %v3186 = vpack.c.b16 %v3154, %v3154
        %v3187 = vpack.c.b16 %v3155, %v3155
        %v3188 = vpack.c.b16 %v3156, %v3156
        %v3189 = vpack.c.b16 %v3157, %v3157
        %v3190 = vpack.c.b16 %v3158, %v3158
        %v3191 = vpack.c.b16 %v3159, %v3159
        %v3192 = vpack.c.b16 %v3160, %v3160
        %v3193 = vpack.c.b16 %v3161, %v3161
        %v3194 = vpack.c.b16 %v3162, %v3162
        %v3195 = vpack.c.b16 %v3163, %v3163
        %s3228 = scalar_lea.vmem %s313, 640 [#allocation11]
        %3229 = vst [vmem:[%s3228] sm:$0xf] %v3164
        %3230 = vst [vmem:[%s3228 + $0x4] sm:$0xf] %v3165
        %3231 = vst [vmem:[%s3228 + $0x8] sm:$0xf] %v3166
        %3232 = vst [vmem:[%s3228 + $0xc] sm:$0xf] %v3167
        %3233 = vst [vmem:[%s3228 + $0x10] sm:$0xf] %v3168
        %3234 = vst [vmem:[%s3228 + $0x14] sm:$0xf] %v3169
        %3235 = vst [vmem:[%s3228 + $0x18] sm:$0xf] %v3170
        %3236 = vst [vmem:[%s3228 + $0x1c] sm:$0xf] %v3171
        %3237 = vst [vmem:[%s3228 + $0x20] sm:$0xf] %v3172
        %3238 = vst [vmem:[%s3228 + $0x24] sm:$0xf] %v3173
        %3239 = vst [vmem:[%s3228 + $0x28] sm:$0xf] %v3174
        %3240 = vst [vmem:[%s3228 + $0x2c] sm:$0xf] %v3175
        %3241 = vst [vmem:[%s3228 + $0x30] sm:$0xf] %v3176
        %3242 = vst [vmem:[%s3228 + $0x34] sm:$0xf] %v3177
        %3243 = vst [vmem:[%s3228 + $0x38] sm:$0xf] %v3178
        %3244 = vst [vmem:[%s3228 + $0x3c] sm:$0xf] %v3179
        %3245 = vst [vmem:[%s3228 + $0x40] sm:$0xf] %v3180
        %3246 = vst [vmem:[%s3228 + $0x44] sm:$0xf] %v3181
        %3247 = vst [vmem:[%s3228 + $0x48] sm:$0xf] %v3182
        %3248 = vst [vmem:[%s3228 + $0x4c] sm:$0xf] %v3183
        %3249 = vst [vmem:[%s3228 + $0x50] sm:$0xf] %v3184
        %3250 = vst [vmem:[%s3228 + $0x54] sm:$0xf] %v3185
        %3251 = vst [vmem:[%s3228 + $0x58] sm:$0xf] %v3186
        %3252 = vst [vmem:[%s3228 + $0x5c] sm:$0xf] %v3187
        %3253 = vst [vmem:[%s3228 + $0x60] sm:$0xf] %v3188
        %3254 = vst [vmem:[%s3228 + $0x64] sm:$0xf] %v3189
        %3255 = vst [vmem:[%s3228 + $0x68] sm:$0xf] %v3190
        %3256 = vst [vmem:[%s3228 + $0x6c] sm:$0xf] %v3191
        %3257 = vst [vmem:[%s3228 + $0x70] sm:$0xf] %v3192
        %3258 = vst [vmem:[%s3228 + $0x74] sm:$0xf] %v3193
        %3259 = vst [vmem:[%s3228 + $0x78] sm:$0xf] %v3194
        %3260 = vst [vmem:[%s3228 + $0x7c] sm:$0xf] %v3195
        %s3261 = sand.u32 %s158, 1
        %s3262 = scalar_lea.sflag [#allocation4], %s3261
        %s3263 = sand.u32 %s158, 1
        %s3264 = smul.addr %s3263, 768
        %s3265 = scalar_lea.vmem [#allocation11], %s3264
        // Predicated region
        $region61: #{tpu_custom_call.1} parent=39 // pred_check
          %p3266 = pneg %p168
        $region62: #{tpu_custom_call.1} parent=39 // pred_check_branch
          %3268 = sbr.rel (%p3266) target = $region64
        $region63: #{tpu_custom_call.1} parent=39 // pred_region
          %s3269 = smul.u32 32, %s29
          %s3271 = ssub.s32 12288, 12288
          %3272 = vsyncadd %s3262, %s3271
          %s3273 = smul.addr %s28, 192
          %s3274 = sadd.s32 %s3269, %s3273
          %s3275 = smul.addr %s3274, 64
          %s3276 = scalar_lea.hbm %s5, %s3275
          %s3277 = sshll.u32 %s3265, 4
          %s3278 = int_to_ptr.vmem [resolvable:$true] %s3277
          %3283 = dma.vmem_to_hbm [thread:$0]  %s3278, 12288, %s3276, %s3262, 64, 64, 4
        $region64: #{tpu_custom_call.1} parent=39 // pred_fallthru
          _
      $region40: #{tpu_custom_call.1} parent=5 // pred_fallthru
        _
      %p3284 = scmp.le.s32.totalorder 2, %s19
      // Predicated region
      $region65: #{tpu_custom_call.1} parent=5 // pred_check
        %p3285 = pneg %p3284
      $region66: #{tpu_custom_call.1} parent=5 // pred_check_branch
        %3287 = sbr.rel (%p3285) target = $region68
      $region67: #{tpu_custom_call.1} parent=5 // pred_region
        %s3288 = ssub.s32 %s19, 2
        // Predicated region
        $region69: #{tpu_custom_call.1} parent=67 // pred_check
          %p3289 = pneg %p174
        $region70: #{tpu_custom_call.1} parent=67 // pred_check_branch
          %3291 = sbr.rel (%p3289) target = $region72
        $region71: #{tpu_custom_call.1} parent=67 // pred_region
          %s3292 = sand.u32 %s159, 1
          %s3293 = scalar_lea.sflag [#allocation4], %s3292
          %s3294 = sand.u32 %s159, 1
          %s3295 = smul.addr %s3294, 768
          %s3296 = scalar_lea.vmem [#allocation11], %s3295
          %3297 = dma.done %s3293, 12288
        $region72: #{tpu_custom_call.1} parent=67 // pred_fallthru
          _
      $region68: #{tpu_custom_call.1} parent=5 // pred_fallthru
        _
    $region6: #{tpu_custom_call.1} parent=1 // loop_footer
      %s23 = sadd.s32 1, %s19
    $region7: #{tpu_custom_call.1} parent=1 // loop_footer_branch
      %18 = sbr.rel target = $region3
    $region8: #{tpu_custom_call.1} parent=1 // loop_exit
      _
    %3298 = vsyncpa [#allocation3], 1
    %s3299 = scalar_lea.sflag [#allocation3], 1
    %3300 = vsyncpa %s3299, 1
    %3301 = vsyncpa [#allocation6], 1
    %3302 = vsyncpa [#allocation9], 1
    %3303 = vsyncpa [#allocation4], 1
    %s3304 = scalar_lea.sflag [#allocation4], 1
    %3305 = vsyncpa %s3304, 1

</llo_original>
